<compile_context>
chip_gen: v7x
topology: tpu7x:2x2x1
jax: 0.10.0
libtpu: 0.0.40
codegen_flags: <defaults>
</compile_context>

<pallas_src>
import functools

import jax
import jax.numpy as jnp
import numpy as np
from jax.experimental import pallas as pl
from jax.experimental.pallas import tpu as pltpu


def _upsample2x_kernel(x_ref, o_ref, *, w: int, k: int):
    # x_ref: (TB, HT, K*W)    folded input rows
    # o_ref: (TB, HT, K*4W)   folded output rows (pure reshape of NCHW output)
    x = x_ref[...]
    xw = jnp.repeat(x, 2, axis=-1)                       # (TB, HT, 2*K*W) column doubling
    for j in range(k):                                   # static, K is small
        seg = xw[:, :, j * 2 * w:(j + 1) * 2 * w]        # doubled input row, segment j
        # Row doubling: store the doubled segment twice, side by side
        # (no concat temporary -> store path carries only useful traffic).
        o_ref[:, :, j * 4 * w:j * 4 * w + 2 * w] = seg
        o_ref[:, :, j * 4 * w + 2 * w:(j + 1) * 4 * w] = seg


def _round_up(v: int, m: int) -> int:
    return (v + m - 1) // m * m


def _round_down(v: int, m: int) -> int:
    return max(m, v // m * m)


def _device_budgets():
    """Returns (num_tensorcores, per-block VMEM working-set budget, vmem_limit_bytes)."""
    kind = ""
    try:
        kind = (jax.devices()[0].device_kind or "").lower()
    except Exception:
        pass
    if "v7" in kind:
        # 64 MiB physical VMEM per TC, 2 TensorCores per chip.
        return 2, 20 << 20, 48 << 20
    if "v6" in kind or "v5" in kind:
        # 128 MiB physical VMEM, single TensorCore.
        return 1, 48 << 20, 96 << 20
    # Unknown generation: conservative defaults that fit everywhere.
    return 1, 14 << 20, 32 << 20


def _pick_fold(h: int, w: int) -> int:
    """Smallest divisor K of H with K*4W >= 128 lanes (K = H if none)."""
    if 4 * w >= 128:
        return 1
    for k in range(1, h + 1):
        if h % k == 0 and k * 4 * w >= 128:
            return k
    return h


@jax.jit
def upsample_nearest_2x(x: jnp.ndarray) -> jnp.ndarray:
    """Nearest-neighbor 2x spatial upsampling of an NCHW tensor via Pallas."""
    N, C, H, W = x.shape
    B = N * C
    itemsize = jnp.dtype(x.dtype).itemsize
    sub = {4: 8, 2: 16, 1: 32}.get(itemsize, 8)          # dtype-correct sublane tile

    num_tc, vmem_budget, vmem_limit = _device_budgets()

    k = _pick_fold(H, W)
    hf = H // k                                          # folded-H extent
    wi, wo = k * W, k * 4 * W                            # folded lane widths (in / out)
    xb = x.reshape(B, hf, wi)                            # pure reshape (row-major)

    # --- block sizing against the VMEM budget (double buffers + temporaries) ---
    def block_bytes(tb, ht):
        in_b = tb * _round_up(ht, sub) * _round_up(wi, 128) * itemsize
        out_b = tb * _round_up(ht, sub) * _round_up(wo, 128) * itemsize
        # 2x for the double-buffered in/out pipeline streams, plus the loaded x
        # and the column-doubled xw temporaries inside the kernel body.
        return 2 * (in_b + out_b) + in_b + out_b // 2

    ht = hf
    if block_bytes(1, hf) > vmem_budget and hf > sub:
        # A single plane does not fit: tile the folded-H axis (multiple of the
        # sublane tile keeps the block layout legal).
        ht = min(hf, _round_down(hf * vmem_budget // block_bytes(1, hf), sub))

    tb = max(1, min(B, vmem_budget // max(1, block_bytes(1, ht)), 1024))
    if num_tc > 1 and B > 1:
        # >=2 grid steps per TensorCore so each core's pipeline has DMA to hide.
        tb = min(tb, max(1, pl.cdiv(B, 2 * num_tc)))

    grid = (pl.cdiv(B, tb), pl.cdiv(hf, ht))

    out = pl.pallas_call(
        functools.partial(_upsample2x_kernel, w=W, k=k),
        out_shape=jax.ShapeDtypeStruct((B, hf, wo), x.dtype),
        grid=grid,
        in_specs=[pl.BlockSpec((tb, ht, wi), lambda i, j: (i, j, 0))],
        # NOTE: if a v7x profile shows exposed output writeback, sweep
        # pipeline_mode=pl.Buffered(3) here (costs one extra out block of VMEM).
        out_specs=pl.BlockSpec((tb, ht, wo), lambda i, j: (i, j, 0)),
        compiler_params=pltpu.CompilerParams(
            dimension_semantics=("parallel", "parallel"),
            vmem_limit_bytes=vmem_limit,
        ),
        cost_estimate=pl.CostEstimate(
            flops=0,
            transcendentals=0,
            bytes_accessed=5 * B * H * W * itemsize,     # 1x read + 4x write
        ),
    )(xb)

    # (B, H/K, K*4W) and (N, C, 2H, 2W) share identical flat memory order.
    return out.reshape(N, C, 2 * H, 2 * W)


if __name__ == "__main__":
    key = jax.random.PRNGKey(0)
    N, C, H, W = 2, 4, 16, 16
    x = jax.random.normal(key, (N, C, H, W), dtype=jnp.float32)

    y = upsample_nearest_2x(x)
    y = jax.block_until_ready(y)

    # Reference: nearest 2x upsampling == repeat each pixel along H and W.
    y_ref = jnp.repeat(jnp.repeat(x, 2, axis=2), 2, axis=3)
    assert y.shape == (N, C, 2 * H, 2 * W)
    np.testing.assert_allclose(np.asarray(y), np.asarray(y_ref), rtol=0, atol=0)

    print("KERNEL_OK")
</pallas_src>

<mosaic_0001>
module attributes {stable_mosaic.version = 11 : i64} {
  func.func @_upsample2x_kernel(%arg0: i32, %arg1: i32, %arg2: memref<8x8x32xf32, #tpu.memory_space<vmem>>, %arg3: memref<8x8x128xf32, #tpu.memory_space<vmem>>) attributes {dimension_semantics = [#tpu.dimension_semantics<parallel>, #tpu.dimension_semantics<parallel>], iteration_bounds = array<i64: 1, 1>, scalar_prefetch = 0 : i64, scratch_operands = 0 : i64, tpu.core_type = #tpu.core_type<tc>, window_params = [{transform_indices = @transform_0, window_bounds = array<i64: 8, 8, 32>}, {transform_indices = @transform_1, window_bounds = array<i64: 8, 8, 128>}]} {
    %c0 = arith.constant 0 : index
    %c0_0 = arith.constant 0 : index
    %c0_1 = arith.constant 0 : index
    %0 = vector.load %arg2[%c0, %c0_0, %c0_1] : memref<8x8x32xf32, #tpu.memory_space<vmem>>, vector<8x8x32xf32>
    %1 = vector.shape_cast %0 : vector<8x8x32xf32> to vector<8x8x32x1xf32>
    %2 = vector.broadcast %1 : vector<8x8x32x1xf32> to vector<8x8x32x2xf32>
    %3 = vector.shape_cast %2 : vector<8x8x32x2xf32> to vector<8x8x64xf32>
    %4 = vector.extract_strided_slice %3 {offsets = [0, 0, 0], sizes = [8, 8, 32], strides = [1, 1, 1]} : vector<8x8x64xf32> to vector<8x8x32xf32>
    %c0_2 = arith.constant 0 : index
    %c0_3 = arith.constant 0 : index
    %c0_4 = arith.constant 0 : index
    %5 = vector.load %arg3[%c0_2, %c0_3, %c0_4] : memref<8x8x128xf32, #tpu.memory_space<vmem>>, vector<8x8x32xf32>
    tpu.vector_store %arg3[%c0_2, %c0_3, %c0_4], %4 {strides = array<i32>} : memref<8x8x128xf32, #tpu.memory_space<vmem>>, vector<8x8x32xf32>,
    %c0_5 = arith.constant 0 : index
    %c0_6 = arith.constant 0 : index
    %c32 = arith.constant 32 : index
    %6 = vector.load %arg3[%c0_5, %c0_6, %c32] : memref<8x8x128xf32, #tpu.memory_space<vmem>>, vector<8x8x32xf32>
    tpu.vector_store %arg3[%c0_5, %c0_6, %c32], %4 {strides = array<i32>} : memref<8x8x128xf32, #tpu.memory_space<vmem>>, vector<8x8x32xf32>,
    %7 = vector.extract_strided_slice %3 {offsets = [0, 0, 32], sizes = [8, 8, 32], strides = [1, 1, 1]} : vector<8x8x64xf32> to vector<8x8x32xf32>
    %c0_7 = arith.constant 0 : index
    %c0_8 = arith.constant 0 : index
    %c64 = arith.constant 64 : index
    %8 = vector.load %arg3[%c0_7, %c0_8, %c64] : memref<8x8x128xf32, #tpu.memory_space<vmem>>, vector<8x8x32xf32>
    tpu.vector_store %arg3[%c0_7, %c0_8, %c64], %7 {strides = array<i32>} : memref<8x8x128xf32, #tpu.memory_space<vmem>>, vector<8x8x32xf32>,
    %c0_9 = arith.constant 0 : index
    %c0_10 = arith.constant 0 : index
    %c96 = arith.constant 96 : index
    %9 = vector.load %arg3[%c0_9, %c0_10, %c96] : memref<8x8x128xf32, #tpu.memory_space<vmem>>, vector<8x8x32xf32>
    tpu.vector_store %arg3[%c0_9, %c0_10, %c96], %7 {strides = array<i32>} : memref<8x8x128xf32, #tpu.memory_space<vmem>>, vector<8x8x32xf32>,
    return
  }
  func.func @transform_0(%arg0: i32, %arg1: i32) -> (i32, i32, i32) {
    %c0_i32 = arith.constant 0 : i32
    %c0_i32_0 = arith.constant 0 : i32
    return %arg0, %arg1, %c0_i32 : i32, i32, i32
  }
  func.func @transform_1(%arg0: i32, %arg1: i32) -> (i32, i32, i32) {
    %c0_i32 = arith.constant 0 : i32
    %c0_i32_0 = arith.constant 0 : i32
    return %arg0, %arg1, %c0_i32 : i32, i32, i32
  }
}

</mosaic_0001>

<llo_original>
// kernel: upsample_nearest_2x.1
$region0: #{upsample_nearest_2x.1}
  #allocation0 [shape = 'u32[]', space=smem, size = 0x4, offset = 0x4, fixed_abs, tag = 'smem constant byte address 0x4 - core index']
  #allocation1 [shape = 'u32[144,128]{1,0:T(1,128)}', space=vmem, size = 0x12000, scoped, tag = 'internal scratch']
  %s0 = inlined_call_operand.vmem [shape: f32[8,8,32], index: 0, kind: input, shape index: {}]
  %s1 = inlined_call_operand.vmem [shape: f32[8,8,128], index: 1, kind: output, shape index: {}]
  %s2 = sld [smem:[#allocation0]]
  $region14: #{upsample_nearest_2x.1} parent=0
    _
  %s4 = ssub.s32 1, %s2
  %s5 = scalar_select 0, %s4, %s2
  // Predicated region
  $region2: #{upsample_nearest_2x.1} parent=0 // pred_check
    _
  $region3: #{upsample_nearest_2x.1} parent=0 // pred_check_branch
    %7 = sbr.rel (0) target = $region5
  $region4: #{upsample_nearest_2x.1} parent=0 // pred_region
    _
  $region5: #{upsample_nearest_2x.1} parent=0 // pred_fallthru
    _
  %v8 = vld [vmem:[%s0] sm:$0xff]
  %v9 = vld [vmem:[%s0 + $0x8] sm:$0xff]
  %v10 = vld [vmem:[%s0 + $0x10] sm:$0xff]
  %v11 = vld [vmem:[%s0 + $0x18] sm:$0xff]
  %v12 = vld [vmem:[%s0 + $0x20] sm:$0xff]
  %v13 = vld [vmem:[%s0 + $0x28] sm:$0xff]
  %v14 = vld [vmem:[%s0 + $0x30] sm:$0xff]
  %v15 = vld [vmem:[%s0 + $0x38] sm:$0xff]
  %v16 = vlaneseq
  %v17 = vshrl.u32 %v16, 7
  %v18 = vsub.s32 0, %v17
  %v19 = vrot.slane %v8, %v18
  %21 = vbcast.lane.b32.xlu0 %v19, 256
  %v22 = vpop.permute.xlu0 %21
  %s24 = sor.u32 256, 8
  %25 = vbcast.lane.b32.xlu0 %v19, %s24
  %v26 = vpop.permute.xlu0 %25
  %s28 = sor.u32 256, 16
  %29 = vbcast.lane.b32.xlu0 %v19, %s28
  %v30 = vpop.permute.xlu0 %29
  %s32 = sor.u32 256, 24
  %33 = vbcast.lane.b32.xlu0 %v19, %s32
  %v34 = vpop.permute.xlu0 %33
  %v35 = vlaneseq
  %v36 = vshrl.u32 %v35, 7
  %v37 = vsub.s32 1, %v36
  %v38 = vrot.slane %v8, %v37
  %40 = vbcast.lane.b32.xlu0 %v38, 256
  %v41 = vpop.permute.xlu0 %40
  %s43 = sor.u32 256, 8
  %44 = vbcast.lane.b32.xlu0 %v38, %s43
  %v45 = vpop.permute.xlu0 %44
  %s47 = sor.u32 256, 16
  %48 = vbcast.lane.b32.xlu0 %v38, %s47
  %v49 = vpop.permute.xlu0 %48
  %s51 = sor.u32 256, 24
  %52 = vbcast.lane.b32.xlu0 %v38, %s51
  %v53 = vpop.permute.xlu0 %52
  %v54 = vlaneseq
  %v55 = vshrl.u32 %v54, 7
  %v56 = vsub.s32 2, %v55
  %v57 = vrot.slane %v8, %v56
  %59 = vbcast.lane.b32.xlu0 %v57, 256
  %v60 = vpop.permute.xlu0 %59
  %s62 = sor.u32 256, 8
  %63 = vbcast.lane.b32.xlu0 %v57, %s62
  %v64 = vpop.permute.xlu0 %63
  %s66 = sor.u32 256, 16
  %67 = vbcast.lane.b32.xlu0 %v57, %s66
  %v68 = vpop.permute.xlu0 %67
  %s70 = sor.u32 256, 24
  %71 = vbcast.lane.b32.xlu0 %v57, %s70
  %v72 = vpop.permute.xlu0 %71
  %v73 = vlaneseq
  %v74 = vshrl.u32 %v73, 7
  %v75 = vsub.s32 3, %v74
  %v76 = vrot.slane %v8, %v75
  %78 = vbcast.lane.b32.xlu0 %v76, 256
  %v79 = vpop.permute.xlu0 %78
  %s81 = sor.u32 256, 8
  %82 = vbcast.lane.b32.xlu0 %v76, %s81
  %v83 = vpop.permute.xlu0 %82
  %s85 = sor.u32 256, 16
  %86 = vbcast.lane.b32.xlu0 %v76, %s85
  %v87 = vpop.permute.xlu0 %86
  %s89 = sor.u32 256, 24
  %90 = vbcast.lane.b32.xlu0 %v76, %s89
  %v91 = vpop.permute.xlu0 %90
  %v92 = vlaneseq
  %v93 = vshrl.u32 %v92, 7
  %v94 = vsub.s32 4, %v93
  %v95 = vrot.slane %v8, %v94
  %97 = vbcast.lane.b32.xlu0 %v95, 256
  %v98 = vpop.permute.xlu0 %97
  %s100 = sor.u32 256, 8
  %101 = vbcast.lane.b32.xlu0 %v95, %s100
  %v102 = vpop.permute.xlu0 %101
  %s104 = sor.u32 256, 16
  %105 = vbcast.lane.b32.xlu0 %v95, %s104
  %v106 = vpop.permute.xlu0 %105
  %s108 = sor.u32 256, 24
  %109 = vbcast.lane.b32.xlu0 %v95, %s108
  %v110 = vpop.permute.xlu0 %109
  %v111 = vlaneseq
  %v112 = vshrl.u32 %v111, 7
  %v113 = vsub.s32 5, %v112
  %v114 = vrot.slane %v8, %v113
  %116 = vbcast.lane.b32.xlu0 %v114, 256
  %v117 = vpop.permute.xlu0 %116
  %s119 = sor.u32 256, 8
  %120 = vbcast.lane.b32.xlu0 %v114, %s119
  %v121 = vpop.permute.xlu0 %120
  %s123 = sor.u32 256, 16
  %124 = vbcast.lane.b32.xlu0 %v114, %s123
  %v125 = vpop.permute.xlu0 %124
  %s127 = sor.u32 256, 24
  %128 = vbcast.lane.b32.xlu0 %v114, %s127
  %v129 = vpop.permute.xlu0 %128
  %v130 = vlaneseq
  %v131 = vshrl.u32 %v130, 7
  %v132 = vsub.s32 6, %v131
  %v133 = vrot.slane %v8, %v132
  %135 = vbcast.lane.b32.xlu0 %v133, 256
  %v136 = vpop.permute.xlu0 %135
  %s138 = sor.u32 256, 8
  %139 = vbcast.lane.b32.xlu0 %v133, %s138
  %v140 = vpop.permute.xlu0 %139
  %s142 = sor.u32 256, 16
  %143 = vbcast.lane.b32.xlu0 %v133, %s142
  %v144 = vpop.permute.xlu0 %143
  %s146 = sor.u32 256, 24
  %147 = vbcast.lane.b32.xlu0 %v133, %s146
  %v148 = vpop.permute.xlu0 %147
  %v149 = vlaneseq
  %v150 = vshrl.u32 %v149, 7
  %v151 = vsub.s32 7, %v150
  %v152 = vrot.slane %v8, %v151
  %154 = vbcast.lane.b32.xlu0 %v152, 256
  %v155 = vpop.permute.xlu0 %154
  %s157 = sor.u32 256, 8
  %158 = vbcast.lane.b32.xlu0 %v152, %s157
  %v159 = vpop.permute.xlu0 %158
  %s161 = sor.u32 256, 16
  %162 = vbcast.lane.b32.xlu0 %v152, %s161
  %v163 = vpop.permute.xlu0 %162
  %s165 = sor.u32 256, 24
  %166 = vbcast.lane.b32.xlu0 %v152, %s165
  %v167 = vpop.permute.xlu0 %166
  %v168 = vlaneseq
  %v169 = vshrl.u32 %v168, 7
  %v170 = vsub.s32 0, %v169
  %v171 = vrot.slane %v9, %v170
  %173 = vbcast.lane.b32.xlu0 %v171, 256
  %v174 = vpop.permute.xlu0 %173
  %s176 = sor.u32 256, 8
  %177 = vbcast.lane.b32.xlu0 %v171, %s176
  %v178 = vpop.permute.xlu0 %177
  %s180 = sor.u32 256, 16
  %181 = vbcast.lane.b32.xlu0 %v171, %s180
  %v182 = vpop.permute.xlu0 %181
  %s184 = sor.u32 256, 24
  %185 = vbcast.lane.b32.xlu0 %v171, %s184
  %v186 = vpop.permute.xlu0 %185
  %v187 = vlaneseq
  %v188 = vshrl.u32 %v187, 7
  %v189 = vsub.s32 1, %v188
  %v190 = vrot.slane %v9, %v189
  %192 = vbcast.lane.b32.xlu0 %v190, 256
  %v193 = vpop.permute.xlu0 %192
  %s195 = sor.u32 256, 8
  %196 = vbcast.lane.b32.xlu0 %v190, %s195
  %v197 = vpop.permute.xlu0 %196
  %s199 = sor.u32 256, 16
  %200 = vbcast.lane.b32.xlu0 %v190, %s199
  %v201 = vpop.permute.xlu0 %200
  %s203 = sor.u32 256, 24
  %204 = vbcast.lane.b32.xlu0 %v190, %s203
  %v205 = vpop.permute.xlu0 %204
  %v206 = vlaneseq
  %v207 = vshrl.u32 %v206, 7
  %v208 = vsub.s32 2, %v207
  %v209 = vrot.slane %v9, %v208
  %211 = vbcast.lane.b32.xlu0 %v209, 256
  %v212 = vpop.permute.xlu0 %211
  %s214 = sor.u32 256, 8
  %215 = vbcast.lane.b32.xlu0 %v209, %s214
  %v216 = vpop.permute.xlu0 %215
  %s218 = sor.u32 256, 16
  %219 = vbcast.lane.b32.xlu0 %v209, %s218
  %v220 = vpop.permute.xlu0 %219
  %s222 = sor.u32 256, 24
  %223 = vbcast.lane.b32.xlu0 %v209, %s222
  %v224 = vpop.permute.xlu0 %223
  %v225 = vlaneseq
  %v226 = vshrl.u32 %v225, 7
  %v227 = vsub.s32 3, %v226
  %v228 = vrot.slane %v9, %v227
  %230 = vbcast.lane.b32.xlu0 %v228, 256
  %v231 = vpop.permute.xlu0 %230
  %s233 = sor.u32 256, 8
  %234 = vbcast.lane.b32.xlu0 %v228, %s233
  %v235 = vpop.permute.xlu0 %234
  %s237 = sor.u32 256, 16
  %238 = vbcast.lane.b32.xlu0 %v228, %s237
  %v239 = vpop.permute.xlu0 %238
  %s241 = sor.u32 256, 24
  %242 = vbcast.lane.b32.xlu0 %v228, %s241
  %v243 = vpop.permute.xlu0 %242
  %v244 = vlaneseq
  %v245 = vshrl.u32 %v244, 7
  %v246 = vsub.s32 4, %v245
  %v247 = vrot.slane %v9, %v246
  %249 = vbcast.lane.b32.xlu0 %v247, 256
  %v250 = vpop.permute.xlu0 %249
  %s252 = sor.u32 256, 8
  %253 = vbcast.lane.b32.xlu0 %v247, %s252
  %v254 = vpop.permute.xlu0 %253
  %s256 = sor.u32 256, 16
  %257 = vbcast.lane.b32.xlu0 %v247, %s256
  %v258 = vpop.permute.xlu0 %257
  %s260 = sor.u32 256, 24
  %261 = vbcast.lane.b32.xlu0 %v247, %s260
  %v262 = vpop.permute.xlu0 %261
  %v263 = vlaneseq
  %v264 = vshrl.u32 %v263, 7
  %v265 = vsub.s32 5, %v264
  %v266 = vrot.slane %v9, %v265
  %268 = vbcast.lane.b32.xlu0 %v266, 256
  %v269 = vpop.permute.xlu0 %268
  %s271 = sor.u32 256, 8
  %272 = vbcast.lane.b32.xlu0 %v266, %s271
  %v273 = vpop.permute.xlu0 %272
  %s275 = sor.u32 256, 16
  %276 = vbcast.lane.b32.xlu0 %v266, %s275
  %v277 = vpop.permute.xlu0 %276
  %s279 = sor.u32 256, 24
  %280 = vbcast.lane.b32.xlu0 %v266, %s279
  %v281 = vpop.permute.xlu0 %280
  %v282 = vlaneseq
  %v283 = vshrl.u32 %v282, 7
  %v284 = vsub.s32 6, %v283
  %v285 = vrot.slane %v9, %v284
  %287 = vbcast.lane.b32.xlu0 %v285, 256
  %v288 = vpop.permute.xlu0 %287
  %s290 = sor.u32 256, 8
  %291 = vbcast.lane.b32.xlu0 %v285, %s290
  %v292 = vpop.permute.xlu0 %291
  %s294 = sor.u32 256, 16
  %295 = vbcast.lane.b32.xlu0 %v285, %s294
  %v296 = vpop.permute.xlu0 %295
  %s298 = sor.u32 256, 24
  %299 = vbcast.lane.b32.xlu0 %v285, %s298
  %v300 = vpop.permute.xlu0 %299
  %v301 = vlaneseq
  %v302 = vshrl.u32 %v301, 7
  %v303 = vsub.s32 7, %v302
  %v304 = vrot.slane %v9, %v303
  %306 = vbcast.lane.b32.xlu0 %v304, 256
  %v307 = vpop.permute.xlu0 %306
  %s309 = sor.u32 256, 8
  %310 = vbcast.lane.b32.xlu0 %v304, %s309
  %v311 = vpop.permute.xlu0 %310
  %s313 = sor.u32 256, 16
  %314 = vbcast.lane.b32.xlu0 %v304, %s313
  %v315 = vpop.permute.xlu0 %314
  %s317 = sor.u32 256, 24
  %318 = vbcast.lane.b32.xlu0 %v304, %s317
  %v319 = vpop.permute.xlu0 %318
  %v320 = vlaneseq
  %v321 = vshrl.u32 %v320, 7
  %v322 = vsub.s32 0, %v321
  %v323 = vrot.slane %v10, %v322
  %325 = vbcast.lane.b32.xlu0 %v323, 256
  %v326 = vpop.permute.xlu0 %325
  %s328 = sor.u32 256, 8
  %329 = vbcast.lane.b32.xlu0 %v323, %s328
  %v330 = vpop.permute.xlu0 %329
  %s332 = sor.u32 256, 16
  %333 = vbcast.lane.b32.xlu0 %v323, %s332
  %v334 = vpop.permute.xlu0 %333
  %s336 = sor.u32 256, 24
  %337 = vbcast.lane.b32.xlu0 %v323, %s336
  %v338 = vpop.permute.xlu0 %337
  %v339 = vlaneseq
  %v340 = vshrl.u32 %v339, 7
  %v341 = vsub.s32 1, %v340
  %v342 = vrot.slane %v10, %v341
  %344 = vbcast.lane.b32.xlu0 %v342, 256
  %v345 = vpop.permute.xlu0 %344
  %s347 = sor.u32 256, 8
  %348 = vbcast.lane.b32.xlu0 %v342, %s347
  %v349 = vpop.permute.xlu0 %348
  %s351 = sor.u32 256, 16
  %352 = vbcast.lane.b32.xlu0 %v342, %s351
  %v353 = vpop.permute.xlu0 %352
  %s355 = sor.u32 256, 24
  %356 = vbcast.lane.b32.xlu0 %v342, %s355
  %v357 = vpop.permute.xlu0 %356
  %v358 = vlaneseq
  %v359 = vshrl.u32 %v358, 7
  %v360 = vsub.s32 2, %v359
  %v361 = vrot.slane %v10, %v360
  %363 = vbcast.lane.b32.xlu0 %v361, 256
  %v364 = vpop.permute.xlu0 %363
  %s366 = sor.u32 256, 8
  %367 = vbcast.lane.b32.xlu0 %v361, %s366
  %v368 = vpop.permute.xlu0 %367
  %s370 = sor.u32 256, 16
  %371 = vbcast.lane.b32.xlu0 %v361, %s370
  %v372 = vpop.permute.xlu0 %371
  %s374 = sor.u32 256, 24
  %375 = vbcast.lane.b32.xlu0 %v361, %s374
  %v376 = vpop.permute.xlu0 %375
  %v377 = vlaneseq
  %v378 = vshrl.u32 %v377, 7
  %v379 = vsub.s32 3, %v378
  %v380 = vrot.slane %v10, %v379
  %382 = vbcast.lane.b32.xlu0 %v380, 256
  %v383 = vpop.permute.xlu0 %382
  %s385 = sor.u32 256, 8
  %386 = vbcast.lane.b32.xlu0 %v380, %s385
  %v387 = vpop.permute.xlu0 %386
  %s389 = sor.u32 256, 16
  %390 = vbcast.lane.b32.xlu0 %v380, %s389
  %v391 = vpop.permute.xlu0 %390
  %s393 = sor.u32 256, 24
  %394 = vbcast.lane.b32.xlu0 %v380, %s393
  %v395 = vpop.permute.xlu0 %394
  %v396 = vlaneseq
  %v397 = vshrl.u32 %v396, 7
  %v398 = vsub.s32 4, %v397
  %v399 = vrot.slane %v10, %v398
  %401 = vbcast.lane.b32.xlu0 %v399, 256
  %v402 = vpop.permute.xlu0 %401
  %s404 = sor.u32 256, 8
  %405 = vbcast.lane.b32.xlu0 %v399, %s404
  %v406 = vpop.permute.xlu0 %405
  %s408 = sor.u32 256, 16
  %409 = vbcast.lane.b32.xlu0 %v399, %s408
  %v410 = vpop.permute.xlu0 %409
  %s412 = sor.u32 256, 24
  %413 = vbcast.lane.b32.xlu0 %v399, %s412
  %v414 = vpop.permute.xlu0 %413
  %v415 = vlaneseq
  %v416 = vshrl.u32 %v415, 7
  %v417 = vsub.s32 5, %v416
  %v418 = vrot.slane %v10, %v417
  %420 = vbcast.lane.b32.xlu0 %v418, 256
  %v421 = vpop.permute.xlu0 %420
  %s423 = sor.u32 256, 8
  %424 = vbcast.lane.b32.xlu0 %v418, %s423
  %v425 = vpop.permute.xlu0 %424
  %s427 = sor.u32 256, 16
  %428 = vbcast.lane.b32.xlu0 %v418, %s427
  %v429 = vpop.permute.xlu0 %428
  %s431 = sor.u32 256, 24
  %432 = vbcast.lane.b32.xlu0 %v418, %s431
  %v433 = vpop.permute.xlu0 %432
  %v434 = vlaneseq
  %v435 = vshrl.u32 %v434, 7
  %v436 = vsub.s32 6, %v435
  %v437 = vrot.slane %v10, %v436
  %439 = vbcast.lane.b32.xlu0 %v437, 256
  %v440 = vpop.permute.xlu0 %439
  %s442 = sor.u32 256, 8
  %443 = vbcast.lane.b32.xlu0 %v437, %s442
  %v444 = vpop.permute.xlu0 %443
  %s446 = sor.u32 256, 16
  %447 = vbcast.lane.b32.xlu0 %v437, %s446
  %v448 = vpop.permute.xlu0 %447
  %s450 = sor.u32 256, 24
  %451 = vbcast.lane.b32.xlu0 %v437, %s450
  %v452 = vpop.permute.xlu0 %451
  %v453 = vlaneseq
  %v454 = vshrl.u32 %v453, 7
  %v455 = vsub.s32 7, %v454
  %v456 = vrot.slane %v10, %v455
  %458 = vbcast.lane.b32.xlu0 %v456, 256
  %v459 = vpop.permute.xlu0 %458
  %s461 = sor.u32 256, 8
  %462 = vbcast.lane.b32.xlu0 %v456, %s461
  %v463 = vpop.permute.xlu0 %462
  %s465 = sor.u32 256, 16
  %466 = vbcast.lane.b32.xlu0 %v456, %s465
  %v467 = vpop.permute.xlu0 %466
  %s469 = sor.u32 256, 24
  %470 = vbcast.lane.b32.xlu0 %v456, %s469
  %v471 = vpop.permute.xlu0 %470
  %v472 = vlaneseq
  %v473 = vshrl.u32 %v472, 7
  %v474 = vsub.s32 0, %v473
  %v475 = vrot.slane %v11, %v474
  %477 = vbcast.lane.b32.xlu0 %v475, 256
  %v478 = vpop.permute.xlu0 %477
  %s480 = sor.u32 256, 8
  %481 = vbcast.lane.b32.xlu0 %v475, %s480
  %v482 = vpop.permute.xlu0 %481
  %s484 = sor.u32 256, 16
  %485 = vbcast.lane.b32.xlu0 %v475, %s484
  %v486 = vpop.permute.xlu0 %485
  %s488 = sor.u32 256, 24
  %489 = vbcast.lane.b32.xlu0 %v475, %s488
  %v490 = vpop.permute.xlu0 %489
  %v491 = vlaneseq
  %v492 = vshrl.u32 %v491, 7
  %v493 = vsub.s32 1, %v492
  %v494 = vrot.slane %v11, %v493
  %496 = vbcast.lane.b32.xlu0 %v494, 256
  %v497 = vpop.permute.xlu0 %496
  %s499 = sor.u32 256, 8
  %500 = vbcast.lane.b32.xlu0 %v494, %s499
  %v501 = vpop.permute.xlu0 %500
  %s503 = sor.u32 256, 16
  %504 = vbcast.lane.b32.xlu0 %v494, %s503
  %v505 = vpop.permute.xlu0 %504
  %s507 = sor.u32 256, 24
  %508 = vbcast.lane.b32.xlu0 %v494, %s507
  %v509 = vpop.permute.xlu0 %508
  %v510 = vlaneseq
  %v511 = vshrl.u32 %v510, 7
  %v512 = vsub.s32 2, %v511
  %v513 = vrot.slane %v11, %v512
  %515 = vbcast.lane.b32.xlu0 %v513, 256
  %v516 = vpop.permute.xlu0 %515
  %s518 = sor.u32 256, 8
  %519 = vbcast.lane.b32.xlu0 %v513, %s518
  %v520 = vpop.permute.xlu0 %519
  %s522 = sor.u32 256, 16
  %523 = vbcast.lane.b32.xlu0 %v513, %s522
  %v524 = vpop.permute.xlu0 %523
  %s526 = sor.u32 256, 24
  %527 = vbcast.lane.b32.xlu0 %v513, %s526
  %v528 = vpop.permute.xlu0 %527
  %v529 = vlaneseq
  %v530 = vshrl.u32 %v529, 7
  %v531 = vsub.s32 3, %v530
  %v532 = vrot.slane %v11, %v531
  %534 = vbcast.lane.b32.xlu0 %v532, 256
  %v535 = vpop.permute.xlu0 %534
  %s537 = sor.u32 256, 8
  %538 = vbcast.lane.b32.xlu0 %v532, %s537
  %v539 = vpop.permute.xlu0 %538
  %s541 = sor.u32 256, 16
  %542 = vbcast.lane.b32.xlu0 %v532, %s541
  %v543 = vpop.permute.xlu0 %542
  %s545 = sor.u32 256, 24
  %546 = vbcast.lane.b32.xlu0 %v532, %s545
  %v547 = vpop.permute.xlu0 %546
  %v548 = vlaneseq
  %v549 = vshrl.u32 %v548, 7
  %v550 = vsub.s32 4, %v549
  %v551 = vrot.slane %v11, %v550
  %553 = vbcast.lane.b32.xlu0 %v551, 256
  %v554 = vpop.permute.xlu0 %553
  %s556 = sor.u32 256, 8
  %557 = vbcast.lane.b32.xlu0 %v551, %s556
  %v558 = vpop.permute.xlu0 %557
  %s560 = sor.u32 256, 16
  %561 = vbcast.lane.b32.xlu0 %v551, %s560
  %v562 = vpop.permute.xlu0 %561
  %s564 = sor.u32 256, 24
  %565 = vbcast.lane.b32.xlu0 %v551, %s564
  %v566 = vpop.permute.xlu0 %565
  %v567 = vlaneseq
  %v568 = vshrl.u32 %v567, 7
  %v569 = vsub.s32 5, %v568
  %v570 = vrot.slane %v11, %v569
  %572 = vbcast.lane.b32.xlu0 %v570, 256
  %v573 = vpop.permute.xlu0 %572
  %s575 = sor.u32 256, 8
  %576 = vbcast.lane.b32.xlu0 %v570, %s575
  %v577 = vpop.permute.xlu0 %576
  %s579 = sor.u32 256, 16
  %580 = vbcast.lane.b32.xlu0 %v570, %s579
  %v581 = vpop.permute.xlu0 %580
  %s583 = sor.u32 256, 24
  %584 = vbcast.lane.b32.xlu0 %v570, %s583
  %v585 = vpop.permute.xlu0 %584
  %v586 = vlaneseq
  %v587 = vshrl.u32 %v586, 7
  %v588 = vsub.s32 6, %v587
  %v589 = vrot.slane %v11, %v588
  %591 = vbcast.lane.b32.xlu0 %v589, 256
  %v592 = vpop.permute.xlu0 %591
  %s594 = sor.u32 256, 8
  %595 = vbcast.lane.b32.xlu0 %v589, %s594
  %v596 = vpop.permute.xlu0 %595
  %s598 = sor.u32 256, 16
  %599 = vbcast.lane.b32.xlu0 %v589, %s598
  %v600 = vpop.permute.xlu0 %599
  %s602 = sor.u32 256, 24
  %603 = vbcast.lane.b32.xlu0 %v589, %s602
  %v604 = vpop.permute.xlu0 %603
  %v605 = vlaneseq
  %v606 = vshrl.u32 %v605, 7
  %v607 = vsub.s32 7, %v606
  %v608 = vrot.slane %v11, %v607
  %610 = vbcast.lane.b32.xlu0 %v608, 256
  %v611 = vpop.permute.xlu0 %610
  %s613 = sor.u32 256, 8
  %614 = vbcast.lane.b32.xlu0 %v608, %s613
  %v615 = vpop.permute.xlu0 %614
  %s617 = sor.u32 256, 16
  %618 = vbcast.lane.b32.xlu0 %v608, %s617
  %v619 = vpop.permute.xlu0 %618
  %s621 = sor.u32 256, 24
  %622 = vbcast.lane.b32.xlu0 %v608, %s621
  %v623 = vpop.permute.xlu0 %622
  %v624 = vlaneseq
  %v625 = vshrl.u32 %v624, 7
  %v626 = vsub.s32 0, %v625
  %v627 = vrot.slane %v12, %v626
  %629 = vbcast.lane.b32.xlu0 %v627, 256
  %v630 = vpop.permute.xlu0 %629
  %s632 = sor.u32 256, 8
  %633 = vbcast.lane.b32.xlu0 %v627, %s632
  %v634 = vpop.permute.xlu0 %633
  %s636 = sor.u32 256, 16
  %637 = vbcast.lane.b32.xlu0 %v627, %s636
  %v638 = vpop.permute.xlu0 %637
  %s640 = sor.u32 256, 24
  %641 = vbcast.lane.b32.xlu0 %v627, %s640
  %v642 = vpop.permute.xlu0 %641
  %v643 = vlaneseq
  %v644 = vshrl.u32 %v643, 7
  %v645 = vsub.s32 1, %v644
  %v646 = vrot.slane %v12, %v645
  %648 = vbcast.lane.b32.xlu0 %v646, 256
  %v649 = vpop.permute.xlu0 %648
  %s651 = sor.u32 256, 8
  %652 = vbcast.lane.b32.xlu0 %v646, %s651
  %v653 = vpop.permute.xlu0 %652
  %s655 = sor.u32 256, 16
  %656 = vbcast.lane.b32.xlu0 %v646, %s655
  %v657 = vpop.permute.xlu0 %656
  %s659 = sor.u32 256, 24
  %660 = vbcast.lane.b32.xlu0 %v646, %s659
  %v661 = vpop.permute.xlu0 %660
  %v662 = vlaneseq
  %v663 = vshrl.u32 %v662, 7
  %v664 = vsub.s32 2, %v663
  %v665 = vrot.slane %v12, %v664
  %667 = vbcast.lane.b32.xlu0 %v665, 256
  %v668 = vpop.permute.xlu0 %667
  %s670 = sor.u32 256, 8
  %671 = vbcast.lane.b32.xlu0 %v665, %s670
  %v672 = vpop.permute.xlu0 %671
  %s674 = sor.u32 256, 16
  %675 = vbcast.lane.b32.xlu0 %v665, %s674
  %v676 = vpop.permute.xlu0 %675
  %s678 = sor.u32 256, 24
  %679 = vbcast.lane.b32.xlu0 %v665, %s678
  %v680 = vpop.permute.xlu0 %679
  %v681 = vlaneseq
  %v682 = vshrl.u32 %v681, 7
  %v683 = vsub.s32 3, %v682
  %v684 = vrot.slane %v12, %v683
  %686 = vbcast.lane.b32.xlu0 %v684, 256
  %v687 = vpop.permute.xlu0 %686
  %s689 = sor.u32 256, 8
  %690 = vbcast.lane.b32.xlu0 %v684, %s689
  %v691 = vpop.permute.xlu0 %690
  %s693 = sor.u32 256, 16
  %694 = vbcast.lane.b32.xlu0 %v684, %s693
  %v695 = vpop.permute.xlu0 %694
  %s697 = sor.u32 256, 24
  %698 = vbcast.lane.b32.xlu0 %v684, %s697
  %v699 = vpop.permute.xlu0 %698
  %v700 = vlaneseq
  %v701 = vshrl.u32 %v700, 7
  %v702 = vsub.s32 4, %v701
  %v703 = vrot.slane %v12, %v702
  %705 = vbcast.lane.b32.xlu0 %v703, 256
  %v706 = vpop.permute.xlu0 %705
  %s708 = sor.u32 256, 8
  %709 = vbcast.lane.b32.xlu0 %v703, %s708
  %v710 = vpop.permute.xlu0 %709
  %s712 = sor.u32 256, 16
  %713 = vbcast.lane.b32.xlu0 %v703, %s712
  %v714 = vpop.permute.xlu0 %713
  %s716 = sor.u32 256, 24
  %717 = vbcast.lane.b32.xlu0 %v703, %s716
  %v718 = vpop.permute.xlu0 %717
  %v719 = vlaneseq
  %v720 = vshrl.u32 %v719, 7
  %v721 = vsub.s32 5, %v720
  %v722 = vrot.slane %v12, %v721
  %724 = vbcast.lane.b32.xlu0 %v722, 256
  %v725 = vpop.permute.xlu0 %724
  %s727 = sor.u32 256, 8
  %728 = vbcast.lane.b32.xlu0 %v722, %s727
  %v729 = vpop.permute.xlu0 %728
  %s731 = sor.u32 256, 16
  %732 = vbcast.lane.b32.xlu0 %v722, %s731
  %v733 = vpop.permute.xlu0 %732
  %s735 = sor.u32 256, 24
  %736 = vbcast.lane.b32.xlu0 %v722, %s735
  %v737 = vpop.permute.xlu0 %736
  %v738 = vlaneseq
  %v739 = vshrl.u32 %v738, 7
  %v740 = vsub.s32 6, %v739
  %v741 = vrot.slane %v12, %v740
  %743 = vbcast.lane.b32.xlu0 %v741, 256
  %v744 = vpop.permute.xlu0 %743
  %s746 = sor.u32 256, 8
  %747 = vbcast.lane.b32.xlu0 %v741, %s746
  %v748 = vpop.permute.xlu0 %747
  %s750 = sor.u32 256, 16
  %751 = vbcast.lane.b32.xlu0 %v741, %s750
  %v752 = vpop.permute.xlu0 %751
  %s754 = sor.u32 256, 24
  %755 = vbcast.lane.b32.xlu0 %v741, %s754
  %v756 = vpop.permute.xlu0 %755
  %v757 = vlaneseq
  %v758 = vshrl.u32 %v757, 7
  %v759 = vsub.s32 7, %v758
  %v760 = vrot.slane %v12, %v759
  %762 = vbcast.lane.b32.xlu0 %v760, 256
  %v763 = vpop.permute.xlu0 %762
  %s765 = sor.u32 256, 8
  %766 = vbcast.lane.b32.xlu0 %v760, %s765
  %v767 = vpop.permute.xlu0 %766
  %s769 = sor.u32 256, 16
  %770 = vbcast.lane.b32.xlu0 %v760, %s769
  %v771 = vpop.permute.xlu0 %770
  %s773 = sor.u32 256, 24
  %774 = vbcast.lane.b32.xlu0 %v760, %s773
  %v775 = vpop.permute.xlu0 %774
  %v776 = vlaneseq
  %v777 = vshrl.u32 %v776, 7
  %v778 = vsub.s32 0, %v777
  %v779 = vrot.slane %v13, %v778
  %781 = vbcast.lane.b32.xlu0 %v779, 256
  %v782 = vpop.permute.xlu0 %781
  %s784 = sor.u32 256, 8
  %785 = vbcast.lane.b32.xlu0 %v779, %s784
  %v786 = vpop.permute.xlu0 %785
  %s788 = sor.u32 256, 16
  %789 = vbcast.lane.b32.xlu0 %v779, %s788
  %v790 = vpop.permute.xlu0 %789
  %s792 = sor.u32 256, 24
  %793 = vbcast.lane.b32.xlu0 %v779, %s792
  %v794 = vpop.permute.xlu0 %793
  %v795 = vlaneseq
  %v796 = vshrl.u32 %v795, 7
  %v797 = vsub.s32 1, %v796
  %v798 = vrot.slane %v13, %v797
  %800 = vbcast.lane.b32.xlu0 %v798, 256
  %v801 = vpop.permute.xlu0 %800
  %s803 = sor.u32 256, 8
  %804 = vbcast.lane.b32.xlu0 %v798, %s803
  %v805 = vpop.permute.xlu0 %804
  %s807 = sor.u32 256, 16
  %808 = vbcast.lane.b32.xlu0 %v798, %s807
  %v809 = vpop.permute.xlu0 %808
  %s811 = sor.u32 256, 24
  %812 = vbcast.lane.b32.xlu0 %v798, %s811
  %v813 = vpop.permute.xlu0 %812
  %v814 = vlaneseq
  %v815 = vshrl.u32 %v814, 7
  %v816 = vsub.s32 2, %v815
  %v817 = vrot.slane %v13, %v816
  %819 = vbcast.lane.b32.xlu0 %v817, 256
  %v820 = vpop.permute.xlu0 %819
  %s822 = sor.u32 256, 8
  %823 = vbcast.lane.b32.xlu0 %v817, %s822
  %v824 = vpop.permute.xlu0 %823
  %s826 = sor.u32 256, 16
  %827 = vbcast.lane.b32.xlu0 %v817, %s826
  %v828 = vpop.permute.xlu0 %827
  %s830 = sor.u32 256, 24
  %831 = vbcast.lane.b32.xlu0 %v817, %s830
  %v832 = vpop.permute.xlu0 %831
  %v833 = vlaneseq
  %v834 = vshrl.u32 %v833, 7
  %v835 = vsub.s32 3, %v834
  %v836 = vrot.slane %v13, %v835
  %838 = vbcast.lane.b32.xlu0 %v836, 256
  %v839 = vpop.permute.xlu0 %838
  %s841 = sor.u32 256, 8
  %842 = vbcast.lane.b32.xlu0 %v836, %s841
  %v843 = vpop.permute.xlu0 %842
  %s845 = sor.u32 256, 16
  %846 = vbcast.lane.b32.xlu0 %v836, %s845
  %v847 = vpop.permute.xlu0 %846
  %s849 = sor.u32 256, 24
  %850 = vbcast.lane.b32.xlu0 %v836, %s849
  %v851 = vpop.permute.xlu0 %850
  %v852 = vlaneseq
  %v853 = vshrl.u32 %v852, 7
  %v854 = vsub.s32 4, %v853
  %v855 = vrot.slane %v13, %v854
  %857 = vbcast.lane.b32.xlu0 %v855, 256
  %v858 = vpop.permute.xlu0 %857
  %s860 = sor.u32 256, 8
  %861 = vbcast.lane.b32.xlu0 %v855, %s860
  %v862 = vpop.permute.xlu0 %861
  %s864 = sor.u32 256, 16
  %865 = vbcast.lane.b32.xlu0 %v855, %s864
  %v866 = vpop.permute.xlu0 %865
  %s868 = sor.u32 256, 24
  %869 = vbcast.lane.b32.xlu0 %v855, %s868
  %v870 = vpop.permute.xlu0 %869
  %v871 = vlaneseq
  %v872 = vshrl.u32 %v871, 7
  %v873 = vsub.s32 5, %v872
  %v874 = vrot.slane %v13, %v873
  %876 = vbcast.lane.b32.xlu0 %v874, 256
  %v877 = vpop.permute.xlu0 %876
  %s879 = sor.u32 256, 8
  %880 = vbcast.lane.b32.xlu0 %v874, %s879
  %v881 = vpop.permute.xlu0 %880
  %s883 = sor.u32 256, 16
  %884 = vbcast.lane.b32.xlu0 %v874, %s883
  %v885 = vpop.permute.xlu0 %884
  %s887 = sor.u32 256, 24
  %888 = vbcast.lane.b32.xlu0 %v874, %s887
  %v889 = vpop.permute.xlu0 %888
  %v890 = vlaneseq
  %v891 = vshrl.u32 %v890, 7
  %v892 = vsub.s32 6, %v891
  %v893 = vrot.slane %v13, %v892
  %895 = vbcast.lane.b32.xlu0 %v893, 256
  %v896 = vpop.permute.xlu0 %895
  %s898 = sor.u32 256, 8
  %899 = vbcast.lane.b32.xlu0 %v893, %s898
  %v900 = vpop.permute.xlu0 %899
  %s902 = sor.u32 256, 16
  %903 = vbcast.lane.b32.xlu0 %v893, %s902
  %v904 = vpop.permute.xlu0 %903
  %s906 = sor.u32 256, 24
  %907 = vbcast.lane.b32.xlu0 %v893, %s906
  %v908 = vpop.permute.xlu0 %907
  %v909 = vlaneseq
  %v910 = vshrl.u32 %v909, 7
  %v911 = vsub.s32 7, %v910
  %v912 = vrot.slane %v13, %v911
  %914 = vbcast.lane.b32.xlu0 %v912, 256
  %v915 = vpop.permute.xlu0 %914
  %s917 = sor.u32 256, 8
  %918 = vbcast.lane.b32.xlu0 %v912, %s917
  %v919 = vpop.permute.xlu0 %918
  %s921 = sor.u32 256, 16
  %922 = vbcast.lane.b32.xlu0 %v912, %s921
  %v923 = vpop.permute.xlu0 %922
  %s925 = sor.u32 256, 24
  %926 = vbcast.lane.b32.xlu0 %v912, %s925
  %v927 = vpop.permute.xlu0 %926
  %v928 = vlaneseq
  %v929 = vshrl.u32 %v928, 7
  %v930 = vsub.s32 0, %v929
  %v931 = vrot.slane %v14, %v930
  %933 = vbcast.lane.b32.xlu0 %v931, 256
  %v934 = vpop.permute.xlu0 %933
  %s936 = sor.u32 256, 8
  %937 = vbcast.lane.b32.xlu0 %v931, %s936
  %v938 = vpop.permute.xlu0 %937
  %s940 = sor.u32 256, 16
  %941 = vbcast.lane.b32.xlu0 %v931, %s940
  %v942 = vpop.permute.xlu0 %941
  %s944 = sor.u32 256, 24
  %945 = vbcast.lane.b32.xlu0 %v931, %s944
  %v946 = vpop.permute.xlu0 %945
  %v947 = vlaneseq
  %v948 = vshrl.u32 %v947, 7
  %v949 = vsub.s32 1, %v948
  %v950 = vrot.slane %v14, %v949
  %952 = vbcast.lane.b32.xlu0 %v950, 256
  %v953 = vpop.permute.xlu0 %952
  %s955 = sor.u32 256, 8
  %956 = vbcast.lane.b32.xlu0 %v950, %s955
  %v957 = vpop.permute.xlu0 %956
  %s959 = sor.u32 256, 16
  %960 = vbcast.lane.b32.xlu0 %v950, %s959
  %v961 = vpop.permute.xlu0 %960
  %s963 = sor.u32 256, 24
  %964 = vbcast.lane.b32.xlu0 %v950, %s963
  %v965 = vpop.permute.xlu0 %964
  %v966 = vlaneseq
  %v967 = vshrl.u32 %v966, 7
  %v968 = vsub.s32 2, %v967
  %v969 = vrot.slane %v14, %v968
  %971 = vbcast.lane.b32.xlu0 %v969, 256
  %v972 = vpop.permute.xlu0 %971
  %s974 = sor.u32 256, 8
  %975 = vbcast.lane.b32.xlu0 %v969, %s974
  %v976 = vpop.permute.xlu0 %975
  %s978 = sor.u32 256, 16
  %979 = vbcast.lane.b32.xlu0 %v969, %s978
  %v980 = vpop.permute.xlu0 %979
  %s982 = sor.u32 256, 24
  %983 = vbcast.lane.b32.xlu0 %v969, %s982
  %v984 = vpop.permute.xlu0 %983
  %v985 = vlaneseq
  %v986 = vshrl.u32 %v985, 7
  %v987 = vsub.s32 3, %v986
  %v988 = vrot.slane %v14, %v987
  %990 = vbcast.lane.b32.xlu0 %v988, 256
  %v991 = vpop.permute.xlu0 %990
  %s993 = sor.u32 256, 8
  %994 = vbcast.lane.b32.xlu0 %v988, %s993
  %v995 = vpop.permute.xlu0 %994
  %s997 = sor.u32 256, 16
  %998 = vbcast.lane.b32.xlu0 %v988, %s997
  %v999 = vpop.permute.xlu0 %998
  %s1001 = sor.u32 256, 24
  %1002 = vbcast.lane.b32.xlu0 %v988, %s1001
  %v1003 = vpop.permute.xlu0 %1002
  %v1004 = vlaneseq
  %v1005 = vshrl.u32 %v1004, 7
  %v1006 = vsub.s32 4, %v1005
  %v1007 = vrot.slane %v14, %v1006
  %1009 = vbcast.lane.b32.xlu0 %v1007, 256
  %v1010 = vpop.permute.xlu0 %1009
  %s1012 = sor.u32 256, 8
  %1013 = vbcast.lane.b32.xlu0 %v1007, %s1012
  %v1014 = vpop.permute.xlu0 %1013
  %s1016 = sor.u32 256, 16
  %1017 = vbcast.lane.b32.xlu0 %v1007, %s1016
  %v1018 = vpop.permute.xlu0 %1017
  %s1020 = sor.u32 256, 24
  %1021 = vbcast.lane.b32.xlu0 %v1007, %s1020
  %v1022 = vpop.permute.xlu0 %1021
  %v1023 = vlaneseq
  %v1024 = vshrl.u32 %v1023, 7
  %v1025 = vsub.s32 5, %v1024
  %v1026 = vrot.slane %v14, %v1025
  %1028 = vbcast.lane.b32.xlu0 %v1026, 256
  %v1029 = vpop.permute.xlu0 %1028
  %s1031 = sor.u32 256, 8
  %1032 = vbcast.lane.b32.xlu0 %v1026, %s1031
  %v1033 = vpop.permute.xlu0 %1032
  %s1035 = sor.u32 256, 16
  %1036 = vbcast.lane.b32.xlu0 %v1026, %s1035
  %v1037 = vpop.permute.xlu0 %1036
  %s1039 = sor.u32 256, 24
  %1040 = vbcast.lane.b32.xlu0 %v1026, %s1039
  %v1041 = vpop.permute.xlu0 %1040
  %v1042 = vlaneseq
  %v1043 = vshrl.u32 %v1042, 7
  %v1044 = vsub.s32 6, %v1043
  %v1045 = vrot.slane %v14, %v1044
  %1047 = vbcast.lane.b32.xlu0 %v1045, 256
  %v1048 = vpop.permute.xlu0 %1047
  %s1050 = sor.u32 256, 8
  %1051 = vbcast.lane.b32.xlu0 %v1045, %s1050
  %v1052 = vpop.permute.xlu0 %1051
  %s1054 = sor.u32 256, 16
  %1055 = vbcast.lane.b32.xlu0 %v1045, %s1054
  %v1056 = vpop.permute.xlu0 %1055
  %s1058 = sor.u32 256, 24
  %1059 = vbcast.lane.b32.xlu0 %v1045, %s1058
  %v1060 = vpop.permute.xlu0 %1059
  %v1061 = vlaneseq
  %v1062 = vshrl.u32 %v1061, 7
  %v1063 = vsub.s32 7, %v1062
  %v1064 = vrot.slane %v14, %v1063
  %1066 = vbcast.lane.b32.xlu0 %v1064, 256
  %v1067 = vpop.permute.xlu0 %1066
  %s1069 = sor.u32 256, 8
  %1070 = vbcast.lane.b32.xlu0 %v1064, %s1069
  %v1071 = vpop.permute.xlu0 %1070
  %s1073 = sor.u32 256, 16
  %1074 = vbcast.lane.b32.xlu0 %v1064, %s1073
  %v1075 = vpop.permute.xlu0 %1074
  %s1077 = sor.u32 256, 24
  %1078 = vbcast.lane.b32.xlu0 %v1064, %s1077
  %v1079 = vpop.permute.xlu0 %1078
  %v1080 = vlaneseq
  %v1081 = vshrl.u32 %v1080, 7
  %v1082 = vsub.s32 0, %v1081
  %v1083 = vrot.slane %v15, %v1082
  %1085 = vbcast.lane.b32.xlu0 %v1083, 256
  %v1086 = vpop.permute.xlu0 %1085
  %s1088 = sor.u32 256, 8
  %1089 = vbcast.lane.b32.xlu0 %v1083, %s1088
  %v1090 = vpop.permute.xlu0 %1089
  %s1092 = sor.u32 256, 16
  %1093 = vbcast.lane.b32.xlu0 %v1083, %s1092
  %v1094 = vpop.permute.xlu0 %1093
  %s1096 = sor.u32 256, 24
  %1097 = vbcast.lane.b32.xlu0 %v1083, %s1096
  %v1098 = vpop.permute.xlu0 %1097
  %v1099 = vlaneseq
  %v1100 = vshrl.u32 %v1099, 7
  %v1101 = vsub.s32 1, %v1100
  %v1102 = vrot.slane %v15, %v1101
  %1104 = vbcast.lane.b32.xlu0 %v1102, 256
  %v1105 = vpop.permute.xlu0 %1104
  %s1107 = sor.u32 256, 8
  %1108 = vbcast.lane.b32.xlu0 %v1102, %s1107
  %v1109 = vpop.permute.xlu0 %1108
  %s1111 = sor.u32 256, 16
  %1112 = vbcast.lane.b32.xlu0 %v1102, %s1111
  %v1113 = vpop.permute.xlu0 %1112
  %s1115 = sor.u32 256, 24
  %1116 = vbcast.lane.b32.xlu0 %v1102, %s1115
  %v1117 = vpop.permute.xlu0 %1116
  %v1118 = vlaneseq
  %v1119 = vshrl.u32 %v1118, 7
  %v1120 = vsub.s32 2, %v1119
  %v1121 = vrot.slane %v15, %v1120
  %1123 = vbcast.lane.b32.xlu0 %v1121, 256
  %v1124 = vpop.permute.xlu0 %1123
  %s1126 = sor.u32 256, 8
  %1127 = vbcast.lane.b32.xlu0 %v1121, %s1126
  %v1128 = vpop.permute.xlu0 %1127
  %s1130 = sor.u32 256, 16
  %1131 = vbcast.lane.b32.xlu0 %v1121, %s1130
  %v1132 = vpop.permute.xlu0 %1131
  %s1134 = sor.u32 256, 24
  %1135 = vbcast.lane.b32.xlu0 %v1121, %s1134
  %v1136 = vpop.permute.xlu0 %1135
  %v1137 = vlaneseq
  %v1138 = vshrl.u32 %v1137, 7
  %v1139 = vsub.s32 3, %v1138
  %v1140 = vrot.slane %v15, %v1139
  %1142 = vbcast.lane.b32.xlu0 %v1140, 256
  %v1143 = vpop.permute.xlu0 %1142
  %s1145 = sor.u32 256, 8
  %1146 = vbcast.lane.b32.xlu0 %v1140, %s1145
  %v1147 = vpop.permute.xlu0 %1146
  %s1149 = sor.u32 256, 16
  %1150 = vbcast.lane.b32.xlu0 %v1140, %s1149
  %v1151 = vpop.permute.xlu0 %1150
  %s1153 = sor.u32 256, 24
  %1154 = vbcast.lane.b32.xlu0 %v1140, %s1153
  %v1155 = vpop.permute.xlu0 %1154
  %v1156 = vlaneseq
  %v1157 = vshrl.u32 %v1156, 7
  %v1158 = vsub.s32 4, %v1157
  %v1159 = vrot.slane %v15, %v1158
  %1161 = vbcast.lane.b32.xlu0 %v1159, 256
  %v1162 = vpop.permute.xlu0 %1161
  %s1164 = sor.u32 256, 8
  %1165 = vbcast.lane.b32.xlu0 %v1159, %s1164
  %v1166 = vpop.permute.xlu0 %1165
  %s1168 = sor.u32 256, 16
  %1169 = vbcast.lane.b32.xlu0 %v1159, %s1168
  %v1170 = vpop.permute.xlu0 %1169
  %s1172 = sor.u32 256, 24
  %1173 = vbcast.lane.b32.xlu0 %v1159, %s1172
  %v1174 = vpop.permute.xlu0 %1173
  %v1175 = vlaneseq
  %v1176 = vshrl.u32 %v1175, 7
  %v1177 = vsub.s32 5, %v1176
  %v1178 = vrot.slane %v15, %v1177
  %1180 = vbcast.lane.b32.xlu0 %v1178, 256
  %v1181 = vpop.permute.xlu0 %1180
  %s1183 = sor.u32 256, 8
  %1184 = vbcast.lane.b32.xlu0 %v1178, %s1183
  %v1185 = vpop.permute.xlu0 %1184
  %s1187 = sor.u32 256, 16
  %1188 = vbcast.lane.b32.xlu0 %v1178, %s1187
  %v1189 = vpop.permute.xlu0 %1188
  %s1191 = sor.u32 256, 24
  %1192 = vbcast.lane.b32.xlu0 %v1178, %s1191
  %v1193 = vpop.permute.xlu0 %1192
  %v1194 = vlaneseq
  %v1195 = vshrl.u32 %v1194, 7
  %v1196 = vsub.s32 6, %v1195
  %v1197 = vrot.slane %v15, %v1196
  %1199 = vbcast.lane.b32.xlu0 %v1197, 256
  %v1200 = vpop.permute.xlu0 %1199
  %s1202 = sor.u32 256, 8
  %1203 = vbcast.lane.b32.xlu0 %v1197, %s1202
  %v1204 = vpop.permute.xlu0 %1203
  %s1206 = sor.u32 256, 16
  %1207 = vbcast.lane.b32.xlu0 %v1197, %s1206
  %v1208 = vpop.permute.xlu0 %1207
  %s1210 = sor.u32 256, 24
  %1211 = vbcast.lane.b32.xlu0 %v1197, %s1210
  %v1212 = vpop.permute.xlu0 %1211
  %v1213 = vlaneseq
  %v1214 = vshrl.u32 %v1213, 7
  %v1215 = vsub.s32 7, %v1214
  %v1216 = vrot.slane %v15, %v1215
  %1218 = vbcast.lane.b32.xlu0 %v1216, 256
  %v1219 = vpop.permute.xlu0 %1218
  %s1221 = sor.u32 256, 8
  %1222 = vbcast.lane.b32.xlu0 %v1216, %s1221
  %v1223 = vpop.permute.xlu0 %1222
  %s1225 = sor.u32 256, 16
  %1226 = vbcast.lane.b32.xlu0 %v1216, %s1225
  %v1227 = vpop.permute.xlu0 %1226
  %s1229 = sor.u32 256, 24
  %1230 = vbcast.lane.b32.xlu0 %v1216, %s1229
  %v1231 = vpop.permute.xlu0 %1230
  %v1232 = vcombine.low %v22, %v60
  %v1233 = vcombine.high %v22, %v60
  %v1235 = vunpack.c.l.s4 1983009808
  %v1236 = vunpack.c.0.s8 %v1235
  %v1237 = vlaneseq
  %v1238 = vshrl.u32 %v1237, 7
  %v1239 = vsub.s32 %v1236, %v1238
  %v1240 = vrot.slane %v1232, %v1239
  %v1242 = vunpack.c.l.s4 1983009808
  %v1243 = vunpack.c.0.s8 %v1242
  %v1244 = vlaneseq
  %v1245 = vshrl.u32 %v1244, 7
  %v1246 = vsub.s32 %v1243, %v1245
  %v1247 = vrot.slane %v1233, %v1246
  %v1248 = vcombine.low %v41, %v79
  %v1249 = vcombine.high %v41, %v79
  %v1251 = vunpack.c.l.s4 1983009808
  %v1252 = vunpack.c.0.s8 %v1251
  %v1253 = vlaneseq
  %v1254 = vshrl.u32 %v1253, 7
  %v1255 = vsub.s32 %v1252, %v1254
  %v1256 = vrot.slane %v1248, %v1255
  %v1258 = vunpack.c.l.s4 1983009808
  %v1259 = vunpack.c.0.s8 %v1258
  %v1260 = vlaneseq
  %v1261 = vshrl.u32 %v1260, 7
  %v1262 = vsub.s32 %v1259, %v1261
  %v1263 = vrot.slane %v1249, %v1262
  %v1264 = vcombine.low %v98, %v136
  %v1265 = vcombine.high %v98, %v136
  %v1267 = vunpack.c.l.s4 1983009808
  %v1268 = vunpack.c.0.s8 %v1267
  %v1269 = vlaneseq
  %v1270 = vshrl.u32 %v1269, 7
  %v1271 = vsub.s32 %v1268, %v1270
  %v1272 = vrot.slane %v1264, %v1271
  %v1274 = vunpack.c.l.s4 1983009808
  %v1275 = vunpack.c.0.s8 %v1274
  %v1276 = vlaneseq
  %v1277 = vshrl.u32 %v1276, 7
  %v1278 = vsub.s32 %v1275, %v1277
  %v1279 = vrot.slane %v1265, %v1278
  %v1280 = vcombine.low %v117, %v155
  %v1281 = vcombine.high %v117, %v155
  %v1283 = vunpack.c.l.s4 1983009808
  %v1284 = vunpack.c.0.s8 %v1283
  %v1285 = vlaneseq
  %v1286 = vshrl.u32 %v1285, 7
  %v1287 = vsub.s32 %v1284, %v1286
  %v1288 = vrot.slane %v1280, %v1287
  %v1290 = vunpack.c.l.s4 1983009808
  %v1291 = vunpack.c.0.s8 %v1290
  %v1292 = vlaneseq
  %v1293 = vshrl.u32 %v1292, 7
  %v1294 = vsub.s32 %v1291, %v1293
  %v1295 = vrot.slane %v1281, %v1294
  %v1296 = vcombine.low %v1240, %v1256
  %v1297 = vcombine.high %v1240, %v1256
  %v1299 = vunpack.c.l.s4 1934713408
  %v1300 = vunpack.c.0.s8 %v1299
  %v1301 = vlaneseq
  %v1302 = vshrl.u32 %v1301, 7
  %v1303 = vsub.s32 %v1300, %v1302
  %v1304 = vrot.slane %v1296, %v1303
  %v1306 = vunpack.c.l.s4 1934713408
  %v1307 = vunpack.c.0.s8 %v1306
  %v1308 = vlaneseq
  %v1309 = vshrl.u32 %v1308, 7
  %v1310 = vsub.s32 %v1307, %v1309
  %v1311 = vrot.slane %v1297, %v1310
  %v1312 = vcombine.low %v1247, %v1263
  %v1313 = vcombine.high %v1247, %v1263
  %v1315 = vunpack.c.l.s4 1934713408
  %v1316 = vunpack.c.0.s8 %v1315
  %v1317 = vlaneseq
  %v1318 = vshrl.u32 %v1317, 7
  %v1319 = vsub.s32 %v1316, %v1318
  %v1320 = vrot.slane %v1312, %v1319
  %v1322 = vunpack.c.l.s4 1934713408
  %v1323 = vunpack.c.0.s8 %v1322
  %v1324 = vlaneseq
  %v1325 = vshrl.u32 %v1324, 7
  %v1326 = vsub.s32 %v1323, %v1325
  %v1327 = vrot.slane %v1313, %v1326
  %v1328 = vcombine.low %v1272, %v1288
  %v1329 = vcombine.high %v1272, %v1288
  %v1331 = vunpack.c.l.s4 1934713408
  %v1332 = vunpack.c.0.s8 %v1331
  %v1333 = vlaneseq
  %v1334 = vshrl.u32 %v1333, 7
  %v1335 = vsub.s32 %v1332, %v1334
  %v1336 = vrot.slane %v1328, %v1335
  %v1338 = vunpack.c.l.s4 1934713408
  %v1339 = vunpack.c.0.s8 %v1338
  %v1340 = vlaneseq
  %v1341 = vshrl.u32 %v1340, 7
  %v1342 = vsub.s32 %v1339, %v1341
  %v1343 = vrot.slane %v1329, %v1342
  %v1344 = vcombine.low %v1279, %v1295
  %v1345 = vcombine.high %v1279, %v1295
  %v1347 = vunpack.c.l.s4 1934713408
  %v1348 = vunpack.c.0.s8 %v1347
  %v1349 = vlaneseq
  %v1350 = vshrl.u32 %v1349, 7
  %v1351 = vsub.s32 %v1348, %v1350
  %v1352 = vrot.slane %v1344, %v1351
  %v1354 = vunpack.c.l.s4 1934713408
  %v1355 = vunpack.c.0.s8 %v1354
  %v1356 = vlaneseq
  %v1357 = vshrl.u32 %v1356, 7
  %v1358 = vsub.s32 %v1355, %v1357
  %v1359 = vrot.slane %v1345, %v1358
  %v1360 = vcombine.low %v1304, %v1336
  %v1361 = vcombine.high %v1304, %v1336
  %v1362 = vcombine.low %v1311, %v1343
  %v1363 = vcombine.high %v1311, %v1343
  %v1364 = vcombine.low %v1320, %v1352
  %v1365 = vcombine.high %v1320, %v1352
  %v1366 = vcombine.low %v1327, %v1359
  %v1367 = vcombine.high %v1327, %v1359
  %v1368 = vcombine.low %v26, %v64
  %v1369 = vcombine.high %v26, %v64
  %v1371 = vunpack.c.l.s4 1983009808
  %v1372 = vunpack.c.0.s8 %v1371
  %v1373 = vlaneseq
  %v1374 = vshrl.u32 %v1373, 7
  %v1375 = vsub.s32 %v1372, %v1374
  %v1376 = vrot.slane %v1368, %v1375
  %v1378 = vunpack.c.l.s4 1983009808
  %v1379 = vunpack.c.0.s8 %v1378
  %v1380 = vlaneseq
  %v1381 = vshrl.u32 %v1380, 7
  %v1382 = vsub.s32 %v1379, %v1381
  %v1383 = vrot.slane %v1369, %v1382
  %v1384 = vcombine.low %v45, %v83
  %v1385 = vcombine.high %v45, %v83
  %v1387 = vunpack.c.l.s4 1983009808
  %v1388 = vunpack.c.0.s8 %v1387
  %v1389 = vlaneseq
  %v1390 = vshrl.u32 %v1389, 7
  %v1391 = vsub.s32 %v1388, %v1390
  %v1392 = vrot.slane %v1384, %v1391
  %v1394 = vunpack.c.l.s4 1983009808
  %v1395 = vunpack.c.0.s8 %v1394
  %v1396 = vlaneseq
  %v1397 = vshrl.u32 %v1396, 7
  %v1398 = vsub.s32 %v1395, %v1397
  %v1399 = vrot.slane %v1385, %v1398
  %v1400 = vcombine.low %v102, %v140
  %v1401 = vcombine.high %v102, %v140
  %v1403 = vunpack.c.l.s4 1983009808
  %v1404 = vunpack.c.0.s8 %v1403
  %v1405 = vlaneseq
  %v1406 = vshrl.u32 %v1405, 7
  %v1407 = vsub.s32 %v1404, %v1406
  %v1408 = vrot.slane %v1400, %v1407
  %v1410 = vunpack.c.l.s4 1983009808
  %v1411 = vunpack.c.0.s8 %v1410
  %v1412 = vlaneseq
  %v1413 = vshrl.u32 %v1412, 7
  %v1414 = vsub.s32 %v1411, %v1413
  %v1415 = vrot.slane %v1401, %v1414
  %v1416 = vcombine.low %v121, %v159
  %v1417 = vcombine.high %v121, %v159
  %v1419 = vunpack.c.l.s4 1983009808
  %v1420 = vunpack.c.0.s8 %v1419
  %v1421 = vlaneseq
  %v1422 = vshrl.u32 %v1421, 7
  %v1423 = vsub.s32 %v1420, %v1422
  %v1424 = vrot.slane %v1416, %v1423
  %v1426 = vunpack.c.l.s4 1983009808
  %v1427 = vunpack.c.0.s8 %v1426
  %v1428 = vlaneseq
  %v1429 = vshrl.u32 %v1428, 7
  %v1430 = vsub.s32 %v1427, %v1429
  %v1431 = vrot.slane %v1417, %v1430
  %v1432 = vcombine.low %v1376, %v1392
  %v1433 = vcombine.high %v1376, %v1392
  %v1435 = vunpack.c.l.s4 1934713408
  %v1436 = vunpack.c.0.s8 %v1435
  %v1437 = vlaneseq
  %v1438 = vshrl.u32 %v1437, 7
  %v1439 = vsub.s32 %v1436, %v1438
  %v1440 = vrot.slane %v1432, %v1439
  %v1442 = vunpack.c.l.s4 1934713408
  %v1443 = vunpack.c.0.s8 %v1442
  %v1444 = vlaneseq
  %v1445 = vshrl.u32 %v1444, 7
  %v1446 = vsub.s32 %v1443, %v1445
  %v1447 = vrot.slane %v1433, %v1446
  %v1448 = vcombine.low %v1383, %v1399
  %v1449 = vcombine.high %v1383, %v1399
  %v1451 = vunpack.c.l.s4 1934713408
  %v1452 = vunpack.c.0.s8 %v1451
  %v1453 = vlaneseq
  %v1454 = vshrl.u32 %v1453, 7
  %v1455 = vsub.s32 %v1452, %v1454
  %v1456 = vrot.slane %v1448, %v1455
  %v1458 = vunpack.c.l.s4 1934713408
  %v1459 = vunpack.c.0.s8 %v1458
  %v1460 = vlaneseq
  %v1461 = vshrl.u32 %v1460, 7
  %v1462 = vsub.s32 %v1459, %v1461
  %v1463 = vrot.slane %v1449, %v1462
  %v1464 = vcombine.low %v1408, %v1424
  %v1465 = vcombine.high %v1408, %v1424
  %v1467 = vunpack.c.l.s4 1934713408
  %v1468 = vunpack.c.0.s8 %v1467
  %v1469 = vlaneseq
  %v1470 = vshrl.u32 %v1469, 7
  %v1471 = vsub.s32 %v1468, %v1470
  %v1472 = vrot.slane %v1464, %v1471
  %v1474 = vunpack.c.l.s4 1934713408
  %v1475 = vunpack.c.0.s8 %v1474
  %v1476 = vlaneseq
  %v1477 = vshrl.u32 %v1476, 7
  %v1478 = vsub.s32 %v1475, %v1477
  %v1479 = vrot.slane %v1465, %v1478
  %v1480 = vcombine.low %v1415, %v1431
  %v1481 = vcombine.high %v1415, %v1431
  %v1483 = vunpack.c.l.s4 1934713408
  %v1484 = vunpack.c.0.s8 %v1483
  %v1485 = vlaneseq
  %v1486 = vshrl.u32 %v1485, 7
  %v1487 = vsub.s32 %v1484, %v1486
  %v1488 = vrot.slane %v1480, %v1487
  %v1490 = vunpack.c.l.s4 1934713408
  %v1491 = vunpack.c.0.s8 %v1490
  %v1492 = vlaneseq
  %v1493 = vshrl.u32 %v1492, 7
  %v1494 = vsub.s32 %v1491, %v1493
  %v1495 = vrot.slane %v1481, %v1494
  %v1496 = vcombine.low %v1440, %v1472
  %v1497 = vcombine.high %v1440, %v1472
  %v1498 = vcombine.low %v1447, %v1479
  %v1499 = vcombine.high %v1447, %v1479
  %v1500 = vcombine.low %v1456, %v1488
  %v1501 = vcombine.high %v1456, %v1488
  %v1502 = vcombine.low %v1463, %v1495
  %v1503 = vcombine.high %v1463, %v1495
  %v1504 = vcombine.low %v30, %v68
  %v1505 = vcombine.high %v30, %v68
  %v1507 = vunpack.c.l.s4 1983009808
  %v1508 = vunpack.c.0.s8 %v1507
  %v1509 = vlaneseq
  %v1510 = vshrl.u32 %v1509, 7
  %v1511 = vsub.s32 %v1508, %v1510
  %v1512 = vrot.slane %v1504, %v1511
  %v1514 = vunpack.c.l.s4 1983009808
  %v1515 = vunpack.c.0.s8 %v1514
  %v1516 = vlaneseq
  %v1517 = vshrl.u32 %v1516, 7
  %v1518 = vsub.s32 %v1515, %v1517
  %v1519 = vrot.slane %v1505, %v1518
  %v1520 = vcombine.low %v49, %v87
  %v1521 = vcombine.high %v49, %v87
  %v1523 = vunpack.c.l.s4 1983009808
  %v1524 = vunpack.c.0.s8 %v1523
  %v1525 = vlaneseq
  %v1526 = vshrl.u32 %v1525, 7
  %v1527 = vsub.s32 %v1524, %v1526
  %v1528 = vrot.slane %v1520, %v1527
  %v1530 = vunpack.c.l.s4 1983009808
  %v1531 = vunpack.c.0.s8 %v1530
  %v1532 = vlaneseq
  %v1533 = vshrl.u32 %v1532, 7
  %v1534 = vsub.s32 %v1531, %v1533
  %v1535 = vrot.slane %v1521, %v1534
  %v1536 = vcombine.low %v106, %v144
  %v1537 = vcombine.high %v106, %v144
  %v1539 = vunpack.c.l.s4 1983009808
  %v1540 = vunpack.c.0.s8 %v1539
  %v1541 = vlaneseq
  %v1542 = vshrl.u32 %v1541, 7
  %v1543 = vsub.s32 %v1540, %v1542
  %v1544 = vrot.slane %v1536, %v1543
  %v1546 = vunpack.c.l.s4 1983009808
  %v1547 = vunpack.c.0.s8 %v1546
  %v1548 = vlaneseq
  %v1549 = vshrl.u32 %v1548, 7
  %v1550 = vsub.s32 %v1547, %v1549
  %v1551 = vrot.slane %v1537, %v1550
  %v1552 = vcombine.low %v125, %v163
  %v1553 = vcombine.high %v125, %v163
  %v1555 = vunpack.c.l.s4 1983009808
  %v1556 = vunpack.c.0.s8 %v1555
  %v1557 = vlaneseq
  %v1558 = vshrl.u32 %v1557, 7
  %v1559 = vsub.s32 %v1556, %v1558
  %v1560 = vrot.slane %v1552, %v1559
  %v1562 = vunpack.c.l.s4 1983009808
  %v1563 = vunpack.c.0.s8 %v1562
  %v1564 = vlaneseq
  %v1565 = vshrl.u32 %v1564, 7
  %v1566 = vsub.s32 %v1563, %v1565
  %v1567 = vrot.slane %v1553, %v1566
  %v1568 = vcombine.low %v1512, %v1528
  %v1569 = vcombine.high %v1512, %v1528
  %v1571 = vunpack.c.l.s4 1934713408
  %v1572 = vunpack.c.0.s8 %v1571
  %v1573 = vlaneseq
  %v1574 = vshrl.u32 %v1573, 7
  %v1575 = vsub.s32 %v1572, %v1574
  %v1576 = vrot.slane %v1568, %v1575
  %v1578 = vunpack.c.l.s4 1934713408
  %v1579 = vunpack.c.0.s8 %v1578
  %v1580 = vlaneseq
  %v1581 = vshrl.u32 %v1580, 7
  %v1582 = vsub.s32 %v1579, %v1581
  %v1583 = vrot.slane %v1569, %v1582
  %v1584 = vcombine.low %v1519, %v1535
  %v1585 = vcombine.high %v1519, %v1535
  %v1587 = vunpack.c.l.s4 1934713408
  %v1588 = vunpack.c.0.s8 %v1587
  %v1589 = vlaneseq
  %v1590 = vshrl.u32 %v1589, 7
  %v1591 = vsub.s32 %v1588, %v1590
  %v1592 = vrot.slane %v1584, %v1591
  %v1594 = vunpack.c.l.s4 1934713408
  %v1595 = vunpack.c.0.s8 %v1594
  %v1596 = vlaneseq
  %v1597 = vshrl.u32 %v1596, 7
  %v1598 = vsub.s32 %v1595, %v1597
  %v1599 = vrot.slane %v1585, %v1598
  %v1600 = vcombine.low %v1544, %v1560
  %v1601 = vcombine.high %v1544, %v1560
  %v1603 = vunpack.c.l.s4 1934713408
  %v1604 = vunpack.c.0.s8 %v1603
  %v1605 = vlaneseq
  %v1606 = vshrl.u32 %v1605, 7
  %v1607 = vsub.s32 %v1604, %v1606
  %v1608 = vrot.slane %v1600, %v1607
  %v1610 = vunpack.c.l.s4 1934713408
  %v1611 = vunpack.c.0.s8 %v1610
  %v1612 = vlaneseq
  %v1613 = vshrl.u32 %v1612, 7
  %v1614 = vsub.s32 %v1611, %v1613
  %v1615 = vrot.slane %v1601, %v1614
  %v1616 = vcombine.low %v1551, %v1567
  %v1617 = vcombine.high %v1551, %v1567
  %v1619 = vunpack.c.l.s4 1934713408
  %v1620 = vunpack.c.0.s8 %v1619
  %v1621 = vlaneseq
  %v1622 = vshrl.u32 %v1621, 7
  %v1623 = vsub.s32 %v1620, %v1622
  %v1624 = vrot.slane %v1616, %v1623
  %v1626 = vunpack.c.l.s4 1934713408
  %v1627 = vunpack.c.0.s8 %v1626
  %v1628 = vlaneseq
  %v1629 = vshrl.u32 %v1628, 7
  %v1630 = vsub.s32 %v1627, %v1629
  %v1631 = vrot.slane %v1617, %v1630
  %v1632 = vcombine.low %v1576, %v1608
  %v1633 = vcombine.high %v1576, %v1608
  %v1634 = vcombine.low %v1583, %v1615
  %v1635 = vcombine.high %v1583, %v1615
  %v1636 = vcombine.low %v1592, %v1624
  %v1637 = vcombine.high %v1592, %v1624
  %v1638 = vcombine.low %v1599, %v1631
  %v1639 = vcombine.high %v1599, %v1631
  %v1640 = vcombine.low %v34, %v72
  %v1641 = vcombine.high %v34, %v72
  %v1643 = vunpack.c.l.s4 1983009808
  %v1644 = vunpack.c.0.s8 %v1643
  %v1645 = vlaneseq
  %v1646 = vshrl.u32 %v1645, 7
  %v1647 = vsub.s32 %v1644, %v1646
  %v1648 = vrot.slane %v1640, %v1647
  %v1650 = vunpack.c.l.s4 1983009808
  %v1651 = vunpack.c.0.s8 %v1650
  %v1652 = vlaneseq
  %v1653 = vshrl.u32 %v1652, 7
  %v1654 = vsub.s32 %v1651, %v1653
  %v1655 = vrot.slane %v1641, %v1654
  %v1656 = vcombine.low %v53, %v91
  %v1657 = vcombine.high %v53, %v91
  %v1659 = vunpack.c.l.s4 1983009808
  %v1660 = vunpack.c.0.s8 %v1659
  %v1661 = vlaneseq
  %v1662 = vshrl.u32 %v1661, 7
  %v1663 = vsub.s32 %v1660, %v1662
  %v1664 = vrot.slane %v1656, %v1663
  %v1666 = vunpack.c.l.s4 1983009808
  %v1667 = vunpack.c.0.s8 %v1666
  %v1668 = vlaneseq
  %v1669 = vshrl.u32 %v1668, 7
  %v1670 = vsub.s32 %v1667, %v1669
  %v1671 = vrot.slane %v1657, %v1670
  %v1672 = vcombine.low %v110, %v148
  %v1673 = vcombine.high %v110, %v148
  %v1675 = vunpack.c.l.s4 1983009808
  %v1676 = vunpack.c.0.s8 %v1675
  %v1677 = vlaneseq
  %v1678 = vshrl.u32 %v1677, 7
  %v1679 = vsub.s32 %v1676, %v1678
  %v1680 = vrot.slane %v1672, %v1679
  %v1682 = vunpack.c.l.s4 1983009808
  %v1683 = vunpack.c.0.s8 %v1682
  %v1684 = vlaneseq
  %v1685 = vshrl.u32 %v1684, 7
  %v1686 = vsub.s32 %v1683, %v1685
  %v1687 = vrot.slane %v1673, %v1686
  %v1688 = vcombine.low %v129, %v167
  %v1689 = vcombine.high %v129, %v167
  %v1691 = vunpack.c.l.s4 1983009808
  %v1692 = vunpack.c.0.s8 %v1691
  %v1693 = vlaneseq
  %v1694 = vshrl.u32 %v1693, 7
  %v1695 = vsub.s32 %v1692, %v1694
  %v1696 = vrot.slane %v1688, %v1695
  %v1698 = vunpack.c.l.s4 1983009808
  %v1699 = vunpack.c.0.s8 %v1698
  %v1700 = vlaneseq
  %v1701 = vshrl.u32 %v1700, 7
  %v1702 = vsub.s32 %v1699, %v1701
  %v1703 = vrot.slane %v1689, %v1702
  %v1704 = vcombine.low %v1648, %v1664
  %v1705 = vcombine.high %v1648, %v1664
  %v1707 = vunpack.c.l.s4 1934713408
  %v1708 = vunpack.c.0.s8 %v1707
  %v1709 = vlaneseq
  %v1710 = vshrl.u32 %v1709, 7
  %v1711 = vsub.s32 %v1708, %v1710
  %v1712 = vrot.slane %v1704, %v1711
  %v1714 = vunpack.c.l.s4 1934713408
  %v1715 = vunpack.c.0.s8 %v1714
  %v1716 = vlaneseq
  %v1717 = vshrl.u32 %v1716, 7
  %v1718 = vsub.s32 %v1715, %v1717
  %v1719 = vrot.slane %v1705, %v1718
  %v1720 = vcombine.low %v1655, %v1671
  %v1721 = vcombine.high %v1655, %v1671
  %v1723 = vunpack.c.l.s4 1934713408
  %v1724 = vunpack.c.0.s8 %v1723
  %v1725 = vlaneseq
  %v1726 = vshrl.u32 %v1725, 7
  %v1727 = vsub.s32 %v1724, %v1726
  %v1728 = vrot.slane %v1720, %v1727
  %v1730 = vunpack.c.l.s4 1934713408
  %v1731 = vunpack.c.0.s8 %v1730
  %v1732 = vlaneseq
  %v1733 = vshrl.u32 %v1732, 7
  %v1734 = vsub.s32 %v1731, %v1733
  %v1735 = vrot.slane %v1721, %v1734
  %v1736 = vcombine.low %v1680, %v1696
  %v1737 = vcombine.high %v1680, %v1696
  %v1739 = vunpack.c.l.s4 1934713408
  %v1740 = vunpack.c.0.s8 %v1739
  %v1741 = vlaneseq
  %v1742 = vshrl.u32 %v1741, 7
  %v1743 = vsub.s32 %v1740, %v1742
  %v1744 = vrot.slane %v1736, %v1743
  %v1746 = vunpack.c.l.s4 1934713408
  %v1747 = vunpack.c.0.s8 %v1746
  %v1748 = vlaneseq
  %v1749 = vshrl.u32 %v1748, 7
  %v1750 = vsub.s32 %v1747, %v1749
  %v1751 = vrot.slane %v1737, %v1750
  %v1752 = vcombine.low %v1687, %v1703
  %v1753 = vcombine.high %v1687, %v1703
  %v1755 = vunpack.c.l.s4 1934713408
  %v1756 = vunpack.c.0.s8 %v1755
  %v1757 = vlaneseq
  %v1758 = vshrl.u32 %v1757, 7
  %v1759 = vsub.s32 %v1756, %v1758
  %v1760 = vrot.slane %v1752, %v1759
  %v1762 = vunpack.c.l.s4 1934713408
  %v1763 = vunpack.c.0.s8 %v1762
  %v1764 = vlaneseq
  %v1765 = vshrl.u32 %v1764, 7
  %v1766 = vsub.s32 %v1763, %v1765
  %v1767 = vrot.slane %v1753, %v1766
  %v1768 = vcombine.low %v1712, %v1744
  %v1769 = vcombine.high %v1712, %v1744
  %v1770 = vcombine.low %v1719, %v1751
  %v1771 = vcombine.high %v1719, %v1751
  %v1772 = vcombine.low %v1728, %v1760
  %v1773 = vcombine.high %v1728, %v1760
  %v1774 = vcombine.low %v1735, %v1767
  %v1775 = vcombine.high %v1735, %v1767
  %v1776 = vcombine.low %v174, %v212
  %v1777 = vcombine.high %v174, %v212
  %v1779 = vunpack.c.l.s4 1983009808
  %v1780 = vunpack.c.0.s8 %v1779
  %v1781 = vlaneseq
  %v1782 = vshrl.u32 %v1781, 7
  %v1783 = vsub.s32 %v1780, %v1782
  %v1784 = vrot.slane %v1776, %v1783
  %v1786 = vunpack.c.l.s4 1983009808
  %v1787 = vunpack.c.0.s8 %v1786
  %v1788 = vlaneseq
  %v1789 = vshrl.u32 %v1788, 7
  %v1790 = vsub.s32 %v1787, %v1789
  %v1791 = vrot.slane %v1777, %v1790
  %v1792 = vcombine.low %v193, %v231
  %v1793 = vcombine.high %v193, %v231
  %v1795 = vunpack.c.l.s4 1983009808
  %v1796 = vunpack.c.0.s8 %v1795
  %v1797 = vlaneseq
  %v1798 = vshrl.u32 %v1797, 7
  %v1799 = vsub.s32 %v1796, %v1798
  %v1800 = vrot.slane %v1792, %v1799
  %v1802 = vunpack.c.l.s4 1983009808
  %v1803 = vunpack.c.0.s8 %v1802
  %v1804 = vlaneseq
  %v1805 = vshrl.u32 %v1804, 7
  %v1806 = vsub.s32 %v1803, %v1805
  %v1807 = vrot.slane %v1793, %v1806
  %v1808 = vcombine.low %v250, %v288
  %v1809 = vcombine.high %v250, %v288
  %v1811 = vunpack.c.l.s4 1983009808
  %v1812 = vunpack.c.0.s8 %v1811
  %v1813 = vlaneseq
  %v1814 = vshrl.u32 %v1813, 7
  %v1815 = vsub.s32 %v1812, %v1814
  %v1816 = vrot.slane %v1808, %v1815
  %v1818 = vunpack.c.l.s4 1983009808
  %v1819 = vunpack.c.0.s8 %v1818
  %v1820 = vlaneseq
  %v1821 = vshrl.u32 %v1820, 7
  %v1822 = vsub.s32 %v1819, %v1821
  %v1823 = vrot.slane %v1809, %v1822
  %v1824 = vcombine.low %v269, %v307
  %v1825 = vcombine.high %v269, %v307
  %v1827 = vunpack.c.l.s4 1983009808
  %v1828 = vunpack.c.0.s8 %v1827
  %v1829 = vlaneseq
  %v1830 = vshrl.u32 %v1829, 7
  %v1831 = vsub.s32 %v1828, %v1830
  %v1832 = vrot.slane %v1824, %v1831
  %v1834 = vunpack.c.l.s4 1983009808
  %v1835 = vunpack.c.0.s8 %v1834
  %v1836 = vlaneseq
  %v1837 = vshrl.u32 %v1836, 7
  %v1838 = vsub.s32 %v1835, %v1837
  %v1839 = vrot.slane %v1825, %v1838
  %v1840 = vcombine.low %v1784, %v1800
  %v1841 = vcombine.high %v1784, %v1800
  %v1843 = vunpack.c.l.s4 1934713408
  %v1844 = vunpack.c.0.s8 %v1843
  %v1845 = vlaneseq
  %v1846 = vshrl.u32 %v1845, 7
  %v1847 = vsub.s32 %v1844, %v1846
  %v1848 = vrot.slane %v1840, %v1847
  %v1850 = vunpack.c.l.s4 1934713408
  %v1851 = vunpack.c.0.s8 %v1850
  %v1852 = vlaneseq
  %v1853 = vshrl.u32 %v1852, 7
  %v1854 = vsub.s32 %v1851, %v1853
  %v1855 = vrot.slane %v1841, %v1854
  %v1856 = vcombine.low %v1791, %v1807
  %v1857 = vcombine.high %v1791, %v1807
  %v1859 = vunpack.c.l.s4 1934713408
  %v1860 = vunpack.c.0.s8 %v1859
  %v1861 = vlaneseq
  %v1862 = vshrl.u32 %v1861, 7
  %v1863 = vsub.s32 %v1860, %v1862
  %v1864 = vrot.slane %v1856, %v1863
  %v1866 = vunpack.c.l.s4 1934713408
  %v1867 = vunpack.c.0.s8 %v1866
  %v1868 = vlaneseq
  %v1869 = vshrl.u32 %v1868, 7
  %v1870 = vsub.s32 %v1867, %v1869
  %v1871 = vrot.slane %v1857, %v1870
  %v1872 = vcombine.low %v1816, %v1832
  %v1873 = vcombine.high %v1816, %v1832
  %v1875 = vunpack.c.l.s4 1934713408
  %v1876 = vunpack.c.0.s8 %v1875
  %v1877 = vlaneseq
  %v1878 = vshrl.u32 %v1877, 7
  %v1879 = vsub.s32 %v1876, %v1878
  %v1880 = vrot.slane %v1872, %v1879
  %v1882 = vunpack.c.l.s4 1934713408
  %v1883 = vunpack.c.0.s8 %v1882
  %v1884 = vlaneseq
  %v1885 = vshrl.u32 %v1884, 7
  %v1886 = vsub.s32 %v1883, %v1885
  %v1887 = vrot.slane %v1873, %v1886
  %v1888 = vcombine.low %v1823, %v1839
  %v1889 = vcombine.high %v1823, %v1839
  %v1891 = vunpack.c.l.s4 1934713408
  %v1892 = vunpack.c.0.s8 %v1891
  %v1893 = vlaneseq
  %v1894 = vshrl.u32 %v1893, 7
  %v1895 = vsub.s32 %v1892, %v1894
  %v1896 = vrot.slane %v1888, %v1895
  %v1898 = vunpack.c.l.s4 1934713408
  %v1899 = vunpack.c.0.s8 %v1898
  %v1900 = vlaneseq
  %v1901 = vshrl.u32 %v1900, 7
  %v1902 = vsub.s32 %v1899, %v1901
  %v1903 = vrot.slane %v1889, %v1902
  %v1904 = vcombine.low %v1848, %v1880
  %v1905 = vcombine.high %v1848, %v1880
  %v1906 = vcombine.low %v1855, %v1887
  %v1907 = vcombine.high %v1855, %v1887
  %v1908 = vcombine.low %v1864, %v1896
  %v1909 = vcombine.high %v1864, %v1896
  %v1910 = vcombine.low %v1871, %v1903
  %v1911 = vcombine.high %v1871, %v1903
  %v1912 = vcombine.low %v178, %v216
  %v1913 = vcombine.high %v178, %v216
  %v1915 = vunpack.c.l.s4 1983009808
  %v1916 = vunpack.c.0.s8 %v1915
  %v1917 = vlaneseq
  %v1918 = vshrl.u32 %v1917, 7
  %v1919 = vsub.s32 %v1916, %v1918
  %v1920 = vrot.slane %v1912, %v1919
  %v1922 = vunpack.c.l.s4 1983009808
  %v1923 = vunpack.c.0.s8 %v1922
  %v1924 = vlaneseq
  %v1925 = vshrl.u32 %v1924, 7
  %v1926 = vsub.s32 %v1923, %v1925
  %v1927 = vrot.slane %v1913, %v1926
  %v1928 = vcombine.low %v197, %v235
  %v1929 = vcombine.high %v197, %v235
  %v1931 = vunpack.c.l.s4 1983009808
  %v1932 = vunpack.c.0.s8 %v1931
  %v1933 = vlaneseq
  %v1934 = vshrl.u32 %v1933, 7
  %v1935 = vsub.s32 %v1932, %v1934
  %v1936 = vrot.slane %v1928, %v1935
  %v1938 = vunpack.c.l.s4 1983009808
  %v1939 = vunpack.c.0.s8 %v1938
  %v1940 = vlaneseq
  %v1941 = vshrl.u32 %v1940, 7
  %v1942 = vsub.s32 %v1939, %v1941
  %v1943 = vrot.slane %v1929, %v1942
  %v1944 = vcombine.low %v254, %v292
  %v1945 = vcombine.high %v254, %v292
  %v1947 = vunpack.c.l.s4 1983009808
  %v1948 = vunpack.c.0.s8 %v1947
  %v1949 = vlaneseq
  %v1950 = vshrl.u32 %v1949, 7
  %v1951 = vsub.s32 %v1948, %v1950
  %v1952 = vrot.slane %v1944, %v1951
  %v1954 = vunpack.c.l.s4 1983009808
  %v1955 = vunpack.c.0.s8 %v1954
  %v1956 = vlaneseq
  %v1957 = vshrl.u32 %v1956, 7
  %v1958 = vsub.s32 %v1955, %v1957
  %v1959 = vrot.slane %v1945, %v1958
  %v1960 = vcombine.low %v273, %v311
  %v1961 = vcombine.high %v273, %v311
  %v1963 = vunpack.c.l.s4 1983009808
  %v1964 = vunpack.c.0.s8 %v1963
  %v1965 = vlaneseq
  %v1966 = vshrl.u32 %v1965, 7
  %v1967 = vsub.s32 %v1964, %v1966
  %v1968 = vrot.slane %v1960, %v1967
  %v1970 = vunpack.c.l.s4 1983009808
  %v1971 = vunpack.c.0.s8 %v1970
  %v1972 = vlaneseq
  %v1973 = vshrl.u32 %v1972, 7
  %v1974 = vsub.s32 %v1971, %v1973
  %v1975 = vrot.slane %v1961, %v1974
  %v1976 = vcombine.low %v1920, %v1936
  %v1977 = vcombine.high %v1920, %v1936
  %v1979 = vunpack.c.l.s4 1934713408
  %v1980 = vunpack.c.0.s8 %v1979
  %v1981 = vlaneseq
  %v1982 = vshrl.u32 %v1981, 7
  %v1983 = vsub.s32 %v1980, %v1982
  %v1984 = vrot.slane %v1976, %v1983
  %v1986 = vunpack.c.l.s4 1934713408
  %v1987 = vunpack.c.0.s8 %v1986
  %v1988 = vlaneseq
  %v1989 = vshrl.u32 %v1988, 7
  %v1990 = vsub.s32 %v1987, %v1989
  %v1991 = vrot.slane %v1977, %v1990
  %v1992 = vcombine.low %v1927, %v1943
  %v1993 = vcombine.high %v1927, %v1943
  %v1995 = vunpack.c.l.s4 1934713408
  %v1996 = vunpack.c.0.s8 %v1995
  %v1997 = vlaneseq
  %v1998 = vshrl.u32 %v1997, 7
  %v1999 = vsub.s32 %v1996, %v1998
  %v2000 = vrot.slane %v1992, %v1999
  %v2002 = vunpack.c.l.s4 1934713408
  %v2003 = vunpack.c.0.s8 %v2002
  %v2004 = vlaneseq
  %v2005 = vshrl.u32 %v2004, 7
  %v2006 = vsub.s32 %v2003, %v2005
  %v2007 = vrot.slane %v1993, %v2006
  %v2008 = vcombine.low %v1952, %v1968
  %v2009 = vcombine.high %v1952, %v1968
  %v2011 = vunpack.c.l.s4 1934713408
  %v2012 = vunpack.c.0.s8 %v2011
  %v2013 = vlaneseq
  %v2014 = vshrl.u32 %v2013, 7
  %v2015 = vsub.s32 %v2012, %v2014
  %v2016 = vrot.slane %v2008, %v2015
  %v2018 = vunpack.c.l.s4 1934713408
  %v2019 = vunpack.c.0.s8 %v2018
  %v2020 = vlaneseq
  %v2021 = vshrl.u32 %v2020, 7
  %v2022 = vsub.s32 %v2019, %v2021
  %v2023 = vrot.slane %v2009, %v2022
  %v2024 = vcombine.low %v1959, %v1975
  %v2025 = vcombine.high %v1959, %v1975
  %v2027 = vunpack.c.l.s4 1934713408
  %v2028 = vunpack.c.0.s8 %v2027
  %v2029 = vlaneseq
  %v2030 = vshrl.u32 %v2029, 7
  %v2031 = vsub.s32 %v2028, %v2030
  %v2032 = vrot.slane %v2024, %v2031
  %v2034 = vunpack.c.l.s4 1934713408
  %v2035 = vunpack.c.0.s8 %v2034
  %v2036 = vlaneseq
  %v2037 = vshrl.u32 %v2036, 7
  %v2038 = vsub.s32 %v2035, %v2037
  %v2039 = vrot.slane %v2025, %v2038
  %v2040 = vcombine.low %v1984, %v2016
  %v2041 = vcombine.high %v1984, %v2016
  %v2042 = vcombine.low %v1991, %v2023
  %v2043 = vcombine.high %v1991, %v2023
  %v2044 = vcombine.low %v2000, %v2032
  %v2045 = vcombine.high %v2000, %v2032
  %v2046 = vcombine.low %v2007, %v2039
  %v2047 = vcombine.high %v2007, %v2039
  %v2048 = vcombine.low %v182, %v220
  %v2049 = vcombine.high %v182, %v220
  %v2051 = vunpack.c.l.s4 1983009808
  %v2052 = vunpack.c.0.s8 %v2051
  %v2053 = vlaneseq
  %v2054 = vshrl.u32 %v2053, 7
  %v2055 = vsub.s32 %v2052, %v2054
  %v2056 = vrot.slane %v2048, %v2055
  %v2058 = vunpack.c.l.s4 1983009808
  %v2059 = vunpack.c.0.s8 %v2058
  %v2060 = vlaneseq
  %v2061 = vshrl.u32 %v2060, 7
  %v2062 = vsub.s32 %v2059, %v2061
  %v2063 = vrot.slane %v2049, %v2062
  %v2064 = vcombine.low %v201, %v239
  %v2065 = vcombine.high %v201, %v239
  %v2067 = vunpack.c.l.s4 1983009808
  %v2068 = vunpack.c.0.s8 %v2067
  %v2069 = vlaneseq
  %v2070 = vshrl.u32 %v2069, 7
  %v2071 = vsub.s32 %v2068, %v2070
  %v2072 = vrot.slane %v2064, %v2071
  %v2074 = vunpack.c.l.s4 1983009808
  %v2075 = vunpack.c.0.s8 %v2074
  %v2076 = vlaneseq
  %v2077 = vshrl.u32 %v2076, 7
  %v2078 = vsub.s32 %v2075, %v2077
  %v2079 = vrot.slane %v2065, %v2078
  %v2080 = vcombine.low %v258, %v296
  %v2081 = vcombine.high %v258, %v296
  %v2083 = vunpack.c.l.s4 1983009808
  %v2084 = vunpack.c.0.s8 %v2083
  %v2085 = vlaneseq
  %v2086 = vshrl.u32 %v2085, 7
  %v2087 = vsub.s32 %v2084, %v2086
  %v2088 = vrot.slane %v2080, %v2087
  %v2090 = vunpack.c.l.s4 1983009808
  %v2091 = vunpack.c.0.s8 %v2090
  %v2092 = vlaneseq
  %v2093 = vshrl.u32 %v2092, 7
  %v2094 = vsub.s32 %v2091, %v2093
  %v2095 = vrot.slane %v2081, %v2094
  %v2096 = vcombine.low %v277, %v315
  %v2097 = vcombine.high %v277, %v315
  %v2099 = vunpack.c.l.s4 1983009808
  %v2100 = vunpack.c.0.s8 %v2099
  %v2101 = vlaneseq
  %v2102 = vshrl.u32 %v2101, 7
  %v2103 = vsub.s32 %v2100, %v2102
  %v2104 = vrot.slane %v2096, %v2103
  %v2106 = vunpack.c.l.s4 1983009808
  %v2107 = vunpack.c.0.s8 %v2106
  %v2108 = vlaneseq
  %v2109 = vshrl.u32 %v2108, 7
  %v2110 = vsub.s32 %v2107, %v2109
  %v2111 = vrot.slane %v2097, %v2110
  %v2112 = vcombine.low %v2056, %v2072
  %v2113 = vcombine.high %v2056, %v2072
  %v2115 = vunpack.c.l.s4 1934713408
  %v2116 = vunpack.c.0.s8 %v2115
  %v2117 = vlaneseq
  %v2118 = vshrl.u32 %v2117, 7
  %v2119 = vsub.s32 %v2116, %v2118
  %v2120 = vrot.slane %v2112, %v2119
  %v2122 = vunpack.c.l.s4 1934713408
  %v2123 = vunpack.c.0.s8 %v2122
  %v2124 = vlaneseq
  %v2125 = vshrl.u32 %v2124, 7
  %v2126 = vsub.s32 %v2123, %v2125
  %v2127 = vrot.slane %v2113, %v2126
  %v2128 = vcombine.low %v2063, %v2079
  %v2129 = vcombine.high %v2063, %v2079
  %v2131 = vunpack.c.l.s4 1934713408
  %v2132 = vunpack.c.0.s8 %v2131
  %v2133 = vlaneseq
  %v2134 = vshrl.u32 %v2133, 7
  %v2135 = vsub.s32 %v2132, %v2134
  %v2136 = vrot.slane %v2128, %v2135
  %v2138 = vunpack.c.l.s4 1934713408
  %v2139 = vunpack.c.0.s8 %v2138
  %v2140 = vlaneseq
  %v2141 = vshrl.u32 %v2140, 7
  %v2142 = vsub.s32 %v2139, %v2141
  %v2143 = vrot.slane %v2129, %v2142
  %v2144 = vcombine.low %v2088, %v2104
  %v2145 = vcombine.high %v2088, %v2104
  %v2147 = vunpack.c.l.s4 1934713408
  %v2148 = vunpack.c.0.s8 %v2147
  %v2149 = vlaneseq
  %v2150 = vshrl.u32 %v2149, 7
  %v2151 = vsub.s32 %v2148, %v2150
  %v2152 = vrot.slane %v2144, %v2151
  %v2154 = vunpack.c.l.s4 1934713408
  %v2155 = vunpack.c.0.s8 %v2154
  %v2156 = vlaneseq
  %v2157 = vshrl.u32 %v2156, 7
  %v2158 = vsub.s32 %v2155, %v2157
  %v2159 = vrot.slane %v2145, %v2158
  %v2160 = vcombine.low %v2095, %v2111
  %v2161 = vcombine.high %v2095, %v2111
  %v2163 = vunpack.c.l.s4 1934713408
  %v2164 = vunpack.c.0.s8 %v2163
  %v2165 = vlaneseq
  %v2166 = vshrl.u32 %v2165, 7
  %v2167 = vsub.s32 %v2164, %v2166
  %v2168 = vrot.slane %v2160, %v2167
  %v2170 = vunpack.c.l.s4 1934713408
  %v2171 = vunpack.c.0.s8 %v2170
  %v2172 = vlaneseq
  %v2173 = vshrl.u32 %v2172, 7
  %v2174 = vsub.s32 %v2171, %v2173
  %v2175 = vrot.slane %v2161, %v2174
  %v2176 = vcombine.low %v2120, %v2152
  %v2177 = vcombine.high %v2120, %v2152
  %v2178 = vcombine.low %v2127, %v2159
  %v2179 = vcombine.high %v2127, %v2159
  %v2180 = vcombine.low %v2136, %v2168
  %v2181 = vcombine.high %v2136, %v2168
  %v2182 = vcombine.low %v2143, %v2175
  %v2183 = vcombine.high %v2143, %v2175
  %v2184 = vcombine.low %v186, %v224
  %v2185 = vcombine.high %v186, %v224
  %v2187 = vunpack.c.l.s4 1983009808
  %v2188 = vunpack.c.0.s8 %v2187
  %v2189 = vlaneseq
  %v2190 = vshrl.u32 %v2189, 7
  %v2191 = vsub.s32 %v2188, %v2190
  %v2192 = vrot.slane %v2184, %v2191
  %v2194 = vunpack.c.l.s4 1983009808
  %v2195 = vunpack.c.0.s8 %v2194
  %v2196 = vlaneseq
  %v2197 = vshrl.u32 %v2196, 7
  %v2198 = vsub.s32 %v2195, %v2197
  %v2199 = vrot.slane %v2185, %v2198
  %v2200 = vcombine.low %v205, %v243
  %v2201 = vcombine.high %v205, %v243
  %v2203 = vunpack.c.l.s4 1983009808
  %v2204 = vunpack.c.0.s8 %v2203
  %v2205 = vlaneseq
  %v2206 = vshrl.u32 %v2205, 7
  %v2207 = vsub.s32 %v2204, %v2206
  %v2208 = vrot.slane %v2200, %v2207
  %v2210 = vunpack.c.l.s4 1983009808
  %v2211 = vunpack.c.0.s8 %v2210
  %v2212 = vlaneseq
  %v2213 = vshrl.u32 %v2212, 7
  %v2214 = vsub.s32 %v2211, %v2213
  %v2215 = vrot.slane %v2201, %v2214
  %v2216 = vcombine.low %v262, %v300
  %v2217 = vcombine.high %v262, %v300
  %v2219 = vunpack.c.l.s4 1983009808
  %v2220 = vunpack.c.0.s8 %v2219
  %v2221 = vlaneseq
  %v2222 = vshrl.u32 %v2221, 7
  %v2223 = vsub.s32 %v2220, %v2222
  %v2224 = vrot.slane %v2216, %v2223
  %v2226 = vunpack.c.l.s4 1983009808
  %v2227 = vunpack.c.0.s8 %v2226
  %v2228 = vlaneseq
  %v2229 = vshrl.u32 %v2228, 7
  %v2230 = vsub.s32 %v2227, %v2229
  %v2231 = vrot.slane %v2217, %v2230
  %v2232 = vcombine.low %v281, %v319
  %v2233 = vcombine.high %v281, %v319
  %v2235 = vunpack.c.l.s4 1983009808
  %v2236 = vunpack.c.0.s8 %v2235
  %v2237 = vlaneseq
  %v2238 = vshrl.u32 %v2237, 7
  %v2239 = vsub.s32 %v2236, %v2238
  %v2240 = vrot.slane %v2232, %v2239
  %v2242 = vunpack.c.l.s4 1983009808
  %v2243 = vunpack.c.0.s8 %v2242
  %v2244 = vlaneseq
  %v2245 = vshrl.u32 %v2244, 7
  %v2246 = vsub.s32 %v2243, %v2245
  %v2247 = vrot.slane %v2233, %v2246
  %v2248 = vcombine.low %v2192, %v2208
  %v2249 = vcombine.high %v2192, %v2208
  %v2251 = vunpack.c.l.s4 1934713408
  %v2252 = vunpack.c.0.s8 %v2251
  %v2253 = vlaneseq
  %v2254 = vshrl.u32 %v2253, 7
  %v2255 = vsub.s32 %v2252, %v2254
  %v2256 = vrot.slane %v2248, %v2255
  %v2258 = vunpack.c.l.s4 1934713408
  %v2259 = vunpack.c.0.s8 %v2258
  %v2260 = vlaneseq
  %v2261 = vshrl.u32 %v2260, 7
  %v2262 = vsub.s32 %v2259, %v2261
  %v2263 = vrot.slane %v2249, %v2262
  %v2264 = vcombine.low %v2199, %v2215
  %v2265 = vcombine.high %v2199, %v2215
  %v2267 = vunpack.c.l.s4 1934713408
  %v2268 = vunpack.c.0.s8 %v2267
  %v2269 = vlaneseq
  %v2270 = vshrl.u32 %v2269, 7
  %v2271 = vsub.s32 %v2268, %v2270
  %v2272 = vrot.slane %v2264, %v2271
  %v2274 = vunpack.c.l.s4 1934713408
  %v2275 = vunpack.c.0.s8 %v2274
  %v2276 = vlaneseq
  %v2277 = vshrl.u32 %v2276, 7
  %v2278 = vsub.s32 %v2275, %v2277
  %v2279 = vrot.slane %v2265, %v2278
  %v2280 = vcombine.low %v2224, %v2240
  %v2281 = vcombine.high %v2224, %v2240
  %v2283 = vunpack.c.l.s4 1934713408
  %v2284 = vunpack.c.0.s8 %v2283
  %v2285 = vlaneseq
  %v2286 = vshrl.u32 %v2285, 7
  %v2287 = vsub.s32 %v2284, %v2286
  %v2288 = vrot.slane %v2280, %v2287
  %v2290 = vunpack.c.l.s4 1934713408
  %v2291 = vunpack.c.0.s8 %v2290
  %v2292 = vlaneseq
  %v2293 = vshrl.u32 %v2292, 7
  %v2294 = vsub.s32 %v2291, %v2293
  %v2295 = vrot.slane %v2281, %v2294
  %v2296 = vcombine.low %v2231, %v2247
  %v2297 = vcombine.high %v2231, %v2247
  %v2299 = vunpack.c.l.s4 1934713408
  %v2300 = vunpack.c.0.s8 %v2299
  %v2301 = vlaneseq
  %v2302 = vshrl.u32 %v2301, 7
  %v2303 = vsub.s32 %v2300, %v2302
  %v2304 = vrot.slane %v2296, %v2303
  %v2306 = vunpack.c.l.s4 1934713408
  %v2307 = vunpack.c.0.s8 %v2306
  %v2308 = vlaneseq
  %v2309 = vshrl.u32 %v2308, 7
  %v2310 = vsub.s32 %v2307, %v2309
  %v2311 = vrot.slane %v2297, %v2310
  %v2312 = vcombine.low %v2256, %v2288
  %v2313 = vcombine.high %v2256, %v2288
  %v2314 = vcombine.low %v2263, %v2295
  %v2315 = vcombine.high %v2263, %v2295
  %v2316 = vcombine.low %v2272, %v2304
  %v2317 = vcombine.high %v2272, %v2304
  %v2318 = vcombine.low %v2279, %v2311
  %v2319 = vcombine.high %v2279, %v2311
  %v2320 = vcombine.low %v326, %v364
  %v2321 = vcombine.high %v326, %v364
  %v2323 = vunpack.c.l.s4 1983009808
  %v2324 = vunpack.c.0.s8 %v2323
  %v2325 = vlaneseq
  %v2326 = vshrl.u32 %v2325, 7
  %v2327 = vsub.s32 %v2324, %v2326
  %v2328 = vrot.slane %v2320, %v2327
  %v2330 = vunpack.c.l.s4 1983009808
  %v2331 = vunpack.c.0.s8 %v2330
  %v2332 = vlaneseq
  %v2333 = vshrl.u32 %v2332, 7
  %v2334 = vsub.s32 %v2331, %v2333
  %v2335 = vrot.slane %v2321, %v2334
  %v2336 = vcombine.low %v345, %v383
  %v2337 = vcombine.high %v345, %v383
  %v2339 = vunpack.c.l.s4 1983009808
  %v2340 = vunpack.c.0.s8 %v2339
  %v2341 = vlaneseq
  %v2342 = vshrl.u32 %v2341, 7
  %v2343 = vsub.s32 %v2340, %v2342
  %v2344 = vrot.slane %v2336, %v2343
  %v2346 = vunpack.c.l.s4 1983009808
  %v2347 = vunpack.c.0.s8 %v2346
  %v2348 = vlaneseq
  %v2349 = vshrl.u32 %v2348, 7
  %v2350 = vsub.s32 %v2347, %v2349
  %v2351 = vrot.slane %v2337, %v2350
  %v2352 = vcombine.low %v402, %v440
  %v2353 = vcombine.high %v402, %v440
  %v2355 = vunpack.c.l.s4 1983009808
  %v2356 = vunpack.c.0.s8 %v2355
  %v2357 = vlaneseq
  %v2358 = vshrl.u32 %v2357, 7
  %v2359 = vsub.s32 %v2356, %v2358
  %v2360 = vrot.slane %v2352, %v2359
  %v2362 = vunpack.c.l.s4 1983009808
  %v2363 = vunpack.c.0.s8 %v2362
  %v2364 = vlaneseq
  %v2365 = vshrl.u32 %v2364, 7
  %v2366 = vsub.s32 %v2363, %v2365
  %v2367 = vrot.slane %v2353, %v2366
  %v2368 = vcombine.low %v421, %v459
  %v2369 = vcombine.high %v421, %v459
  %v2371 = vunpack.c.l.s4 1983009808
  %v2372 = vunpack.c.0.s8 %v2371
  %v2373 = vlaneseq
  %v2374 = vshrl.u32 %v2373, 7
  %v2375 = vsub.s32 %v2372, %v2374
  %v2376 = vrot.slane %v2368, %v2375
  %v2378 = vunpack.c.l.s4 1983009808
  %v2379 = vunpack.c.0.s8 %v2378
  %v2380 = vlaneseq
  %v2381 = vshrl.u32 %v2380, 7
  %v2382 = vsub.s32 %v2379, %v2381
  %v2383 = vrot.slane %v2369, %v2382
  %v2384 = vcombine.low %v2328, %v2344
  %v2385 = vcombine.high %v2328, %v2344
  %v2387 = vunpack.c.l.s4 1934713408
  %v2388 = vunpack.c.0.s8 %v2387
  %v2389 = vlaneseq
  %v2390 = vshrl.u32 %v2389, 7
  %v2391 = vsub.s32 %v2388, %v2390
  %v2392 = vrot.slane %v2384, %v2391
  %v2394 = vunpack.c.l.s4 1934713408
  %v2395 = vunpack.c.0.s8 %v2394
  %v2396 = vlaneseq
  %v2397 = vshrl.u32 %v2396, 7
  %v2398 = vsub.s32 %v2395, %v2397
  %v2399 = vrot.slane %v2385, %v2398
  %v2400 = vcombine.low %v2335, %v2351
  %v2401 = vcombine.high %v2335, %v2351
  %v2403 = vunpack.c.l.s4 1934713408
  %v2404 = vunpack.c.0.s8 %v2403
  %v2405 = vlaneseq
  %v2406 = vshrl.u32 %v2405, 7
  %v2407 = vsub.s32 %v2404, %v2406
  %v2408 = vrot.slane %v2400, %v2407
  %v2410 = vunpack.c.l.s4 1934713408
  %v2411 = vunpack.c.0.s8 %v2410
  %v2412 = vlaneseq
  %v2413 = vshrl.u32 %v2412, 7
  %v2414 = vsub.s32 %v2411, %v2413
  %v2415 = vrot.slane %v2401, %v2414
  %v2416 = vcombine.low %v2360, %v2376
  %v2417 = vcombine.high %v2360, %v2376
  %v2419 = vunpack.c.l.s4 1934713408
  %v2420 = vunpack.c.0.s8 %v2419
  %v2421 = vlaneseq
  %v2422 = vshrl.u32 %v2421, 7
  %v2423 = vsub.s32 %v2420, %v2422
  %v2424 = vrot.slane %v2416, %v2423
  %v2426 = vunpack.c.l.s4 1934713408
  %v2427 = vunpack.c.0.s8 %v2426
  %v2428 = vlaneseq
  %v2429 = vshrl.u32 %v2428, 7
  %v2430 = vsub.s32 %v2427, %v2429
  %v2431 = vrot.slane %v2417, %v2430
  %v2432 = vcombine.low %v2367, %v2383
  %v2433 = vcombine.high %v2367, %v2383
  %v2435 = vunpack.c.l.s4 1934713408
  %v2436 = vunpack.c.0.s8 %v2435
  %v2437 = vlaneseq
  %v2438 = vshrl.u32 %v2437, 7
  %v2439 = vsub.s32 %v2436, %v2438
  %v2440 = vrot.slane %v2432, %v2439
  %v2442 = vunpack.c.l.s4 1934713408
  %v2443 = vunpack.c.0.s8 %v2442
  %v2444 = vlaneseq
  %v2445 = vshrl.u32 %v2444, 7
  %v2446 = vsub.s32 %v2443, %v2445
  %v2447 = vrot.slane %v2433, %v2446
  %v2448 = vcombine.low %v2392, %v2424
  %v2449 = vcombine.high %v2392, %v2424
  %v2450 = vcombine.low %v2399, %v2431
  %v2451 = vcombine.high %v2399, %v2431
  %v2452 = vcombine.low %v2408, %v2440
  %v2453 = vcombine.high %v2408, %v2440
  %v2454 = vcombine.low %v2415, %v2447
  %v2455 = vcombine.high %v2415, %v2447
  %v2456 = vcombine.low %v330, %v368
  %v2457 = vcombine.high %v330, %v368
  %v2459 = vunpack.c.l.s4 1983009808
  %v2460 = vunpack.c.0.s8 %v2459
  %v2461 = vlaneseq
  %v2462 = vshrl.u32 %v2461, 7
  %v2463 = vsub.s32 %v2460, %v2462
  %v2464 = vrot.slane %v2456, %v2463
  %v2466 = vunpack.c.l.s4 1983009808
  %v2467 = vunpack.c.0.s8 %v2466
  %v2468 = vlaneseq
  %v2469 = vshrl.u32 %v2468, 7
  %v2470 = vsub.s32 %v2467, %v2469
  %v2471 = vrot.slane %v2457, %v2470
  %v2472 = vcombine.low %v349, %v387
  %v2473 = vcombine.high %v349, %v387
  %v2475 = vunpack.c.l.s4 1983009808
  %v2476 = vunpack.c.0.s8 %v2475
  %v2477 = vlaneseq
  %v2478 = vshrl.u32 %v2477, 7
  %v2479 = vsub.s32 %v2476, %v2478
  %v2480 = vrot.slane %v2472, %v2479
  %v2482 = vunpack.c.l.s4 1983009808
  %v2483 = vunpack.c.0.s8 %v2482
  %v2484 = vlaneseq
  %v2485 = vshrl.u32 %v2484, 7
  %v2486 = vsub.s32 %v2483, %v2485
  %v2487 = vrot.slane %v2473, %v2486
  %v2488 = vcombine.low %v406, %v444
  %v2489 = vcombine.high %v406, %v444
  %v2491 = vunpack.c.l.s4 1983009808
  %v2492 = vunpack.c.0.s8 %v2491
  %v2493 = vlaneseq
  %v2494 = vshrl.u32 %v2493, 7
  %v2495 = vsub.s32 %v2492, %v2494
  %v2496 = vrot.slane %v2488, %v2495
  %v2498 = vunpack.c.l.s4 1983009808
  %v2499 = vunpack.c.0.s8 %v2498
  %v2500 = vlaneseq
  %v2501 = vshrl.u32 %v2500, 7
  %v2502 = vsub.s32 %v2499, %v2501
  %v2503 = vrot.slane %v2489, %v2502
  %v2504 = vcombine.low %v425, %v463
  %v2505 = vcombine.high %v425, %v463
  %v2507 = vunpack.c.l.s4 1983009808
  %v2508 = vunpack.c.0.s8 %v2507
  %v2509 = vlaneseq
  %v2510 = vshrl.u32 %v2509, 7
  %v2511 = vsub.s32 %v2508, %v2510
  %v2512 = vrot.slane %v2504, %v2511
  %v2514 = vunpack.c.l.s4 1983009808
  %v2515 = vunpack.c.0.s8 %v2514
  %v2516 = vlaneseq
  %v2517 = vshrl.u32 %v2516, 7
  %v2518 = vsub.s32 %v2515, %v2517
  %v2519 = vrot.slane %v2505, %v2518
  %v2520 = vcombine.low %v2464, %v2480
  %v2521 = vcombine.high %v2464, %v2480
  %v2523 = vunpack.c.l.s4 1934713408
  %v2524 = vunpack.c.0.s8 %v2523
  %v2525 = vlaneseq
  %v2526 = vshrl.u32 %v2525, 7
  %v2527 = vsub.s32 %v2524, %v2526
  %v2528 = vrot.slane %v2520, %v2527
  %v2530 = vunpack.c.l.s4 1934713408
  %v2531 = vunpack.c.0.s8 %v2530
  %v2532 = vlaneseq
  %v2533 = vshrl.u32 %v2532, 7
  %v2534 = vsub.s32 %v2531, %v2533
  %v2535 = vrot.slane %v2521, %v2534
  %v2536 = vcombine.low %v2471, %v2487
  %v2537 = vcombine.high %v2471, %v2487
  %v2539 = vunpack.c.l.s4 1934713408
  %v2540 = vunpack.c.0.s8 %v2539
  %v2541 = vlaneseq
  %v2542 = vshrl.u32 %v2541, 7
  %v2543 = vsub.s32 %v2540, %v2542
  %v2544 = vrot.slane %v2536, %v2543
  %v2546 = vunpack.c.l.s4 1934713408
  %v2547 = vunpack.c.0.s8 %v2546
  %v2548 = vlaneseq
  %v2549 = vshrl.u32 %v2548, 7
  %v2550 = vsub.s32 %v2547, %v2549
  %v2551 = vrot.slane %v2537, %v2550
  %v2552 = vcombine.low %v2496, %v2512
  %v2553 = vcombine.high %v2496, %v2512
  %v2555 = vunpack.c.l.s4 1934713408
  %v2556 = vunpack.c.0.s8 %v2555
  %v2557 = vlaneseq
  %v2558 = vshrl.u32 %v2557, 7
  %v2559 = vsub.s32 %v2556, %v2558
  %v2560 = vrot.slane %v2552, %v2559
  %v2562 = vunpack.c.l.s4 1934713408
  %v2563 = vunpack.c.0.s8 %v2562
  %v2564 = vlaneseq
  %v2565 = vshrl.u32 %v2564, 7
  %v2566 = vsub.s32 %v2563, %v2565
  %v2567 = vrot.slane %v2553, %v2566
  %v2568 = vcombine.low %v2503, %v2519
  %v2569 = vcombine.high %v2503, %v2519
  %v2571 = vunpack.c.l.s4 1934713408
  %v2572 = vunpack.c.0.s8 %v2571
  %v2573 = vlaneseq
  %v2574 = vshrl.u32 %v2573, 7
  %v2575 = vsub.s32 %v2572, %v2574
  %v2576 = vrot.slane %v2568, %v2575
  %v2578 = vunpack.c.l.s4 1934713408
  %v2579 = vunpack.c.0.s8 %v2578
  %v2580 = vlaneseq
  %v2581 = vshrl.u32 %v2580, 7
  %v2582 = vsub.s32 %v2579, %v2581
  %v2583 = vrot.slane %v2569, %v2582
  %v2584 = vcombine.low %v2528, %v2560
  %v2585 = vcombine.high %v2528, %v2560
  %v2586 = vcombine.low %v2535, %v2567
  %v2587 = vcombine.high %v2535, %v2567
  %v2588 = vcombine.low %v2544, %v2576
  %v2589 = vcombine.high %v2544, %v2576
  %v2590 = vcombine.low %v2551, %v2583
  %v2591 = vcombine.high %v2551, %v2583
  %v2592 = vcombine.low %v334, %v372
  %v2593 = vcombine.high %v334, %v372
  %v2595 = vunpack.c.l.s4 1983009808
  %v2596 = vunpack.c.0.s8 %v2595
  %v2597 = vlaneseq
  %v2598 = vshrl.u32 %v2597, 7
  %v2599 = vsub.s32 %v2596, %v2598
  %v2600 = vrot.slane %v2592, %v2599
  %v2602 = vunpack.c.l.s4 1983009808
  %v2603 = vunpack.c.0.s8 %v2602
  %v2604 = vlaneseq
  %v2605 = vshrl.u32 %v2604, 7
  %v2606 = vsub.s32 %v2603, %v2605
  %v2607 = vrot.slane %v2593, %v2606
  %v2608 = vcombine.low %v353, %v391
  %v2609 = vcombine.high %v353, %v391
  %v2611 = vunpack.c.l.s4 1983009808
  %v2612 = vunpack.c.0.s8 %v2611
  %v2613 = vlaneseq
  %v2614 = vshrl.u32 %v2613, 7
  %v2615 = vsub.s32 %v2612, %v2614
  %v2616 = vrot.slane %v2608, %v2615
  %v2618 = vunpack.c.l.s4 1983009808
  %v2619 = vunpack.c.0.s8 %v2618
  %v2620 = vlaneseq
  %v2621 = vshrl.u32 %v2620, 7
  %v2622 = vsub.s32 %v2619, %v2621
  %v2623 = vrot.slane %v2609, %v2622
  %v2624 = vcombine.low %v410, %v448
  %v2625 = vcombine.high %v410, %v448
  %v2627 = vunpack.c.l.s4 1983009808
  %v2628 = vunpack.c.0.s8 %v2627
  %v2629 = vlaneseq
  %v2630 = vshrl.u32 %v2629, 7
  %v2631 = vsub.s32 %v2628, %v2630
  %v2632 = vrot.slane %v2624, %v2631
  %v2634 = vunpack.c.l.s4 1983009808
  %v2635 = vunpack.c.0.s8 %v2634
  %v2636 = vlaneseq
  %v2637 = vshrl.u32 %v2636, 7
  %v2638 = vsub.s32 %v2635, %v2637
  %v2639 = vrot.slane %v2625, %v2638
  %v2640 = vcombine.low %v429, %v467
  %v2641 = vcombine.high %v429, %v467
  %v2643 = vunpack.c.l.s4 1983009808
  %v2644 = vunpack.c.0.s8 %v2643
  %v2645 = vlaneseq
  %v2646 = vshrl.u32 %v2645, 7
  %v2647 = vsub.s32 %v2644, %v2646
  %v2648 = vrot.slane %v2640, %v2647
  %v2650 = vunpack.c.l.s4 1983009808
  %v2651 = vunpack.c.0.s8 %v2650
  %v2652 = vlaneseq
  %v2653 = vshrl.u32 %v2652, 7
  %v2654 = vsub.s32 %v2651, %v2653
  %v2655 = vrot.slane %v2641, %v2654
  %v2656 = vcombine.low %v2600, %v2616
  %v2657 = vcombine.high %v2600, %v2616
  %v2659 = vunpack.c.l.s4 1934713408
  %v2660 = vunpack.c.0.s8 %v2659
  %v2661 = vlaneseq
  %v2662 = vshrl.u32 %v2661, 7
  %v2663 = vsub.s32 %v2660, %v2662
  %v2664 = vrot.slane %v2656, %v2663
  %v2666 = vunpack.c.l.s4 1934713408
  %v2667 = vunpack.c.0.s8 %v2666
  %v2668 = vlaneseq
  %v2669 = vshrl.u32 %v2668, 7
  %v2670 = vsub.s32 %v2667, %v2669
  %v2671 = vrot.slane %v2657, %v2670
  %v2672 = vcombine.low %v2607, %v2623
  %v2673 = vcombine.high %v2607, %v2623
  %v2675 = vunpack.c.l.s4 1934713408
  %v2676 = vunpack.c.0.s8 %v2675
  %v2677 = vlaneseq
  %v2678 = vshrl.u32 %v2677, 7
  %v2679 = vsub.s32 %v2676, %v2678
  %v2680 = vrot.slane %v2672, %v2679
  %v2682 = vunpack.c.l.s4 1934713408
  %v2683 = vunpack.c.0.s8 %v2682
  %v2684 = vlaneseq
  %v2685 = vshrl.u32 %v2684, 7
  %v2686 = vsub.s32 %v2683, %v2685
  %v2687 = vrot.slane %v2673, %v2686
  %v2688 = vcombine.low %v2632, %v2648
  %v2689 = vcombine.high %v2632, %v2648
  %v2691 = vunpack.c.l.s4 1934713408
  %v2692 = vunpack.c.0.s8 %v2691
  %v2693 = vlaneseq
  %v2694 = vshrl.u32 %v2693, 7
  %v2695 = vsub.s32 %v2692, %v2694
  %v2696 = vrot.slane %v2688, %v2695
  %v2698 = vunpack.c.l.s4 1934713408
  %v2699 = vunpack.c.0.s8 %v2698
  %v2700 = vlaneseq
  %v2701 = vshrl.u32 %v2700, 7
  %v2702 = vsub.s32 %v2699, %v2701
  %v2703 = vrot.slane %v2689, %v2702
  %v2704 = vcombine.low %v2639, %v2655
  %v2705 = vcombine.high %v2639, %v2655
  %v2707 = vunpack.c.l.s4 1934713408
  %v2708 = vunpack.c.0.s8 %v2707
  %v2709 = vlaneseq
  %v2710 = vshrl.u32 %v2709, 7
  %v2711 = vsub.s32 %v2708, %v2710
  %v2712 = vrot.slane %v2704, %v2711
  %v2714 = vunpack.c.l.s4 1934713408
  %v2715 = vunpack.c.0.s8 %v2714
  %v2716 = vlaneseq
  %v2717 = vshrl.u32 %v2716, 7
  %v2718 = vsub.s32 %v2715, %v2717
  %v2719 = vrot.slane %v2705, %v2718
  %v2720 = vcombine.low %v2664, %v2696
  %v2721 = vcombine.high %v2664, %v2696
  %v2722 = vcombine.low %v2671, %v2703
  %v2723 = vcombine.high %v2671, %v2703
  %v2724 = vcombine.low %v2680, %v2712
  %v2725 = vcombine.high %v2680, %v2712
  %v2726 = vcombine.low %v2687, %v2719
  %v2727 = vcombine.high %v2687, %v2719
  %v2728 = vcombine.low %v338, %v376
  %v2729 = vcombine.high %v338, %v376
  %v2731 = vunpack.c.l.s4 1983009808
  %v2732 = vunpack.c.0.s8 %v2731
  %v2733 = vlaneseq
  %v2734 = vshrl.u32 %v2733, 7
  %v2735 = vsub.s32 %v2732, %v2734
  %v2736 = vrot.slane %v2728, %v2735
  %v2738 = vunpack.c.l.s4 1983009808
  %v2739 = vunpack.c.0.s8 %v2738
  %v2740 = vlaneseq
  %v2741 = vshrl.u32 %v2740, 7
  %v2742 = vsub.s32 %v2739, %v2741
  %v2743 = vrot.slane %v2729, %v2742
  %v2744 = vcombine.low %v357, %v395
  %v2745 = vcombine.high %v357, %v395
  %v2747 = vunpack.c.l.s4 1983009808
  %v2748 = vunpack.c.0.s8 %v2747
  %v2749 = vlaneseq
  %v2750 = vshrl.u32 %v2749, 7
  %v2751 = vsub.s32 %v2748, %v2750
  %v2752 = vrot.slane %v2744, %v2751
  %v2754 = vunpack.c.l.s4 1983009808
  %v2755 = vunpack.c.0.s8 %v2754
  %v2756 = vlaneseq
  %v2757 = vshrl.u32 %v2756, 7
  %v2758 = vsub.s32 %v2755, %v2757
  %v2759 = vrot.slane %v2745, %v2758
  %v2760 = vcombine.low %v414, %v452
  %v2761 = vcombine.high %v414, %v452
  %v2763 = vunpack.c.l.s4 1983009808
  %v2764 = vunpack.c.0.s8 %v2763
  %v2765 = vlaneseq
  %v2766 = vshrl.u32 %v2765, 7
  %v2767 = vsub.s32 %v2764, %v2766
  %v2768 = vrot.slane %v2760, %v2767
  %v2770 = vunpack.c.l.s4 1983009808
  %v2771 = vunpack.c.0.s8 %v2770
  %v2772 = vlaneseq
  %v2773 = vshrl.u32 %v2772, 7
  %v2774 = vsub.s32 %v2771, %v2773
  %v2775 = vrot.slane %v2761, %v2774
  %v2776 = vcombine.low %v433, %v471
  %v2777 = vcombine.high %v433, %v471
  %v2779 = vunpack.c.l.s4 1983009808
  %v2780 = vunpack.c.0.s8 %v2779
  %v2781 = vlaneseq
  %v2782 = vshrl.u32 %v2781, 7
  %v2783 = vsub.s32 %v2780, %v2782
  %v2784 = vrot.slane %v2776, %v2783
  %v2786 = vunpack.c.l.s4 1983009808
  %v2787 = vunpack.c.0.s8 %v2786
  %v2788 = vlaneseq
  %v2789 = vshrl.u32 %v2788, 7
  %v2790 = vsub.s32 %v2787, %v2789
  %v2791 = vrot.slane %v2777, %v2790
  %v2792 = vcombine.low %v2736, %v2752
  %v2793 = vcombine.high %v2736, %v2752
  %v2795 = vunpack.c.l.s4 1934713408
  %v2796 = vunpack.c.0.s8 %v2795
  %v2797 = vlaneseq
  %v2798 = vshrl.u32 %v2797, 7
  %v2799 = vsub.s32 %v2796, %v2798
  %v2800 = vrot.slane %v2792, %v2799
  %v2802 = vunpack.c.l.s4 1934713408
  %v2803 = vunpack.c.0.s8 %v2802
  %v2804 = vlaneseq
  %v2805 = vshrl.u32 %v2804, 7
  %v2806 = vsub.s32 %v2803, %v2805
  %v2807 = vrot.slane %v2793, %v2806
  %v2808 = vcombine.low %v2743, %v2759
  %v2809 = vcombine.high %v2743, %v2759
  %v2811 = vunpack.c.l.s4 1934713408
  %v2812 = vunpack.c.0.s8 %v2811
  %v2813 = vlaneseq
  %v2814 = vshrl.u32 %v2813, 7
  %v2815 = vsub.s32 %v2812, %v2814
  %v2816 = vrot.slane %v2808, %v2815
  %v2818 = vunpack.c.l.s4 1934713408
  %v2819 = vunpack.c.0.s8 %v2818
  %v2820 = vlaneseq
  %v2821 = vshrl.u32 %v2820, 7
  %v2822 = vsub.s32 %v2819, %v2821
  %v2823 = vrot.slane %v2809, %v2822
  %v2824 = vcombine.low %v2768, %v2784
  %v2825 = vcombine.high %v2768, %v2784
  %v2827 = vunpack.c.l.s4 1934713408
  %v2828 = vunpack.c.0.s8 %v2827
  %v2829 = vlaneseq
  %v2830 = vshrl.u32 %v2829, 7
  %v2831 = vsub.s32 %v2828, %v2830
  %v2832 = vrot.slane %v2824, %v2831
  %v2834 = vunpack.c.l.s4 1934713408
  %v2835 = vunpack.c.0.s8 %v2834
  %v2836 = vlaneseq
  %v2837 = vshrl.u32 %v2836, 7
  %v2838 = vsub.s32 %v2835, %v2837
  %v2839 = vrot.slane %v2825, %v2838
  %v2840 = vcombine.low %v2775, %v2791
  %v2841 = vcombine.high %v2775, %v2791
  %v2843 = vunpack.c.l.s4 1934713408
  %v2844 = vunpack.c.0.s8 %v2843
  %v2845 = vlaneseq
  %v2846 = vshrl.u32 %v2845, 7
  %v2847 = vsub.s32 %v2844, %v2846
  %v2848 = vrot.slane %v2840, %v2847
  %v2850 = vunpack.c.l.s4 1934713408
  %v2851 = vunpack.c.0.s8 %v2850
  %v2852 = vlaneseq
  %v2853 = vshrl.u32 %v2852, 7
  %v2854 = vsub.s32 %v2851, %v2853
  %v2855 = vrot.slane %v2841, %v2854
  %v2856 = vcombine.low %v2800, %v2832
  %v2857 = vcombine.high %v2800, %v2832
  %v2858 = vcombine.low %v2807, %v2839
  %v2859 = vcombine.high %v2807, %v2839
  %v2860 = vcombine.low %v2816, %v2848
  %v2861 = vcombine.high %v2816, %v2848
  %v2862 = vcombine.low %v2823, %v2855
  %v2863 = vcombine.high %v2823, %v2855
  %v2864 = vcombine.low %v478, %v516
  %v2865 = vcombine.high %v478, %v516
  %v2867 = vunpack.c.l.s4 1983009808
  %v2868 = vunpack.c.0.s8 %v2867
  %v2869 = vlaneseq
  %v2870 = vshrl.u32 %v2869, 7
  %v2871 = vsub.s32 %v2868, %v2870
  %v2872 = vrot.slane %v2864, %v2871
  %v2874 = vunpack.c.l.s4 1983009808
  %v2875 = vunpack.c.0.s8 %v2874
  %v2876 = vlaneseq
  %v2877 = vshrl.u32 %v2876, 7
  %v2878 = vsub.s32 %v2875, %v2877
  %v2879 = vrot.slane %v2865, %v2878
  %v2880 = vcombine.low %v497, %v535
  %v2881 = vcombine.high %v497, %v535
  %v2883 = vunpack.c.l.s4 1983009808
  %v2884 = vunpack.c.0.s8 %v2883
  %v2885 = vlaneseq
  %v2886 = vshrl.u32 %v2885, 7
  %v2887 = vsub.s32 %v2884, %v2886
  %v2888 = vrot.slane %v2880, %v2887
  %v2890 = vunpack.c.l.s4 1983009808
  %v2891 = vunpack.c.0.s8 %v2890
  %v2892 = vlaneseq
  %v2893 = vshrl.u32 %v2892, 7
  %v2894 = vsub.s32 %v2891, %v2893
  %v2895 = vrot.slane %v2881, %v2894
  %v2896 = vcombine.low %v554, %v592
  %v2897 = vcombine.high %v554, %v592
  %v2899 = vunpack.c.l.s4 1983009808
  %v2900 = vunpack.c.0.s8 %v2899
  %v2901 = vlaneseq
  %v2902 = vshrl.u32 %v2901, 7
  %v2903 = vsub.s32 %v2900, %v2902
  %v2904 = vrot.slane %v2896, %v2903
  %v2906 = vunpack.c.l.s4 1983009808
  %v2907 = vunpack.c.0.s8 %v2906
  %v2908 = vlaneseq
  %v2909 = vshrl.u32 %v2908, 7
  %v2910 = vsub.s32 %v2907, %v2909
  %v2911 = vrot.slane %v2897, %v2910
  %v2912 = vcombine.low %v573, %v611
  %v2913 = vcombine.high %v573, %v611
  %v2915 = vunpack.c.l.s4 1983009808
  %v2916 = vunpack.c.0.s8 %v2915
  %v2917 = vlaneseq
  %v2918 = vshrl.u32 %v2917, 7
  %v2919 = vsub.s32 %v2916, %v2918
  %v2920 = vrot.slane %v2912, %v2919
  %v2922 = vunpack.c.l.s4 1983009808
  %v2923 = vunpack.c.0.s8 %v2922
  %v2924 = vlaneseq
  %v2925 = vshrl.u32 %v2924, 7
  %v2926 = vsub.s32 %v2923, %v2925
  %v2927 = vrot.slane %v2913, %v2926
  %v2928 = vcombine.low %v2872, %v2888
  %v2929 = vcombine.high %v2872, %v2888
  %v2931 = vunpack.c.l.s4 1934713408
  %v2932 = vunpack.c.0.s8 %v2931
  %v2933 = vlaneseq
  %v2934 = vshrl.u32 %v2933, 7
  %v2935 = vsub.s32 %v2932, %v2934
  %v2936 = vrot.slane %v2928, %v2935
  %v2938 = vunpack.c.l.s4 1934713408
  %v2939 = vunpack.c.0.s8 %v2938
  %v2940 = vlaneseq
  %v2941 = vshrl.u32 %v2940, 7
  %v2942 = vsub.s32 %v2939, %v2941
  %v2943 = vrot.slane %v2929, %v2942
  %v2944 = vcombine.low %v2879, %v2895
  %v2945 = vcombine.high %v2879, %v2895
  %v2947 = vunpack.c.l.s4 1934713408
  %v2948 = vunpack.c.0.s8 %v2947
  %v2949 = vlaneseq
  %v2950 = vshrl.u32 %v2949, 7
  %v2951 = vsub.s32 %v2948, %v2950
  %v2952 = vrot.slane %v2944, %v2951
  %v2954 = vunpack.c.l.s4 1934713408
  %v2955 = vunpack.c.0.s8 %v2954
  %v2956 = vlaneseq
  %v2957 = vshrl.u32 %v2956, 7
  %v2958 = vsub.s32 %v2955, %v2957
  %v2959 = vrot.slane %v2945, %v2958
  %v2960 = vcombine.low %v2904, %v2920
  %v2961 = vcombine.high %v2904, %v2920
  %v2963 = vunpack.c.l.s4 1934713408
  %v2964 = vunpack.c.0.s8 %v2963
  %v2965 = vlaneseq
  %v2966 = vshrl.u32 %v2965, 7
  %v2967 = vsub.s32 %v2964, %v2966
  %v2968 = vrot.slane %v2960, %v2967
  %v2970 = vunpack.c.l.s4 1934713408
  %v2971 = vunpack.c.0.s8 %v2970
  %v2972 = vlaneseq
  %v2973 = vshrl.u32 %v2972, 7
  %v2974 = vsub.s32 %v2971, %v2973
  %v2975 = vrot.slane %v2961, %v2974
  %v2976 = vcombine.low %v2911, %v2927
  %v2977 = vcombine.high %v2911, %v2927
  %v2979 = vunpack.c.l.s4 1934713408
  %v2980 = vunpack.c.0.s8 %v2979
  %v2981 = vlaneseq
  %v2982 = vshrl.u32 %v2981, 7
  %v2983 = vsub.s32 %v2980, %v2982
  %v2984 = vrot.slane %v2976, %v2983
  %v2986 = vunpack.c.l.s4 1934713408
  %v2987 = vunpack.c.0.s8 %v2986
  %v2988 = vlaneseq
  %v2989 = vshrl.u32 %v2988, 7
  %v2990 = vsub.s32 %v2987, %v2989
  %v2991 = vrot.slane %v2977, %v2990
  %v2992 = vcombine.low %v2936, %v2968
  %v2993 = vcombine.high %v2936, %v2968
  %v2994 = vcombine.low %v2943, %v2975
  %v2995 = vcombine.high %v2943, %v2975
  %v2996 = vcombine.low %v2952, %v2984
  %v2997 = vcombine.high %v2952, %v2984
  %v2998 = vcombine.low %v2959, %v2991
  %v2999 = vcombine.high %v2959, %v2991
  %v3000 = vcombine.low %v482, %v520
  %v3001 = vcombine.high %v482, %v520
  %v3003 = vunpack.c.l.s4 1983009808
  %v3004 = vunpack.c.0.s8 %v3003
  %v3005 = vlaneseq
  %v3006 = vshrl.u32 %v3005, 7
  %v3007 = vsub.s32 %v3004, %v3006
  %v3008 = vrot.slane %v3000, %v3007
  %v3010 = vunpack.c.l.s4 1983009808
  %v3011 = vunpack.c.0.s8 %v3010
  %v3012 = vlaneseq
  %v3013 = vshrl.u32 %v3012, 7
  %v3014 = vsub.s32 %v3011, %v3013
  %v3015 = vrot.slane %v3001, %v3014
  %v3016 = vcombine.low %v501, %v539
  %v3017 = vcombine.high %v501, %v539
  %v3019 = vunpack.c.l.s4 1983009808
  %v3020 = vunpack.c.0.s8 %v3019
  %v3021 = vlaneseq
  %v3022 = vshrl.u32 %v3021, 7
  %v3023 = vsub.s32 %v3020, %v3022
  %v3024 = vrot.slane %v3016, %v3023
  %v3026 = vunpack.c.l.s4 1983009808
  %v3027 = vunpack.c.0.s8 %v3026
  %v3028 = vlaneseq
  %v3029 = vshrl.u32 %v3028, 7
  %v3030 = vsub.s32 %v3027, %v3029
  %v3031 = vrot.slane %v3017, %v3030
  %v3032 = vcombine.low %v558, %v596
  %v3033 = vcombine.high %v558, %v596
  %v3035 = vunpack.c.l.s4 1983009808
  %v3036 = vunpack.c.0.s8 %v3035
  %v3037 = vlaneseq
  %v3038 = vshrl.u32 %v3037, 7
  %v3039 = vsub.s32 %v3036, %v3038
  %v3040 = vrot.slane %v3032, %v3039
  %v3042 = vunpack.c.l.s4 1983009808
  %v3043 = vunpack.c.0.s8 %v3042
  %v3044 = vlaneseq
  %v3045 = vshrl.u32 %v3044, 7
  %v3046 = vsub.s32 %v3043, %v3045
  %v3047 = vrot.slane %v3033, %v3046
  %v3048 = vcombine.low %v577, %v615
  %v3049 = vcombine.high %v577, %v615
  %v3051 = vunpack.c.l.s4 1983009808
  %v3052 = vunpack.c.0.s8 %v3051
  %v3053 = vlaneseq
  %v3054 = vshrl.u32 %v3053, 7
  %v3055 = vsub.s32 %v3052, %v3054
  %v3056 = vrot.slane %v3048, %v3055
  %v3058 = vunpack.c.l.s4 1983009808
  %v3059 = vunpack.c.0.s8 %v3058
  %v3060 = vlaneseq
  %v3061 = vshrl.u32 %v3060, 7
  %v3062 = vsub.s32 %v3059, %v3061
  %v3063 = vrot.slane %v3049, %v3062
  %v3064 = vcombine.low %v3008, %v3024
  %v3065 = vcombine.high %v3008, %v3024
  %v3067 = vunpack.c.l.s4 1934713408
  %v3068 = vunpack.c.0.s8 %v3067
  %v3069 = vlaneseq
  %v3070 = vshrl.u32 %v3069, 7
  %v3071 = vsub.s32 %v3068, %v3070
  %v3072 = vrot.slane %v3064, %v3071
  %v3074 = vunpack.c.l.s4 1934713408
  %v3075 = vunpack.c.0.s8 %v3074
  %v3076 = vlaneseq
  %v3077 = vshrl.u32 %v3076, 7
  %v3078 = vsub.s32 %v3075, %v3077
  %v3079 = vrot.slane %v3065, %v3078
  %v3080 = vcombine.low %v3015, %v3031
  %v3081 = vcombine.high %v3015, %v3031
  %v3083 = vunpack.c.l.s4 1934713408
  %v3084 = vunpack.c.0.s8 %v3083
  %v3085 = vlaneseq
  %v3086 = vshrl.u32 %v3085, 7
  %v3087 = vsub.s32 %v3084, %v3086
  %v3088 = vrot.slane %v3080, %v3087
  %v3090 = vunpack.c.l.s4 1934713408
  %v3091 = vunpack.c.0.s8 %v3090
  %v3092 = vlaneseq
  %v3093 = vshrl.u32 %v3092, 7
  %v3094 = vsub.s32 %v3091, %v3093
  %v3095 = vrot.slane %v3081, %v3094
  %v3096 = vcombine.low %v3040, %v3056
  %v3097 = vcombine.high %v3040, %v3056
  %v3099 = vunpack.c.l.s4 1934713408
  %v3100 = vunpack.c.0.s8 %v3099
  %v3101 = vlaneseq
  %v3102 = vshrl.u32 %v3101, 7
  %v3103 = vsub.s32 %v3100, %v3102
  %v3104 = vrot.slane %v3096, %v3103
  %v3106 = vunpack.c.l.s4 1934713408
  %v3107 = vunpack.c.0.s8 %v3106
  %v3108 = vlaneseq
  %v3109 = vshrl.u32 %v3108, 7
  %v3110 = vsub.s32 %v3107, %v3109
  %v3111 = vrot.slane %v3097, %v3110
  %v3112 = vcombine.low %v3047, %v3063
  %v3113 = vcombine.high %v3047, %v3063
  %v3115 = vunpack.c.l.s4 1934713408
  %v3116 = vunpack.c.0.s8 %v3115
  %v3117 = vlaneseq
  %v3118 = vshrl.u32 %v3117, 7
  %v3119 = vsub.s32 %v3116, %v3118
  %v3120 = vrot.slane %v3112, %v3119
  %v3122 = vunpack.c.l.s4 1934713408
  %v3123 = vunpack.c.0.s8 %v3122
  %v3124 = vlaneseq
  %v3125 = vshrl.u32 %v3124, 7
  %v3126 = vsub.s32 %v3123, %v3125
  %v3127 = vrot.slane %v3113, %v3126
  %v3128 = vcombine.low %v3072, %v3104
  %v3129 = vcombine.high %v3072, %v3104
  %v3130 = vcombine.low %v3079, %v3111
  %v3131 = vcombine.high %v3079, %v3111
  %v3132 = vcombine.low %v3088, %v3120
  %v3133 = vcombine.high %v3088, %v3120
  %v3134 = vcombine.low %v3095, %v3127
  %v3135 = vcombine.high %v3095, %v3127
  %v3136 = vcombine.low %v486, %v524
  %v3137 = vcombine.high %v486, %v524
  %v3139 = vunpack.c.l.s4 1983009808
  %v3140 = vunpack.c.0.s8 %v3139
  %v3141 = vlaneseq
  %v3142 = vshrl.u32 %v3141, 7
  %v3143 = vsub.s32 %v3140, %v3142
  %v3144 = vrot.slane %v3136, %v3143
  %v3146 = vunpack.c.l.s4 1983009808
  %v3147 = vunpack.c.0.s8 %v3146
  %v3148 = vlaneseq
  %v3149 = vshrl.u32 %v3148, 7
  %v3150 = vsub.s32 %v3147, %v3149
  %v3151 = vrot.slane %v3137, %v3150
  %v3152 = vcombine.low %v505, %v543
  %v3153 = vcombine.high %v505, %v543
  %v3155 = vunpack.c.l.s4 1983009808
  %v3156 = vunpack.c.0.s8 %v3155
  %v3157 = vlaneseq
  %v3158 = vshrl.u32 %v3157, 7
  %v3159 = vsub.s32 %v3156, %v3158
  %v3160 = vrot.slane %v3152, %v3159
  %v3162 = vunpack.c.l.s4 1983009808
  %v3163 = vunpack.c.0.s8 %v3162
  %v3164 = vlaneseq
  %v3165 = vshrl.u32 %v3164, 7
  %v3166 = vsub.s32 %v3163, %v3165
  %v3167 = vrot.slane %v3153, %v3166
  %v3168 = vcombine.low %v562, %v600
  %v3169 = vcombine.high %v562, %v600
  %v3171 = vunpack.c.l.s4 1983009808
  %v3172 = vunpack.c.0.s8 %v3171
  %v3173 = vlaneseq
  %v3174 = vshrl.u32 %v3173, 7
  %v3175 = vsub.s32 %v3172, %v3174
  %v3176 = vrot.slane %v3168, %v3175
  %v3178 = vunpack.c.l.s4 1983009808
  %v3179 = vunpack.c.0.s8 %v3178
  %v3180 = vlaneseq
  %v3181 = vshrl.u32 %v3180, 7
  %v3182 = vsub.s32 %v3179, %v3181
  %v3183 = vrot.slane %v3169, %v3182
  %v3184 = vcombine.low %v581, %v619
  %v3185 = vcombine.high %v581, %v619
  %v3187 = vunpack.c.l.s4 1983009808
  %v3188 = vunpack.c.0.s8 %v3187
  %v3189 = vlaneseq
  %v3190 = vshrl.u32 %v3189, 7
  %v3191 = vsub.s32 %v3188, %v3190
  %v3192 = vrot.slane %v3184, %v3191
  %v3194 = vunpack.c.l.s4 1983009808
  %v3195 = vunpack.c.0.s8 %v3194
  %v3196 = vlaneseq
  %v3197 = vshrl.u32 %v3196, 7
  %v3198 = vsub.s32 %v3195, %v3197
  %v3199 = vrot.slane %v3185, %v3198
  %v3200 = vcombine.low %v3144, %v3160
  %v3201 = vcombine.high %v3144, %v3160
  %v3203 = vunpack.c.l.s4 1934713408
  %v3204 = vunpack.c.0.s8 %v3203
  %v3205 = vlaneseq
  %v3206 = vshrl.u32 %v3205, 7
  %v3207 = vsub.s32 %v3204, %v3206
  %v3208 = vrot.slane %v3200, %v3207
  %v3210 = vunpack.c.l.s4 1934713408
  %v3211 = vunpack.c.0.s8 %v3210
  %v3212 = vlaneseq
  %v3213 = vshrl.u32 %v3212, 7
  %v3214 = vsub.s32 %v3211, %v3213
  %v3215 = vrot.slane %v3201, %v3214
  %v3216 = vcombine.low %v3151, %v3167
  %v3217 = vcombine.high %v3151, %v3167
  %v3219 = vunpack.c.l.s4 1934713408
  %v3220 = vunpack.c.0.s8 %v3219
  %v3221 = vlaneseq
  %v3222 = vshrl.u32 %v3221, 7
  %v3223 = vsub.s32 %v3220, %v3222
  %v3224 = vrot.slane %v3216, %v3223
  %v3226 = vunpack.c.l.s4 1934713408
  %v3227 = vunpack.c.0.s8 %v3226
  %v3228 = vlaneseq
  %v3229 = vshrl.u32 %v3228, 7
  %v3230 = vsub.s32 %v3227, %v3229
  %v3231 = vrot.slane %v3217, %v3230
  %v3232 = vcombine.low %v3176, %v3192
  %v3233 = vcombine.high %v3176, %v3192
  %v3235 = vunpack.c.l.s4 1934713408
  %v3236 = vunpack.c.0.s8 %v3235
  %v3237 = vlaneseq
  %v3238 = vshrl.u32 %v3237, 7
  %v3239 = vsub.s32 %v3236, %v3238
  %v3240 = vrot.slane %v3232, %v3239
  %v3242 = vunpack.c.l.s4 1934713408
  %v3243 = vunpack.c.0.s8 %v3242
  %v3244 = vlaneseq
  %v3245 = vshrl.u32 %v3244, 7
  %v3246 = vsub.s32 %v3243, %v3245
  %v3247 = vrot.slane %v3233, %v3246
  %v3248 = vcombine.low %v3183, %v3199
  %v3249 = vcombine.high %v3183, %v3199
  %v3251 = vunpack.c.l.s4 1934713408
  %v3252 = vunpack.c.0.s8 %v3251
  %v3253 = vlaneseq
  %v3254 = vshrl.u32 %v3253, 7
  %v3255 = vsub.s32 %v3252, %v3254
  %v3256 = vrot.slane %v3248, %v3255
  %v3258 = vunpack.c.l.s4 1934713408
  %v3259 = vunpack.c.0.s8 %v3258
  %v3260 = vlaneseq
  %v3261 = vshrl.u32 %v3260, 7
  %v3262 = vsub.s32 %v3259, %v3261
  %v3263 = vrot.slane %v3249, %v3262
  %v3264 = vcombine.low %v3208, %v3240
  %v3265 = vcombine.high %v3208, %v3240
  %v3266 = vcombine.low %v3215, %v3247
  %v3267 = vcombine.high %v3215, %v3247
  %v3268 = vcombine.low %v3224, %v3256
  %v3269 = vcombine.high %v3224, %v3256
  %v3270 = vcombine.low %v3231, %v3263
  %v3271 = vcombine.high %v3231, %v3263
  %v3272 = vcombine.low %v490, %v528
  %v3273 = vcombine.high %v490, %v528
  %v3275 = vunpack.c.l.s4 1983009808
  %v3276 = vunpack.c.0.s8 %v3275
  %v3277 = vlaneseq
  %v3278 = vshrl.u32 %v3277, 7
  %v3279 = vsub.s32 %v3276, %v3278
  %v3280 = vrot.slane %v3272, %v3279
  %v3282 = vunpack.c.l.s4 1983009808
  %v3283 = vunpack.c.0.s8 %v3282
  %v3284 = vlaneseq
  %v3285 = vshrl.u32 %v3284, 7
  %v3286 = vsub.s32 %v3283, %v3285
  %v3287 = vrot.slane %v3273, %v3286
  %v3288 = vcombine.low %v509, %v547
  %v3289 = vcombine.high %v509, %v547
  %v3291 = vunpack.c.l.s4 1983009808
  %v3292 = vunpack.c.0.s8 %v3291
  %v3293 = vlaneseq
  %v3294 = vshrl.u32 %v3293, 7
  %v3295 = vsub.s32 %v3292, %v3294
  %v3296 = vrot.slane %v3288, %v3295
  %v3298 = vunpack.c.l.s4 1983009808
  %v3299 = vunpack.c.0.s8 %v3298
  %v3300 = vlaneseq
  %v3301 = vshrl.u32 %v3300, 7
  %v3302 = vsub.s32 %v3299, %v3301
  %v3303 = vrot.slane %v3289, %v3302
  %v3304 = vcombine.low %v566, %v604
  %v3305 = vcombine.high %v566, %v604
  %v3307 = vunpack.c.l.s4 1983009808
  %v3308 = vunpack.c.0.s8 %v3307
  %v3309 = vlaneseq
  %v3310 = vshrl.u32 %v3309, 7
  %v3311 = vsub.s32 %v3308, %v3310
  %v3312 = vrot.slane %v3304, %v3311
  %v3314 = vunpack.c.l.s4 1983009808
  %v3315 = vunpack.c.0.s8 %v3314
  %v3316 = vlaneseq
  %v3317 = vshrl.u32 %v3316, 7
  %v3318 = vsub.s32 %v3315, %v3317
  %v3319 = vrot.slane %v3305, %v3318
  %v3320 = vcombine.low %v585, %v623
  %v3321 = vcombine.high %v585, %v623
  %v3323 = vunpack.c.l.s4 1983009808
  %v3324 = vunpack.c.0.s8 %v3323
  %v3325 = vlaneseq
  %v3326 = vshrl.u32 %v3325, 7
  %v3327 = vsub.s32 %v3324, %v3326
  %v3328 = vrot.slane %v3320, %v3327
  %v3330 = vunpack.c.l.s4 1983009808
  %v3331 = vunpack.c.0.s8 %v3330
  %v3332 = vlaneseq
  %v3333 = vshrl.u32 %v3332, 7
  %v3334 = vsub.s32 %v3331, %v3333
  %v3335 = vrot.slane %v3321, %v3334
  %v3336 = vcombine.low %v3280, %v3296
  %v3337 = vcombine.high %v3280, %v3296
  %v3339 = vunpack.c.l.s4 1934713408
  %v3340 = vunpack.c.0.s8 %v3339
  %v3341 = vlaneseq
  %v3342 = vshrl.u32 %v3341, 7
  %v3343 = vsub.s32 %v3340, %v3342
  %v3344 = vrot.slane %v3336, %v3343
  %v3346 = vunpack.c.l.s4 1934713408
  %v3347 = vunpack.c.0.s8 %v3346
  %v3348 = vlaneseq
  %v3349 = vshrl.u32 %v3348, 7
  %v3350 = vsub.s32 %v3347, %v3349
  %v3351 = vrot.slane %v3337, %v3350
  %v3352 = vcombine.low %v3287, %v3303
  %v3353 = vcombine.high %v3287, %v3303
  %v3355 = vunpack.c.l.s4 1934713408
  %v3356 = vunpack.c.0.s8 %v3355
  %v3357 = vlaneseq
  %v3358 = vshrl.u32 %v3357, 7
  %v3359 = vsub.s32 %v3356, %v3358
  %v3360 = vrot.slane %v3352, %v3359
  %v3362 = vunpack.c.l.s4 1934713408
  %v3363 = vunpack.c.0.s8 %v3362
  %v3364 = vlaneseq
  %v3365 = vshrl.u32 %v3364, 7
  %v3366 = vsub.s32 %v3363, %v3365
  %v3367 = vrot.slane %v3353, %v3366
  %v3368 = vcombine.low %v3312, %v3328
  %v3369 = vcombine.high %v3312, %v3328
  %v3371 = vunpack.c.l.s4 1934713408
  %v3372 = vunpack.c.0.s8 %v3371
  %v3373 = vlaneseq
  %v3374 = vshrl.u32 %v3373, 7
  %v3375 = vsub.s32 %v3372, %v3374
  %v3376 = vrot.slane %v3368, %v3375
  %v3378 = vunpack.c.l.s4 1934713408
  %v3379 = vunpack.c.0.s8 %v3378
  %v3380 = vlaneseq
  %v3381 = vshrl.u32 %v3380, 7
  %v3382 = vsub.s32 %v3379, %v3381
  %v3383 = vrot.slane %v3369, %v3382
  %v3384 = vcombine.low %v3319, %v3335
  %v3385 = vcombine.high %v3319, %v3335
  %v3387 = vunpack.c.l.s4 1934713408
  %v3388 = vunpack.c.0.s8 %v3387
  %v3389 = vlaneseq
  %v3390 = vshrl.u32 %v3389, 7
  %v3391 = vsub.s32 %v3388, %v3390
  %v3392 = vrot.slane %v3384, %v3391
  %v3394 = vunpack.c.l.s4 1934713408
  %v3395 = vunpack.c.0.s8 %v3394
  %v3396 = vlaneseq
  %v3397 = vshrl.u32 %v3396, 7
  %v3398 = vsub.s32 %v3395, %v3397
  %v3399 = vrot.slane %v3385, %v3398
  %v3400 = vcombine.low %v3344, %v3376
  %v3401 = vcombine.high %v3344, %v3376
  %v3402 = vcombine.low %v3351, %v3383
  %v3403 = vcombine.high %v3351, %v3383
  %v3404 = vcombine.low %v3360, %v3392
  %v3405 = vcombine.high %v3360, %v3392
  %v3406 = vcombine.low %v3367, %v3399
  %v3407 = vcombine.high %v3367, %v3399
  %v3408 = vcombine.low %v630, %v668
  %v3409 = vcombine.high %v630, %v668
  %v3411 = vunpack.c.l.s4 1983009808
  %v3412 = vunpack.c.0.s8 %v3411
  %v3413 = vlaneseq
  %v3414 = vshrl.u32 %v3413, 7
  %v3415 = vsub.s32 %v3412, %v3414
  %v3416 = vrot.slane %v3408, %v3415
  %v3418 = vunpack.c.l.s4 1983009808
  %v3419 = vunpack.c.0.s8 %v3418
  %v3420 = vlaneseq
  %v3421 = vshrl.u32 %v3420, 7
  %v3422 = vsub.s32 %v3419, %v3421
  %v3423 = vrot.slane %v3409, %v3422
  %v3424 = vcombine.low %v649, %v687
  %v3425 = vcombine.high %v649, %v687
  %v3427 = vunpack.c.l.s4 1983009808
  %v3428 = vunpack.c.0.s8 %v3427
  %v3429 = vlaneseq
  %v3430 = vshrl.u32 %v3429, 7
  %v3431 = vsub.s32 %v3428, %v3430
  %v3432 = vrot.slane %v3424, %v3431
  %v3434 = vunpack.c.l.s4 1983009808
  %v3435 = vunpack.c.0.s8 %v3434
  %v3436 = vlaneseq
  %v3437 = vshrl.u32 %v3436, 7
  %v3438 = vsub.s32 %v3435, %v3437
  %v3439 = vrot.slane %v3425, %v3438
  %v3440 = vcombine.low %v706, %v744
  %v3441 = vcombine.high %v706, %v744
  %v3443 = vunpack.c.l.s4 1983009808
  %v3444 = vunpack.c.0.s8 %v3443
  %v3445 = vlaneseq
  %v3446 = vshrl.u32 %v3445, 7
  %v3447 = vsub.s32 %v3444, %v3446
  %v3448 = vrot.slane %v3440, %v3447
  %v3450 = vunpack.c.l.s4 1983009808
  %v3451 = vunpack.c.0.s8 %v3450
  %v3452 = vlaneseq
  %v3453 = vshrl.u32 %v3452, 7
  %v3454 = vsub.s32 %v3451, %v3453
  %v3455 = vrot.slane %v3441, %v3454
  %v3456 = vcombine.low %v725, %v763
  %v3457 = vcombine.high %v725, %v763
  %v3459 = vunpack.c.l.s4 1983009808
  %v3460 = vunpack.c.0.s8 %v3459
  %v3461 = vlaneseq
  %v3462 = vshrl.u32 %v3461, 7
  %v3463 = vsub.s32 %v3460, %v3462
  %v3464 = vrot.slane %v3456, %v3463
  %v3466 = vunpack.c.l.s4 1983009808
  %v3467 = vunpack.c.0.s8 %v3466
  %v3468 = vlaneseq
  %v3469 = vshrl.u32 %v3468, 7
  %v3470 = vsub.s32 %v3467, %v3469
  %v3471 = vrot.slane %v3457, %v3470
  %v3472 = vcombine.low %v3416, %v3432
  %v3473 = vcombine.high %v3416, %v3432
  %v3475 = vunpack.c.l.s4 1934713408
  %v3476 = vunpack.c.0.s8 %v3475
  %v3477 = vlaneseq
  %v3478 = vshrl.u32 %v3477, 7
  %v3479 = vsub.s32 %v3476, %v3478
  %v3480 = vrot.slane %v3472, %v3479
  %v3482 = vunpack.c.l.s4 1934713408
  %v3483 = vunpack.c.0.s8 %v3482
  %v3484 = vlaneseq
  %v3485 = vshrl.u32 %v3484, 7
  %v3486 = vsub.s32 %v3483, %v3485
  %v3487 = vrot.slane %v3473, %v3486
  %v3488 = vcombine.low %v3423, %v3439
  %v3489 = vcombine.high %v3423, %v3439
  %v3491 = vunpack.c.l.s4 1934713408
  %v3492 = vunpack.c.0.s8 %v3491
  %v3493 = vlaneseq
  %v3494 = vshrl.u32 %v3493, 7
  %v3495 = vsub.s32 %v3492, %v3494
  %v3496 = vrot.slane %v3488, %v3495
  %v3498 = vunpack.c.l.s4 1934713408
  %v3499 = vunpack.c.0.s8 %v3498
  %v3500 = vlaneseq
  %v3501 = vshrl.u32 %v3500, 7
  %v3502 = vsub.s32 %v3499, %v3501
  %v3503 = vrot.slane %v3489, %v3502
  %v3504 = vcombine.low %v3448, %v3464
  %v3505 = vcombine.high %v3448, %v3464
  %v3507 = vunpack.c.l.s4 1934713408
  %v3508 = vunpack.c.0.s8 %v3507
  %v3509 = vlaneseq
  %v3510 = vshrl.u32 %v3509, 7
  %v3511 = vsub.s32 %v3508, %v3510
  %v3512 = vrot.slane %v3504, %v3511
  %v3514 = vunpack.c.l.s4 1934713408
  %v3515 = vunpack.c.0.s8 %v3514
  %v3516 = vlaneseq
  %v3517 = vshrl.u32 %v3516, 7
  %v3518 = vsub.s32 %v3515, %v3517
  %v3519 = vrot.slane %v3505, %v3518
  %v3520 = vcombine.low %v3455, %v3471
  %v3521 = vcombine.high %v3455, %v3471
  %v3523 = vunpack.c.l.s4 1934713408
  %v3524 = vunpack.c.0.s8 %v3523
  %v3525 = vlaneseq
  %v3526 = vshrl.u32 %v3525, 7
  %v3527 = vsub.s32 %v3524, %v3526
  %v3528 = vrot.slane %v3520, %v3527
  %v3530 = vunpack.c.l.s4 1934713408
  %v3531 = vunpack.c.0.s8 %v3530
  %v3532 = vlaneseq
  %v3533 = vshrl.u32 %v3532, 7
  %v3534 = vsub.s32 %v3531, %v3533
  %v3535 = vrot.slane %v3521, %v3534
  %v3536 = vcombine.low %v3480, %v3512
  %v3537 = vcombine.high %v3480, %v3512
  %v3538 = vcombine.low %v3487, %v3519
  %v3539 = vcombine.high %v3487, %v3519
  %v3540 = vcombine.low %v3496, %v3528
  %v3541 = vcombine.high %v3496, %v3528
  %v3542 = vcombine.low %v3503, %v3535
  %v3543 = vcombine.high %v3503, %v3535
  %v3544 = vcombine.low %v634, %v672
  %v3545 = vcombine.high %v634, %v672
  %v3547 = vunpack.c.l.s4 1983009808
  %v3548 = vunpack.c.0.s8 %v3547
  %v3549 = vlaneseq
  %v3550 = vshrl.u32 %v3549, 7
  %v3551 = vsub.s32 %v3548, %v3550
  %v3552 = vrot.slane %v3544, %v3551
  %v3554 = vunpack.c.l.s4 1983009808
  %v3555 = vunpack.c.0.s8 %v3554
  %v3556 = vlaneseq
  %v3557 = vshrl.u32 %v3556, 7
  %v3558 = vsub.s32 %v3555, %v3557
  %v3559 = vrot.slane %v3545, %v3558
  %v3560 = vcombine.low %v653, %v691
  %v3561 = vcombine.high %v653, %v691
  %v3563 = vunpack.c.l.s4 1983009808
  %v3564 = vunpack.c.0.s8 %v3563
  %v3565 = vlaneseq
  %v3566 = vshrl.u32 %v3565, 7
  %v3567 = vsub.s32 %v3564, %v3566
  %v3568 = vrot.slane %v3560, %v3567
  %v3570 = vunpack.c.l.s4 1983009808
  %v3571 = vunpack.c.0.s8 %v3570
  %v3572 = vlaneseq
  %v3573 = vshrl.u32 %v3572, 7
  %v3574 = vsub.s32 %v3571, %v3573
  %v3575 = vrot.slane %v3561, %v3574
  %v3576 = vcombine.low %v710, %v748
  %v3577 = vcombine.high %v710, %v748
  %v3579 = vunpack.c.l.s4 1983009808
  %v3580 = vunpack.c.0.s8 %v3579
  %v3581 = vlaneseq
  %v3582 = vshrl.u32 %v3581, 7
  %v3583 = vsub.s32 %v3580, %v3582
  %v3584 = vrot.slane %v3576, %v3583
  %v3586 = vunpack.c.l.s4 1983009808
  %v3587 = vunpack.c.0.s8 %v3586
  %v3588 = vlaneseq
  %v3589 = vshrl.u32 %v3588, 7
  %v3590 = vsub.s32 %v3587, %v3589
  %v3591 = vrot.slane %v3577, %v3590
  %v3592 = vcombine.low %v729, %v767
  %v3593 = vcombine.high %v729, %v767
  %v3595 = vunpack.c.l.s4 1983009808
  %v3596 = vunpack.c.0.s8 %v3595
  %v3597 = vlaneseq
  %v3598 = vshrl.u32 %v3597, 7
  %v3599 = vsub.s32 %v3596, %v3598
  %v3600 = vrot.slane %v3592, %v3599
  %v3602 = vunpack.c.l.s4 1983009808
  %v3603 = vunpack.c.0.s8 %v3602
  %v3604 = vlaneseq
  %v3605 = vshrl.u32 %v3604, 7
  %v3606 = vsub.s32 %v3603, %v3605
  %v3607 = vrot.slane %v3593, %v3606
  %v3608 = vcombine.low %v3552, %v3568
  %v3609 = vcombine.high %v3552, %v3568
  %v3611 = vunpack.c.l.s4 1934713408
  %v3612 = vunpack.c.0.s8 %v3611
  %v3613 = vlaneseq
  %v3614 = vshrl.u32 %v3613, 7
  %v3615 = vsub.s32 %v3612, %v3614
  %v3616 = vrot.slane %v3608, %v3615
  %v3618 = vunpack.c.l.s4 1934713408
  %v3619 = vunpack.c.0.s8 %v3618
  %v3620 = vlaneseq
  %v3621 = vshrl.u32 %v3620, 7
  %v3622 = vsub.s32 %v3619, %v3621
  %v3623 = vrot.slane %v3609, %v3622
  %v3624 = vcombine.low %v3559, %v3575
  %v3625 = vcombine.high %v3559, %v3575
  %v3627 = vunpack.c.l.s4 1934713408
  %v3628 = vunpack.c.0.s8 %v3627
  %v3629 = vlaneseq
  %v3630 = vshrl.u32 %v3629, 7
  %v3631 = vsub.s32 %v3628, %v3630
  %v3632 = vrot.slane %v3624, %v3631
  %v3634 = vunpack.c.l.s4 1934713408
  %v3635 = vunpack.c.0.s8 %v3634
  %v3636 = vlaneseq
  %v3637 = vshrl.u32 %v3636, 7
  %v3638 = vsub.s32 %v3635, %v3637
  %v3639 = vrot.slane %v3625, %v3638
  %v3640 = vcombine.low %v3584, %v3600
  %v3641 = vcombine.high %v3584, %v3600
  %v3643 = vunpack.c.l.s4 1934713408
  %v3644 = vunpack.c.0.s8 %v3643
  %v3645 = vlaneseq
  %v3646 = vshrl.u32 %v3645, 7
  %v3647 = vsub.s32 %v3644, %v3646
  %v3648 = vrot.slane %v3640, %v3647
  %v3650 = vunpack.c.l.s4 1934713408
  %v3651 = vunpack.c.0.s8 %v3650
  %v3652 = vlaneseq
  %v3653 = vshrl.u32 %v3652, 7
  %v3654 = vsub.s32 %v3651, %v3653
  %v3655 = vrot.slane %v3641, %v3654
  %v3656 = vcombine.low %v3591, %v3607
  %v3657 = vcombine.high %v3591, %v3607
  %v3659 = vunpack.c.l.s4 1934713408
  %v3660 = vunpack.c.0.s8 %v3659
  %v3661 = vlaneseq
  %v3662 = vshrl.u32 %v3661, 7
  %v3663 = vsub.s32 %v3660, %v3662
  %v3664 = vrot.slane %v3656, %v3663
  %v3666 = vunpack.c.l.s4 1934713408
  %v3667 = vunpack.c.0.s8 %v3666
  %v3668 = vlaneseq
  %v3669 = vshrl.u32 %v3668, 7
  %v3670 = vsub.s32 %v3667, %v3669
  %v3671 = vrot.slane %v3657, %v3670
  %v3672 = vcombine.low %v3616, %v3648
  %v3673 = vcombine.high %v3616, %v3648
  %v3674 = vcombine.low %v3623, %v3655
  %v3675 = vcombine.high %v3623, %v3655
  %v3676 = vcombine.low %v3632, %v3664
  %v3677 = vcombine.high %v3632, %v3664
  %v3678 = vcombine.low %v3639, %v3671
  %v3679 = vcombine.high %v3639, %v3671
  %v3680 = vcombine.low %v638, %v676
  %v3681 = vcombine.high %v638, %v676
  %v3683 = vunpack.c.l.s4 1983009808
  %v3684 = vunpack.c.0.s8 %v3683
  %v3685 = vlaneseq
  %v3686 = vshrl.u32 %v3685, 7
  %v3687 = vsub.s32 %v3684, %v3686
  %v3688 = vrot.slane %v3680, %v3687
  %v3690 = vunpack.c.l.s4 1983009808
  %v3691 = vunpack.c.0.s8 %v3690
  %v3692 = vlaneseq
  %v3693 = vshrl.u32 %v3692, 7
  %v3694 = vsub.s32 %v3691, %v3693
  %v3695 = vrot.slane %v3681, %v3694
  %v3696 = vcombine.low %v657, %v695
  %v3697 = vcombine.high %v657, %v695
  %v3699 = vunpack.c.l.s4 1983009808
  %v3700 = vunpack.c.0.s8 %v3699
  %v3701 = vlaneseq
  %v3702 = vshrl.u32 %v3701, 7
  %v3703 = vsub.s32 %v3700, %v3702
  %v3704 = vrot.slane %v3696, %v3703
  %v3706 = vunpack.c.l.s4 1983009808
  %v3707 = vunpack.c.0.s8 %v3706
  %v3708 = vlaneseq
  %v3709 = vshrl.u32 %v3708, 7
  %v3710 = vsub.s32 %v3707, %v3709
  %v3711 = vrot.slane %v3697, %v3710
  %v3712 = vcombine.low %v714, %v752
  %v3713 = vcombine.high %v714, %v752
  %v3715 = vunpack.c.l.s4 1983009808
  %v3716 = vunpack.c.0.s8 %v3715
  %v3717 = vlaneseq
  %v3718 = vshrl.u32 %v3717, 7
  %v3719 = vsub.s32 %v3716, %v3718
  %v3720 = vrot.slane %v3712, %v3719
  %v3722 = vunpack.c.l.s4 1983009808
  %v3723 = vunpack.c.0.s8 %v3722
  %v3724 = vlaneseq
  %v3725 = vshrl.u32 %v3724, 7
  %v3726 = vsub.s32 %v3723, %v3725
  %v3727 = vrot.slane %v3713, %v3726
  %v3728 = vcombine.low %v733, %v771
  %v3729 = vcombine.high %v733, %v771
  %v3731 = vunpack.c.l.s4 1983009808
  %v3732 = vunpack.c.0.s8 %v3731
  %v3733 = vlaneseq
  %v3734 = vshrl.u32 %v3733, 7
  %v3735 = vsub.s32 %v3732, %v3734
  %v3736 = vrot.slane %v3728, %v3735
  %v3738 = vunpack.c.l.s4 1983009808
  %v3739 = vunpack.c.0.s8 %v3738
  %v3740 = vlaneseq
  %v3741 = vshrl.u32 %v3740, 7
  %v3742 = vsub.s32 %v3739, %v3741
  %v3743 = vrot.slane %v3729, %v3742
  %v3744 = vcombine.low %v3688, %v3704
  %v3745 = vcombine.high %v3688, %v3704
  %v3747 = vunpack.c.l.s4 1934713408
  %v3748 = vunpack.c.0.s8 %v3747
  %v3749 = vlaneseq
  %v3750 = vshrl.u32 %v3749, 7
  %v3751 = vsub.s32 %v3748, %v3750
  %v3752 = vrot.slane %v3744, %v3751
  %v3754 = vunpack.c.l.s4 1934713408
  %v3755 = vunpack.c.0.s8 %v3754
  %v3756 = vlaneseq
  %v3757 = vshrl.u32 %v3756, 7
  %v3758 = vsub.s32 %v3755, %v3757
  %v3759 = vrot.slane %v3745, %v3758
  %v3760 = vcombine.low %v3695, %v3711
  %v3761 = vcombine.high %v3695, %v3711
  %v3763 = vunpack.c.l.s4 1934713408
  %v3764 = vunpack.c.0.s8 %v3763
  %v3765 = vlaneseq
  %v3766 = vshrl.u32 %v3765, 7
  %v3767 = vsub.s32 %v3764, %v3766
  %v3768 = vrot.slane %v3760, %v3767
  %v3770 = vunpack.c.l.s4 1934713408
  %v3771 = vunpack.c.0.s8 %v3770
  %v3772 = vlaneseq
  %v3773 = vshrl.u32 %v3772, 7
  %v3774 = vsub.s32 %v3771, %v3773
  %v3775 = vrot.slane %v3761, %v3774
  %v3776 = vcombine.low %v3720, %v3736
  %v3777 = vcombine.high %v3720, %v3736
  %v3779 = vunpack.c.l.s4 1934713408
  %v3780 = vunpack.c.0.s8 %v3779
  %v3781 = vlaneseq
  %v3782 = vshrl.u32 %v3781, 7
  %v3783 = vsub.s32 %v3780, %v3782
  %v3784 = vrot.slane %v3776, %v3783
  %v3786 = vunpack.c.l.s4 1934713408
  %v3787 = vunpack.c.0.s8 %v3786
  %v3788 = vlaneseq
  %v3789 = vshrl.u32 %v3788, 7
  %v3790 = vsub.s32 %v3787, %v3789
  %v3791 = vrot.slane %v3777, %v3790
  %v3792 = vcombine.low %v3727, %v3743
  %v3793 = vcombine.high %v3727, %v3743
  %v3795 = vunpack.c.l.s4 1934713408
  %v3796 = vunpack.c.0.s8 %v3795
  %v3797 = vlaneseq
  %v3798 = vshrl.u32 %v3797, 7
  %v3799 = vsub.s32 %v3796, %v3798
  %v3800 = vrot.slane %v3792, %v3799
  %v3802 = vunpack.c.l.s4 1934713408
  %v3803 = vunpack.c.0.s8 %v3802
  %v3804 = vlaneseq
  %v3805 = vshrl.u32 %v3804, 7
  %v3806 = vsub.s32 %v3803, %v3805
  %v3807 = vrot.slane %v3793, %v3806
  %v3808 = vcombine.low %v3752, %v3784
  %v3809 = vcombine.high %v3752, %v3784
  %v3810 = vcombine.low %v3759, %v3791
  %v3811 = vcombine.high %v3759, %v3791
  %v3812 = vcombine.low %v3768, %v3800
  %v3813 = vcombine.high %v3768, %v3800
  %v3814 = vcombine.low %v3775, %v3807
  %v3815 = vcombine.high %v3775, %v3807
  %v3816 = vcombine.low %v642, %v680
  %v3817 = vcombine.high %v642, %v680
  %v3819 = vunpack.c.l.s4 1983009808
  %v3820 = vunpack.c.0.s8 %v3819
  %v3821 = vlaneseq
  %v3822 = vshrl.u32 %v3821, 7
  %v3823 = vsub.s32 %v3820, %v3822
  %v3824 = vrot.slane %v3816, %v3823
  %v3826 = vunpack.c.l.s4 1983009808
  %v3827 = vunpack.c.0.s8 %v3826
  %v3828 = vlaneseq
  %v3829 = vshrl.u32 %v3828, 7
  %v3830 = vsub.s32 %v3827, %v3829
  %v3831 = vrot.slane %v3817, %v3830
  %v3832 = vcombine.low %v661, %v699
  %v3833 = vcombine.high %v661, %v699
  %v3835 = vunpack.c.l.s4 1983009808
  %v3836 = vunpack.c.0.s8 %v3835
  %v3837 = vlaneseq
  %v3838 = vshrl.u32 %v3837, 7
  %v3839 = vsub.s32 %v3836, %v3838
  %v3840 = vrot.slane %v3832, %v3839
  %v3842 = vunpack.c.l.s4 1983009808
  %v3843 = vunpack.c.0.s8 %v3842
  %v3844 = vlaneseq
  %v3845 = vshrl.u32 %v3844, 7
  %v3846 = vsub.s32 %v3843, %v3845
  %v3847 = vrot.slane %v3833, %v3846
  %v3848 = vcombine.low %v718, %v756
  %v3849 = vcombine.high %v718, %v756
  %v3851 = vunpack.c.l.s4 1983009808
  %v3852 = vunpack.c.0.s8 %v3851
  %v3853 = vlaneseq
  %v3854 = vshrl.u32 %v3853, 7
  %v3855 = vsub.s32 %v3852, %v3854
  %v3856 = vrot.slane %v3848, %v3855
  %v3858 = vunpack.c.l.s4 1983009808
  %v3859 = vunpack.c.0.s8 %v3858
  %v3860 = vlaneseq
  %v3861 = vshrl.u32 %v3860, 7
  %v3862 = vsub.s32 %v3859, %v3861
  %v3863 = vrot.slane %v3849, %v3862
  %v3864 = vcombine.low %v737, %v775
  %v3865 = vcombine.high %v737, %v775
  %v3867 = vunpack.c.l.s4 1983009808
  %v3868 = vunpack.c.0.s8 %v3867
  %v3869 = vlaneseq
  %v3870 = vshrl.u32 %v3869, 7
  %v3871 = vsub.s32 %v3868, %v3870
  %v3872 = vrot.slane %v3864, %v3871
  %v3874 = vunpack.c.l.s4 1983009808
  %v3875 = vunpack.c.0.s8 %v3874
  %v3876 = vlaneseq
  %v3877 = vshrl.u32 %v3876, 7
  %v3878 = vsub.s32 %v3875, %v3877
  %v3879 = vrot.slane %v3865, %v3878
  %v3880 = vcombine.low %v3824, %v3840
  %v3881 = vcombine.high %v3824, %v3840
  %v3883 = vunpack.c.l.s4 1934713408
  %v3884 = vunpack.c.0.s8 %v3883
  %v3885 = vlaneseq
  %v3886 = vshrl.u32 %v3885, 7
  %v3887 = vsub.s32 %v3884, %v3886
  %v3888 = vrot.slane %v3880, %v3887
  %v3890 = vunpack.c.l.s4 1934713408
  %v3891 = vunpack.c.0.s8 %v3890
  %v3892 = vlaneseq
  %v3893 = vshrl.u32 %v3892, 7
  %v3894 = vsub.s32 %v3891, %v3893
  %v3895 = vrot.slane %v3881, %v3894
  %v3896 = vcombine.low %v3831, %v3847
  %v3897 = vcombine.high %v3831, %v3847
  %v3899 = vunpack.c.l.s4 1934713408
  %v3900 = vunpack.c.0.s8 %v3899
  %v3901 = vlaneseq
  %v3902 = vshrl.u32 %v3901, 7
  %v3903 = vsub.s32 %v3900, %v3902
  %v3904 = vrot.slane %v3896, %v3903
  %v3906 = vunpack.c.l.s4 1934713408
  %v3907 = vunpack.c.0.s8 %v3906
  %v3908 = vlaneseq
  %v3909 = vshrl.u32 %v3908, 7
  %v3910 = vsub.s32 %v3907, %v3909
  %v3911 = vrot.slane %v3897, %v3910
  %v3912 = vcombine.low %v3856, %v3872
  %v3913 = vcombine.high %v3856, %v3872
  %v3915 = vunpack.c.l.s4 1934713408
  %v3916 = vunpack.c.0.s8 %v3915
  %v3917 = vlaneseq
  %v3918 = vshrl.u32 %v3917, 7
  %v3919 = vsub.s32 %v3916, %v3918
  %v3920 = vrot.slane %v3912, %v3919
  %v3922 = vunpack.c.l.s4 1934713408
  %v3923 = vunpack.c.0.s8 %v3922
  %v3924 = vlaneseq
  %v3925 = vshrl.u32 %v3924, 7
  %v3926 = vsub.s32 %v3923, %v3925
  %v3927 = vrot.slane %v3913, %v3926
  %v3928 = vcombine.low %v3863, %v3879
  %v3929 = vcombine.high %v3863, %v3879
  %v3931 = vunpack.c.l.s4 1934713408
  %v3932 = vunpack.c.0.s8 %v3931
  %v3933 = vlaneseq
  %v3934 = vshrl.u32 %v3933, 7
  %v3935 = vsub.s32 %v3932, %v3934
  %v3936 = vrot.slane %v3928, %v3935
  %v3938 = vunpack.c.l.s4 1934713408
  %v3939 = vunpack.c.0.s8 %v3938
  %v3940 = vlaneseq
  %v3941 = vshrl.u32 %v3940, 7
  %v3942 = vsub.s32 %v3939, %v3941
  %v3943 = vrot.slane %v3929, %v3942
  %v3944 = vcombine.low %v3888, %v3920
  %v3945 = vcombine.high %v3888, %v3920
  %v3946 = vcombine.low %v3895, %v3927
  %v3947 = vcombine.high %v3895, %v3927
  %v3948 = vcombine.low %v3904, %v3936
  %v3949 = vcombine.high %v3904, %v3936
  %v3950 = vcombine.low %v3911, %v3943
  %v3951 = vcombine.high %v3911, %v3943
  %v3952 = vcombine.low %v782, %v820
  %v3953 = vcombine.high %v782, %v820
  %v3955 = vunpack.c.l.s4 1983009808
  %v3956 = vunpack.c.0.s8 %v3955
  %v3957 = vlaneseq
  %v3958 = vshrl.u32 %v3957, 7
  %v3959 = vsub.s32 %v3956, %v3958
  %v3960 = vrot.slane %v3952, %v3959
  %v3962 = vunpack.c.l.s4 1983009808
  %v3963 = vunpack.c.0.s8 %v3962
  %v3964 = vlaneseq
  %v3965 = vshrl.u32 %v3964, 7
  %v3966 = vsub.s32 %v3963, %v3965
  %v3967 = vrot.slane %v3953, %v3966
  %v3968 = vcombine.low %v801, %v839
  %v3969 = vcombine.high %v801, %v839
  %v3971 = vunpack.c.l.s4 1983009808
  %v3972 = vunpack.c.0.s8 %v3971
  %v3973 = vlaneseq
  %v3974 = vshrl.u32 %v3973, 7
  %v3975 = vsub.s32 %v3972, %v3974
  %v3976 = vrot.slane %v3968, %v3975
  %v3978 = vunpack.c.l.s4 1983009808
  %v3979 = vunpack.c.0.s8 %v3978
  %v3980 = vlaneseq
  %v3981 = vshrl.u32 %v3980, 7
  %v3982 = vsub.s32 %v3979, %v3981
  %v3983 = vrot.slane %v3969, %v3982
  %v3984 = vcombine.low %v858, %v896
  %v3985 = vcombine.high %v858, %v896
  %v3987 = vunpack.c.l.s4 1983009808
  %v3988 = vunpack.c.0.s8 %v3987
  %v3989 = vlaneseq
  %v3990 = vshrl.u32 %v3989, 7
  %v3991 = vsub.s32 %v3988, %v3990
  %v3992 = vrot.slane %v3984, %v3991
  %v3994 = vunpack.c.l.s4 1983009808
  %v3995 = vunpack.c.0.s8 %v3994
  %v3996 = vlaneseq
  %v3997 = vshrl.u32 %v3996, 7
  %v3998 = vsub.s32 %v3995, %v3997
  %v3999 = vrot.slane %v3985, %v3998
  %v4000 = vcombine.low %v877, %v915
  %v4001 = vcombine.high %v877, %v915
  %v4003 = vunpack.c.l.s4 1983009808
  %v4004 = vunpack.c.0.s8 %v4003
  %v4005 = vlaneseq
  %v4006 = vshrl.u32 %v4005, 7
  %v4007 = vsub.s32 %v4004, %v4006
  %v4008 = vrot.slane %v4000, %v4007
  %v4010 = vunpack.c.l.s4 1983009808
  %v4011 = vunpack.c.0.s8 %v4010
  %v4012 = vlaneseq
  %v4013 = vshrl.u32 %v4012, 7
  %v4014 = vsub.s32 %v4011, %v4013
  %v4015 = vrot.slane %v4001, %v4014
  %v4016 = vcombine.low %v3960, %v3976
  %v4017 = vcombine.high %v3960, %v3976
  %v4019 = vunpack.c.l.s4 1934713408
  %v4020 = vunpack.c.0.s8 %v4019
  %v4021 = vlaneseq
  %v4022 = vshrl.u32 %v4021, 7
  %v4023 = vsub.s32 %v4020, %v4022
  %v4024 = vrot.slane %v4016, %v4023
  %v4026 = vunpack.c.l.s4 1934713408
  %v4027 = vunpack.c.0.s8 %v4026
  %v4028 = vlaneseq
  %v4029 = vshrl.u32 %v4028, 7
  %v4030 = vsub.s32 %v4027, %v4029
  %v4031 = vrot.slane %v4017, %v4030
  %v4032 = vcombine.low %v3967, %v3983
  %v4033 = vcombine.high %v3967, %v3983
  %v4035 = vunpack.c.l.s4 1934713408
  %v4036 = vunpack.c.0.s8 %v4035
  %v4037 = vlaneseq
  %v4038 = vshrl.u32 %v4037, 7
  %v4039 = vsub.s32 %v4036, %v4038
  %v4040 = vrot.slane %v4032, %v4039
  %v4042 = vunpack.c.l.s4 1934713408
  %v4043 = vunpack.c.0.s8 %v4042
  %v4044 = vlaneseq
  %v4045 = vshrl.u32 %v4044, 7
  %v4046 = vsub.s32 %v4043, %v4045
  %v4047 = vrot.slane %v4033, %v4046
  %v4048 = vcombine.low %v3992, %v4008
  %v4049 = vcombine.high %v3992, %v4008
  %v4051 = vunpack.c.l.s4 1934713408
  %v4052 = vunpack.c.0.s8 %v4051
  %v4053 = vlaneseq
  %v4054 = vshrl.u32 %v4053, 7
  %v4055 = vsub.s32 %v4052, %v4054
  %v4056 = vrot.slane %v4048, %v4055
  %v4058 = vunpack.c.l.s4 1934713408
  %v4059 = vunpack.c.0.s8 %v4058
  %v4060 = vlaneseq
  %v4061 = vshrl.u32 %v4060, 7
  %v4062 = vsub.s32 %v4059, %v4061
  %v4063 = vrot.slane %v4049, %v4062
  %v4064 = vcombine.low %v3999, %v4015
  %v4065 = vcombine.high %v3999, %v4015
  %v4067 = vunpack.c.l.s4 1934713408
  %v4068 = vunpack.c.0.s8 %v4067
  %v4069 = vlaneseq
  %v4070 = vshrl.u32 %v4069, 7
  %v4071 = vsub.s32 %v4068, %v4070
  %v4072 = vrot.slane %v4064, %v4071
  %v4074 = vunpack.c.l.s4 1934713408
  %v4075 = vunpack.c.0.s8 %v4074
  %v4076 = vlaneseq
  %v4077 = vshrl.u32 %v4076, 7
  %v4078 = vsub.s32 %v4075, %v4077
  %v4079 = vrot.slane %v4065, %v4078
  %v4080 = vcombine.low %v4024, %v4056
  %v4081 = vcombine.high %v4024, %v4056
  %v4082 = vcombine.low %v4031, %v4063
  %v4083 = vcombine.high %v4031, %v4063
  %v4084 = vcombine.low %v4040, %v4072
  %v4085 = vcombine.high %v4040, %v4072
  %v4086 = vcombine.low %v4047, %v4079
  %v4087 = vcombine.high %v4047, %v4079
  %v4088 = vcombine.low %v786, %v824
  %v4089 = vcombine.high %v786, %v824
  %v4091 = vunpack.c.l.s4 1983009808
  %v4092 = vunpack.c.0.s8 %v4091
  %v4093 = vlaneseq
  %v4094 = vshrl.u32 %v4093, 7
  %v4095 = vsub.s32 %v4092, %v4094
  %v4096 = vrot.slane %v4088, %v4095
  %v4098 = vunpack.c.l.s4 1983009808
  %v4099 = vunpack.c.0.s8 %v4098
  %v4100 = vlaneseq
  %v4101 = vshrl.u32 %v4100, 7
  %v4102 = vsub.s32 %v4099, %v4101
  %v4103 = vrot.slane %v4089, %v4102
  %v4104 = vcombine.low %v805, %v843
  %v4105 = vcombine.high %v805, %v843
  %v4107 = vunpack.c.l.s4 1983009808
  %v4108 = vunpack.c.0.s8 %v4107
  %v4109 = vlaneseq
  %v4110 = vshrl.u32 %v4109, 7
  %v4111 = vsub.s32 %v4108, %v4110
  %v4112 = vrot.slane %v4104, %v4111
  %v4114 = vunpack.c.l.s4 1983009808
  %v4115 = vunpack.c.0.s8 %v4114
  %v4116 = vlaneseq
  %v4117 = vshrl.u32 %v4116, 7
  %v4118 = vsub.s32 %v4115, %v4117
  %v4119 = vrot.slane %v4105, %v4118
  %v4120 = vcombine.low %v862, %v900
  %v4121 = vcombine.high %v862, %v900
  %v4123 = vunpack.c.l.s4 1983009808
  %v4124 = vunpack.c.0.s8 %v4123
  %v4125 = vlaneseq
  %v4126 = vshrl.u32 %v4125, 7
  %v4127 = vsub.s32 %v4124, %v4126
  %v4128 = vrot.slane %v4120, %v4127
  %v4130 = vunpack.c.l.s4 1983009808
  %v4131 = vunpack.c.0.s8 %v4130
  %v4132 = vlaneseq
  %v4133 = vshrl.u32 %v4132, 7
  %v4134 = vsub.s32 %v4131, %v4133
  %v4135 = vrot.slane %v4121, %v4134
  %v4136 = vcombine.low %v881, %v919
  %v4137 = vcombine.high %v881, %v919
  %v4139 = vunpack.c.l.s4 1983009808
  %v4140 = vunpack.c.0.s8 %v4139
  %v4141 = vlaneseq
  %v4142 = vshrl.u32 %v4141, 7
  %v4143 = vsub.s32 %v4140, %v4142
  %v4144 = vrot.slane %v4136, %v4143
  %v4146 = vunpack.c.l.s4 1983009808
  %v4147 = vunpack.c.0.s8 %v4146
  %v4148 = vlaneseq
  %v4149 = vshrl.u32 %v4148, 7
  %v4150 = vsub.s32 %v4147, %v4149
  %v4151 = vrot.slane %v4137, %v4150
  %v4152 = vcombine.low %v4096, %v4112
  %v4153 = vcombine.high %v4096, %v4112
  %v4155 = vunpack.c.l.s4 1934713408
  %v4156 = vunpack.c.0.s8 %v4155
  %v4157 = vlaneseq
  %v4158 = vshrl.u32 %v4157, 7
  %v4159 = vsub.s32 %v4156, %v4158
  %v4160 = vrot.slane %v4152, %v4159
  %v4162 = vunpack.c.l.s4 1934713408
  %v4163 = vunpack.c.0.s8 %v4162
  %v4164 = vlaneseq
  %v4165 = vshrl.u32 %v4164, 7
  %v4166 = vsub.s32 %v4163, %v4165
  %v4167 = vrot.slane %v4153, %v4166
  %v4168 = vcombine.low %v4103, %v4119
  %v4169 = vcombine.high %v4103, %v4119
  %v4171 = vunpack.c.l.s4 1934713408
  %v4172 = vunpack.c.0.s8 %v4171
  %v4173 = vlaneseq
  %v4174 = vshrl.u32 %v4173, 7
  %v4175 = vsub.s32 %v4172, %v4174
  %v4176 = vrot.slane %v4168, %v4175
  %v4178 = vunpack.c.l.s4 1934713408
  %v4179 = vunpack.c.0.s8 %v4178
  %v4180 = vlaneseq
  %v4181 = vshrl.u32 %v4180, 7
  %v4182 = vsub.s32 %v4179, %v4181
  %v4183 = vrot.slane %v4169, %v4182
  %v4184 = vcombine.low %v4128, %v4144
  %v4185 = vcombine.high %v4128, %v4144
  %v4187 = vunpack.c.l.s4 1934713408
  %v4188 = vunpack.c.0.s8 %v4187
  %v4189 = vlaneseq
  %v4190 = vshrl.u32 %v4189, 7
  %v4191 = vsub.s32 %v4188, %v4190
  %v4192 = vrot.slane %v4184, %v4191
  %v4194 = vunpack.c.l.s4 1934713408
  %v4195 = vunpack.c.0.s8 %v4194
  %v4196 = vlaneseq
  %v4197 = vshrl.u32 %v4196, 7
  %v4198 = vsub.s32 %v4195, %v4197
  %v4199 = vrot.slane %v4185, %v4198
  %v4200 = vcombine.low %v4135, %v4151
  %v4201 = vcombine.high %v4135, %v4151
  %v4203 = vunpack.c.l.s4 1934713408
  %v4204 = vunpack.c.0.s8 %v4203
  %v4205 = vlaneseq
  %v4206 = vshrl.u32 %v4205, 7
  %v4207 = vsub.s32 %v4204, %v4206
  %v4208 = vrot.slane %v4200, %v4207
  %v4210 = vunpack.c.l.s4 1934713408
  %v4211 = vunpack.c.0.s8 %v4210
  %v4212 = vlaneseq
  %v4213 = vshrl.u32 %v4212, 7
  %v4214 = vsub.s32 %v4211, %v4213
  %v4215 = vrot.slane %v4201, %v4214
  %v4216 = vcombine.low %v4160, %v4192
  %v4217 = vcombine.high %v4160, %v4192
  %v4218 = vcombine.low %v4167, %v4199
  %v4219 = vcombine.high %v4167, %v4199
  %v4220 = vcombine.low %v4176, %v4208
  %v4221 = vcombine.high %v4176, %v4208
  %v4222 = vcombine.low %v4183, %v4215
  %v4223 = vcombine.high %v4183, %v4215
  %v4224 = vcombine.low %v790, %v828
  %v4225 = vcombine.high %v790, %v828
  %v4227 = vunpack.c.l.s4 1983009808
  %v4228 = vunpack.c.0.s8 %v4227
  %v4229 = vlaneseq
  %v4230 = vshrl.u32 %v4229, 7
  %v4231 = vsub.s32 %v4228, %v4230
  %v4232 = vrot.slane %v4224, %v4231
  %v4234 = vunpack.c.l.s4 1983009808
  %v4235 = vunpack.c.0.s8 %v4234
  %v4236 = vlaneseq
  %v4237 = vshrl.u32 %v4236, 7
  %v4238 = vsub.s32 %v4235, %v4237
  %v4239 = vrot.slane %v4225, %v4238
  %v4240 = vcombine.low %v809, %v847
  %v4241 = vcombine.high %v809, %v847
  %v4243 = vunpack.c.l.s4 1983009808
  %v4244 = vunpack.c.0.s8 %v4243
  %v4245 = vlaneseq
  %v4246 = vshrl.u32 %v4245, 7
  %v4247 = vsub.s32 %v4244, %v4246
  %v4248 = vrot.slane %v4240, %v4247
  %v4250 = vunpack.c.l.s4 1983009808
  %v4251 = vunpack.c.0.s8 %v4250
  %v4252 = vlaneseq
  %v4253 = vshrl.u32 %v4252, 7
  %v4254 = vsub.s32 %v4251, %v4253
  %v4255 = vrot.slane %v4241, %v4254
  %v4256 = vcombine.low %v866, %v904
  %v4257 = vcombine.high %v866, %v904
  %v4259 = vunpack.c.l.s4 1983009808
  %v4260 = vunpack.c.0.s8 %v4259
  %v4261 = vlaneseq
  %v4262 = vshrl.u32 %v4261, 7
  %v4263 = vsub.s32 %v4260, %v4262
  %v4264 = vrot.slane %v4256, %v4263
  %v4266 = vunpack.c.l.s4 1983009808
  %v4267 = vunpack.c.0.s8 %v4266
  %v4268 = vlaneseq
  %v4269 = vshrl.u32 %v4268, 7
  %v4270 = vsub.s32 %v4267, %v4269
  %v4271 = vrot.slane %v4257, %v4270
  %v4272 = vcombine.low %v885, %v923
  %v4273 = vcombine.high %v885, %v923
  %v4275 = vunpack.c.l.s4 1983009808
  %v4276 = vunpack.c.0.s8 %v4275
  %v4277 = vlaneseq
  %v4278 = vshrl.u32 %v4277, 7
  %v4279 = vsub.s32 %v4276, %v4278
  %v4280 = vrot.slane %v4272, %v4279
  %v4282 = vunpack.c.l.s4 1983009808
  %v4283 = vunpack.c.0.s8 %v4282
  %v4284 = vlaneseq
  %v4285 = vshrl.u32 %v4284, 7
  %v4286 = vsub.s32 %v4283, %v4285
  %v4287 = vrot.slane %v4273, %v4286
  %v4288 = vcombine.low %v4232, %v4248
  %v4289 = vcombine.high %v4232, %v4248
  %v4291 = vunpack.c.l.s4 1934713408
  %v4292 = vunpack.c.0.s8 %v4291
  %v4293 = vlaneseq
  %v4294 = vshrl.u32 %v4293, 7
  %v4295 = vsub.s32 %v4292, %v4294
  %v4296 = vrot.slane %v4288, %v4295
  %v4298 = vunpack.c.l.s4 1934713408
  %v4299 = vunpack.c.0.s8 %v4298
  %v4300 = vlaneseq
  %v4301 = vshrl.u32 %v4300, 7
  %v4302 = vsub.s32 %v4299, %v4301
  %v4303 = vrot.slane %v4289, %v4302
  %v4304 = vcombine.low %v4239, %v4255
  %v4305 = vcombine.high %v4239, %v4255
  %v4307 = vunpack.c.l.s4 1934713408
  %v4308 = vunpack.c.0.s8 %v4307
  %v4309 = vlaneseq
  %v4310 = vshrl.u32 %v4309, 7
  %v4311 = vsub.s32 %v4308, %v4310
  %v4312 = vrot.slane %v4304, %v4311
  %v4314 = vunpack.c.l.s4 1934713408
  %v4315 = vunpack.c.0.s8 %v4314
  %v4316 = vlaneseq
  %v4317 = vshrl.u32 %v4316, 7
  %v4318 = vsub.s32 %v4315, %v4317
  %v4319 = vrot.slane %v4305, %v4318
  %v4320 = vcombine.low %v4264, %v4280
  %v4321 = vcombine.high %v4264, %v4280
  %v4323 = vunpack.c.l.s4 1934713408
  %v4324 = vunpack.c.0.s8 %v4323
  %v4325 = vlaneseq
  %v4326 = vshrl.u32 %v4325, 7
  %v4327 = vsub.s32 %v4324, %v4326
  %v4328 = vrot.slane %v4320, %v4327
  %v4330 = vunpack.c.l.s4 1934713408
  %v4331 = vunpack.c.0.s8 %v4330
  %v4332 = vlaneseq
  %v4333 = vshrl.u32 %v4332, 7
  %v4334 = vsub.s32 %v4331, %v4333
  %v4335 = vrot.slane %v4321, %v4334
  %v4336 = vcombine.low %v4271, %v4287
  %v4337 = vcombine.high %v4271, %v4287
  %v4339 = vunpack.c.l.s4 1934713408
  %v4340 = vunpack.c.0.s8 %v4339
  %v4341 = vlaneseq
  %v4342 = vshrl.u32 %v4341, 7
  %v4343 = vsub.s32 %v4340, %v4342
  %v4344 = vrot.slane %v4336, %v4343
  %v4346 = vunpack.c.l.s4 1934713408
  %v4347 = vunpack.c.0.s8 %v4346
  %v4348 = vlaneseq
  %v4349 = vshrl.u32 %v4348, 7
  %v4350 = vsub.s32 %v4347, %v4349
  %v4351 = vrot.slane %v4337, %v4350
  %v4352 = vcombine.low %v4296, %v4328
  %v4353 = vcombine.high %v4296, %v4328
  %v4354 = vcombine.low %v4303, %v4335
  %v4355 = vcombine.high %v4303, %v4335
  %v4356 = vcombine.low %v4312, %v4344
  %v4357 = vcombine.high %v4312, %v4344
  %v4358 = vcombine.low %v4319, %v4351
  %v4359 = vcombine.high %v4319, %v4351
  %v4360 = vcombine.low %v794, %v832
  %v4361 = vcombine.high %v794, %v832
  %v4363 = vunpack.c.l.s4 1983009808
  %v4364 = vunpack.c.0.s8 %v4363
  %v4365 = vlaneseq
  %v4366 = vshrl.u32 %v4365, 7
  %v4367 = vsub.s32 %v4364, %v4366
  %v4368 = vrot.slane %v4360, %v4367
  %v4370 = vunpack.c.l.s4 1983009808
  %v4371 = vunpack.c.0.s8 %v4370
  %v4372 = vlaneseq
  %v4373 = vshrl.u32 %v4372, 7
  %v4374 = vsub.s32 %v4371, %v4373
  %v4375 = vrot.slane %v4361, %v4374
  %v4376 = vcombine.low %v813, %v851
  %v4377 = vcombine.high %v813, %v851
  %v4379 = vunpack.c.l.s4 1983009808
  %v4380 = vunpack.c.0.s8 %v4379
  %v4381 = vlaneseq
  %v4382 = vshrl.u32 %v4381, 7
  %v4383 = vsub.s32 %v4380, %v4382
  %v4384 = vrot.slane %v4376, %v4383
  %v4386 = vunpack.c.l.s4 1983009808
  %v4387 = vunpack.c.0.s8 %v4386
  %v4388 = vlaneseq
  %v4389 = vshrl.u32 %v4388, 7
  %v4390 = vsub.s32 %v4387, %v4389
  %v4391 = vrot.slane %v4377, %v4390
  %v4392 = vcombine.low %v870, %v908
  %v4393 = vcombine.high %v870, %v908
  %v4395 = vunpack.c.l.s4 1983009808
  %v4396 = vunpack.c.0.s8 %v4395
  %v4397 = vlaneseq
  %v4398 = vshrl.u32 %v4397, 7
  %v4399 = vsub.s32 %v4396, %v4398
  %v4400 = vrot.slane %v4392, %v4399
  %v4402 = vunpack.c.l.s4 1983009808
  %v4403 = vunpack.c.0.s8 %v4402
  %v4404 = vlaneseq
  %v4405 = vshrl.u32 %v4404, 7
  %v4406 = vsub.s32 %v4403, %v4405
  %v4407 = vrot.slane %v4393, %v4406
  %v4408 = vcombine.low %v889, %v927
  %v4409 = vcombine.high %v889, %v927
  %v4411 = vunpack.c.l.s4 1983009808
  %v4412 = vunpack.c.0.s8 %v4411
  %v4413 = vlaneseq
  %v4414 = vshrl.u32 %v4413, 7
  %v4415 = vsub.s32 %v4412, %v4414
  %v4416 = vrot.slane %v4408, %v4415
  %v4418 = vunpack.c.l.s4 1983009808
  %v4419 = vunpack.c.0.s8 %v4418
  %v4420 = vlaneseq
  %v4421 = vshrl.u32 %v4420, 7
  %v4422 = vsub.s32 %v4419, %v4421
  %v4423 = vrot.slane %v4409, %v4422
  %v4424 = vcombine.low %v4368, %v4384
  %v4425 = vcombine.high %v4368, %v4384
  %v4427 = vunpack.c.l.s4 1934713408
  %v4428 = vunpack.c.0.s8 %v4427
  %v4429 = vlaneseq
  %v4430 = vshrl.u32 %v4429, 7
  %v4431 = vsub.s32 %v4428, %v4430
  %v4432 = vrot.slane %v4424, %v4431
  %v4434 = vunpack.c.l.s4 1934713408
  %v4435 = vunpack.c.0.s8 %v4434
  %v4436 = vlaneseq
  %v4437 = vshrl.u32 %v4436, 7
  %v4438 = vsub.s32 %v4435, %v4437
  %v4439 = vrot.slane %v4425, %v4438
  %v4440 = vcombine.low %v4375, %v4391
  %v4441 = vcombine.high %v4375, %v4391
  %v4443 = vunpack.c.l.s4 1934713408
  %v4444 = vunpack.c.0.s8 %v4443
  %v4445 = vlaneseq
  %v4446 = vshrl.u32 %v4445, 7
  %v4447 = vsub.s32 %v4444, %v4446
  %v4448 = vrot.slane %v4440, %v4447
  %v4450 = vunpack.c.l.s4 1934713408
  %v4451 = vunpack.c.0.s8 %v4450
  %v4452 = vlaneseq
  %v4453 = vshrl.u32 %v4452, 7
  %v4454 = vsub.s32 %v4451, %v4453
  %v4455 = vrot.slane %v4441, %v4454
  %v4456 = vcombine.low %v4400, %v4416
  %v4457 = vcombine.high %v4400, %v4416
  %v4459 = vunpack.c.l.s4 1934713408
  %v4460 = vunpack.c.0.s8 %v4459
  %v4461 = vlaneseq
  %v4462 = vshrl.u32 %v4461, 7
  %v4463 = vsub.s32 %v4460, %v4462
  %v4464 = vrot.slane %v4456, %v4463
  %v4466 = vunpack.c.l.s4 1934713408
  %v4467 = vunpack.c.0.s8 %v4466
  %v4468 = vlaneseq
  %v4469 = vshrl.u32 %v4468, 7
  %v4470 = vsub.s32 %v4467, %v4469
  %v4471 = vrot.slane %v4457, %v4470
  %v4472 = vcombine.low %v4407, %v4423
  %v4473 = vcombine.high %v4407, %v4423
  %v4475 = vunpack.c.l.s4 1934713408
  %v4476 = vunpack.c.0.s8 %v4475
  %v4477 = vlaneseq
  %v4478 = vshrl.u32 %v4477, 7
  %v4479 = vsub.s32 %v4476, %v4478
  %v4480 = vrot.slane %v4472, %v4479
  %v4482 = vunpack.c.l.s4 1934713408
  %v4483 = vunpack.c.0.s8 %v4482
  %v4484 = vlaneseq
  %v4485 = vshrl.u32 %v4484, 7
  %v4486 = vsub.s32 %v4483, %v4485
  %v4487 = vrot.slane %v4473, %v4486
  %v4488 = vcombine.low %v4432, %v4464
  %v4489 = vcombine.high %v4432, %v4464
  %v4490 = vcombine.low %v4439, %v4471
  %v4491 = vcombine.high %v4439, %v4471
  %v4492 = vcombine.low %v4448, %v4480
  %v4493 = vcombine.high %v4448, %v4480
  %v4494 = vcombine.low %v4455, %v4487
  %v4495 = vcombine.high %v4455, %v4487
  %v4496 = vcombine.low %v934, %v972
  %v4497 = vcombine.high %v934, %v972
  %v4499 = vunpack.c.l.s4 1983009808
  %v4500 = vunpack.c.0.s8 %v4499
  %v4501 = vlaneseq
  %v4502 = vshrl.u32 %v4501, 7
  %v4503 = vsub.s32 %v4500, %v4502
  %v4504 = vrot.slane %v4496, %v4503
  %v4506 = vunpack.c.l.s4 1983009808
  %v4507 = vunpack.c.0.s8 %v4506
  %v4508 = vlaneseq
  %v4509 = vshrl.u32 %v4508, 7
  %v4510 = vsub.s32 %v4507, %v4509
  %v4511 = vrot.slane %v4497, %v4510
  %v4512 = vcombine.low %v953, %v991
  %v4513 = vcombine.high %v953, %v991
  %v4515 = vunpack.c.l.s4 1983009808
  %v4516 = vunpack.c.0.s8 %v4515
  %v4517 = vlaneseq
  %v4518 = vshrl.u32 %v4517, 7
  %v4519 = vsub.s32 %v4516, %v4518
  %v4520 = vrot.slane %v4512, %v4519
  %v4522 = vunpack.c.l.s4 1983009808
  %v4523 = vunpack.c.0.s8 %v4522
  %v4524 = vlaneseq
  %v4525 = vshrl.u32 %v4524, 7
  %v4526 = vsub.s32 %v4523, %v4525
  %v4527 = vrot.slane %v4513, %v4526
  %v4528 = vcombine.low %v1010, %v1048
  %v4529 = vcombine.high %v1010, %v1048
  %v4531 = vunpack.c.l.s4 1983009808
  %v4532 = vunpack.c.0.s8 %v4531
  %v4533 = vlaneseq
  %v4534 = vshrl.u32 %v4533, 7
  %v4535 = vsub.s32 %v4532, %v4534
  %v4536 = vrot.slane %v4528, %v4535
  %v4538 = vunpack.c.l.s4 1983009808
  %v4539 = vunpack.c.0.s8 %v4538
  %v4540 = vlaneseq
  %v4541 = vshrl.u32 %v4540, 7
  %v4542 = vsub.s32 %v4539, %v4541
  %v4543 = vrot.slane %v4529, %v4542
  %v4544 = vcombine.low %v1029, %v1067
  %v4545 = vcombine.high %v1029, %v1067
  %v4547 = vunpack.c.l.s4 1983009808
  %v4548 = vunpack.c.0.s8 %v4547
  %v4549 = vlaneseq
  %v4550 = vshrl.u32 %v4549, 7
  %v4551 = vsub.s32 %v4548, %v4550
  %v4552 = vrot.slane %v4544, %v4551
  %v4554 = vunpack.c.l.s4 1983009808
  %v4555 = vunpack.c.0.s8 %v4554
  %v4556 = vlaneseq
  %v4557 = vshrl.u32 %v4556, 7
  %v4558 = vsub.s32 %v4555, %v4557
  %v4559 = vrot.slane %v4545, %v4558
  %v4560 = vcombine.low %v4504, %v4520
  %v4561 = vcombine.high %v4504, %v4520
  %v4563 = vunpack.c.l.s4 1934713408
  %v4564 = vunpack.c.0.s8 %v4563
  %v4565 = vlaneseq
  %v4566 = vshrl.u32 %v4565, 7
  %v4567 = vsub.s32 %v4564, %v4566
  %v4568 = vrot.slane %v4560, %v4567
  %v4570 = vunpack.c.l.s4 1934713408
  %v4571 = vunpack.c.0.s8 %v4570
  %v4572 = vlaneseq
  %v4573 = vshrl.u32 %v4572, 7
  %v4574 = vsub.s32 %v4571, %v4573
  %v4575 = vrot.slane %v4561, %v4574
  %v4576 = vcombine.low %v4511, %v4527
  %v4577 = vcombine.high %v4511, %v4527
  %v4579 = vunpack.c.l.s4 1934713408
  %v4580 = vunpack.c.0.s8 %v4579
  %v4581 = vlaneseq
  %v4582 = vshrl.u32 %v4581, 7
  %v4583 = vsub.s32 %v4580, %v4582
  %v4584 = vrot.slane %v4576, %v4583
  %v4586 = vunpack.c.l.s4 1934713408
  %v4587 = vunpack.c.0.s8 %v4586
  %v4588 = vlaneseq
  %v4589 = vshrl.u32 %v4588, 7
  %v4590 = vsub.s32 %v4587, %v4589
  %v4591 = vrot.slane %v4577, %v4590
  %v4592 = vcombine.low %v4536, %v4552
  %v4593 = vcombine.high %v4536, %v4552
  %v4595 = vunpack.c.l.s4 1934713408
  %v4596 = vunpack.c.0.s8 %v4595
  %v4597 = vlaneseq
  %v4598 = vshrl.u32 %v4597, 7
  %v4599 = vsub.s32 %v4596, %v4598
  %v4600 = vrot.slane %v4592, %v4599
  %v4602 = vunpack.c.l.s4 1934713408
  %v4603 = vunpack.c.0.s8 %v4602
  %v4604 = vlaneseq
  %v4605 = vshrl.u32 %v4604, 7
  %v4606 = vsub.s32 %v4603, %v4605
  %v4607 = vrot.slane %v4593, %v4606
  %v4608 = vcombine.low %v4543, %v4559
  %v4609 = vcombine.high %v4543, %v4559
  %v4611 = vunpack.c.l.s4 1934713408
  %v4612 = vunpack.c.0.s8 %v4611
  %v4613 = vlaneseq
  %v4614 = vshrl.u32 %v4613, 7
  %v4615 = vsub.s32 %v4612, %v4614
  %v4616 = vrot.slane %v4608, %v4615
  %v4618 = vunpack.c.l.s4 1934713408
  %v4619 = vunpack.c.0.s8 %v4618
  %v4620 = vlaneseq
  %v4621 = vshrl.u32 %v4620, 7
  %v4622 = vsub.s32 %v4619, %v4621
  %v4623 = vrot.slane %v4609, %v4622
  %v4624 = vcombine.low %v4568, %v4600
  %v4625 = vcombine.high %v4568, %v4600
  %v4626 = vcombine.low %v4575, %v4607
  %v4627 = vcombine.high %v4575, %v4607
  %v4628 = vcombine.low %v4584, %v4616
  %v4629 = vcombine.high %v4584, %v4616
  %v4630 = vcombine.low %v4591, %v4623
  %v4631 = vcombine.high %v4591, %v4623
  %v4632 = vcombine.low %v938, %v976
  %v4633 = vcombine.high %v938, %v976
  %v4635 = vunpack.c.l.s4 1983009808
  %v4636 = vunpack.c.0.s8 %v4635
  %v4637 = vlaneseq
  %v4638 = vshrl.u32 %v4637, 7
  %v4639 = vsub.s32 %v4636, %v4638
  %v4640 = vrot.slane %v4632, %v4639
  %v4642 = vunpack.c.l.s4 1983009808
  %v4643 = vunpack.c.0.s8 %v4642
  %v4644 = vlaneseq
  %v4645 = vshrl.u32 %v4644, 7
  %v4646 = vsub.s32 %v4643, %v4645
  %v4647 = vrot.slane %v4633, %v4646
  %v4648 = vcombine.low %v957, %v995
  %v4649 = vcombine.high %v957, %v995
  %v4651 = vunpack.c.l.s4 1983009808
  %v4652 = vunpack.c.0.s8 %v4651
  %v4653 = vlaneseq
  %v4654 = vshrl.u32 %v4653, 7
  %v4655 = vsub.s32 %v4652, %v4654
  %v4656 = vrot.slane %v4648, %v4655
  %v4658 = vunpack.c.l.s4 1983009808
  %v4659 = vunpack.c.0.s8 %v4658
  %v4660 = vlaneseq
  %v4661 = vshrl.u32 %v4660, 7
  %v4662 = vsub.s32 %v4659, %v4661
  %v4663 = vrot.slane %v4649, %v4662
  %v4664 = vcombine.low %v1014, %v1052
  %v4665 = vcombine.high %v1014, %v1052
  %v4667 = vunpack.c.l.s4 1983009808
  %v4668 = vunpack.c.0.s8 %v4667
  %v4669 = vlaneseq
  %v4670 = vshrl.u32 %v4669, 7
  %v4671 = vsub.s32 %v4668, %v4670
  %v4672 = vrot.slane %v4664, %v4671
  %v4674 = vunpack.c.l.s4 1983009808
  %v4675 = vunpack.c.0.s8 %v4674
  %v4676 = vlaneseq
  %v4677 = vshrl.u32 %v4676, 7
  %v4678 = vsub.s32 %v4675, %v4677
  %v4679 = vrot.slane %v4665, %v4678
  %v4680 = vcombine.low %v1033, %v1071
  %v4681 = vcombine.high %v1033, %v1071
  %v4683 = vunpack.c.l.s4 1983009808
  %v4684 = vunpack.c.0.s8 %v4683
  %v4685 = vlaneseq
  %v4686 = vshrl.u32 %v4685, 7
  %v4687 = vsub.s32 %v4684, %v4686
  %v4688 = vrot.slane %v4680, %v4687
  %v4690 = vunpack.c.l.s4 1983009808
  %v4691 = vunpack.c.0.s8 %v4690
  %v4692 = vlaneseq
  %v4693 = vshrl.u32 %v4692, 7
  %v4694 = vsub.s32 %v4691, %v4693
  %v4695 = vrot.slane %v4681, %v4694
  %v4696 = vcombine.low %v4640, %v4656
  %v4697 = vcombine.high %v4640, %v4656
  %v4699 = vunpack.c.l.s4 1934713408
  %v4700 = vunpack.c.0.s8 %v4699
  %v4701 = vlaneseq
  %v4702 = vshrl.u32 %v4701, 7
  %v4703 = vsub.s32 %v4700, %v4702
  %v4704 = vrot.slane %v4696, %v4703
  %v4706 = vunpack.c.l.s4 1934713408
  %v4707 = vunpack.c.0.s8 %v4706
  %v4708 = vlaneseq
  %v4709 = vshrl.u32 %v4708, 7
  %v4710 = vsub.s32 %v4707, %v4709
  %v4711 = vrot.slane %v4697, %v4710
  %v4712 = vcombine.low %v4647, %v4663
  %v4713 = vcombine.high %v4647, %v4663
  %v4715 = vunpack.c.l.s4 1934713408
  %v4716 = vunpack.c.0.s8 %v4715
  %v4717 = vlaneseq
  %v4718 = vshrl.u32 %v4717, 7
  %v4719 = vsub.s32 %v4716, %v4718
  %v4720 = vrot.slane %v4712, %v4719
  %v4722 = vunpack.c.l.s4 1934713408
  %v4723 = vunpack.c.0.s8 %v4722
  %v4724 = vlaneseq
  %v4725 = vshrl.u32 %v4724, 7
  %v4726 = vsub.s32 %v4723, %v4725
  %v4727 = vrot.slane %v4713, %v4726
  %v4728 = vcombine.low %v4672, %v4688
  %v4729 = vcombine.high %v4672, %v4688
  %v4731 = vunpack.c.l.s4 1934713408
  %v4732 = vunpack.c.0.s8 %v4731
  %v4733 = vlaneseq
  %v4734 = vshrl.u32 %v4733, 7
  %v4735 = vsub.s32 %v4732, %v4734
  %v4736 = vrot.slane %v4728, %v4735
  %v4738 = vunpack.c.l.s4 1934713408
  %v4739 = vunpack.c.0.s8 %v4738
  %v4740 = vlaneseq
  %v4741 = vshrl.u32 %v4740, 7
  %v4742 = vsub.s32 %v4739, %v4741
  %v4743 = vrot.slane %v4729, %v4742
  %v4744 = vcombine.low %v4679, %v4695
  %v4745 = vcombine.high %v4679, %v4695
  %v4747 = vunpack.c.l.s4 1934713408
  %v4748 = vunpack.c.0.s8 %v4747
  %v4749 = vlaneseq
  %v4750 = vshrl.u32 %v4749, 7
  %v4751 = vsub.s32 %v4748, %v4750
  %v4752 = vrot.slane %v4744, %v4751
  %v4754 = vunpack.c.l.s4 1934713408
  %v4755 = vunpack.c.0.s8 %v4754
  %v4756 = vlaneseq
  %v4757 = vshrl.u32 %v4756, 7
  %v4758 = vsub.s32 %v4755, %v4757
  %v4759 = vrot.slane %v4745, %v4758
  %v4760 = vcombine.low %v4704, %v4736
  %v4761 = vcombine.high %v4704, %v4736
  %v4762 = vcombine.low %v4711, %v4743
  %v4763 = vcombine.high %v4711, %v4743
  %v4764 = vcombine.low %v4720, %v4752
  %v4765 = vcombine.high %v4720, %v4752
  %v4766 = vcombine.low %v4727, %v4759
  %v4767 = vcombine.high %v4727, %v4759
  %v4768 = vcombine.low %v942, %v980
  %v4769 = vcombine.high %v942, %v980
  %v4771 = vunpack.c.l.s4 1983009808
  %v4772 = vunpack.c.0.s8 %v4771
  %v4773 = vlaneseq
  %v4774 = vshrl.u32 %v4773, 7
  %v4775 = vsub.s32 %v4772, %v4774
  %v4776 = vrot.slane %v4768, %v4775
  %v4778 = vunpack.c.l.s4 1983009808
  %v4779 = vunpack.c.0.s8 %v4778
  %v4780 = vlaneseq
  %v4781 = vshrl.u32 %v4780, 7
  %v4782 = vsub.s32 %v4779, %v4781
  %v4783 = vrot.slane %v4769, %v4782
  %v4784 = vcombine.low %v961, %v999
  %v4785 = vcombine.high %v961, %v999
  %v4787 = vunpack.c.l.s4 1983009808
  %v4788 = vunpack.c.0.s8 %v4787
  %v4789 = vlaneseq
  %v4790 = vshrl.u32 %v4789, 7
  %v4791 = vsub.s32 %v4788, %v4790
  %v4792 = vrot.slane %v4784, %v4791
  %v4794 = vunpack.c.l.s4 1983009808
  %v4795 = vunpack.c.0.s8 %v4794
  %v4796 = vlaneseq
  %v4797 = vshrl.u32 %v4796, 7
  %v4798 = vsub.s32 %v4795, %v4797
  %v4799 = vrot.slane %v4785, %v4798
  %v4800 = vcombine.low %v1018, %v1056
  %v4801 = vcombine.high %v1018, %v1056
  %v4803 = vunpack.c.l.s4 1983009808
  %v4804 = vunpack.c.0.s8 %v4803
  %v4805 = vlaneseq
  %v4806 = vshrl.u32 %v4805, 7
  %v4807 = vsub.s32 %v4804, %v4806
  %v4808 = vrot.slane %v4800, %v4807
  %v4810 = vunpack.c.l.s4 1983009808
  %v4811 = vunpack.c.0.s8 %v4810
  %v4812 = vlaneseq
  %v4813 = vshrl.u32 %v4812, 7
  %v4814 = vsub.s32 %v4811, %v4813
  %v4815 = vrot.slane %v4801, %v4814
  %v4816 = vcombine.low %v1037, %v1075
  %v4817 = vcombine.high %v1037, %v1075
  %v4819 = vunpack.c.l.s4 1983009808
  %v4820 = vunpack.c.0.s8 %v4819
  %v4821 = vlaneseq
  %v4822 = vshrl.u32 %v4821, 7
  %v4823 = vsub.s32 %v4820, %v4822
  %v4824 = vrot.slane %v4816, %v4823
  %v4826 = vunpack.c.l.s4 1983009808
  %v4827 = vunpack.c.0.s8 %v4826
  %v4828 = vlaneseq
  %v4829 = vshrl.u32 %v4828, 7
  %v4830 = vsub.s32 %v4827, %v4829
  %v4831 = vrot.slane %v4817, %v4830
  %v4832 = vcombine.low %v4776, %v4792
  %v4833 = vcombine.high %v4776, %v4792
  %v4835 = vunpack.c.l.s4 1934713408
  %v4836 = vunpack.c.0.s8 %v4835
  %v4837 = vlaneseq
  %v4838 = vshrl.u32 %v4837, 7
  %v4839 = vsub.s32 %v4836, %v4838
  %v4840 = vrot.slane %v4832, %v4839
  %v4842 = vunpack.c.l.s4 1934713408
  %v4843 = vunpack.c.0.s8 %v4842
  %v4844 = vlaneseq
  %v4845 = vshrl.u32 %v4844, 7
  %v4846 = vsub.s32 %v4843, %v4845
  %v4847 = vrot.slane %v4833, %v4846
  %v4848 = vcombine.low %v4783, %v4799
  %v4849 = vcombine.high %v4783, %v4799
  %v4851 = vunpack.c.l.s4 1934713408
  %v4852 = vunpack.c.0.s8 %v4851
  %v4853 = vlaneseq
  %v4854 = vshrl.u32 %v4853, 7
  %v4855 = vsub.s32 %v4852, %v4854
  %v4856 = vrot.slane %v4848, %v4855
  %v4858 = vunpack.c.l.s4 1934713408
  %v4859 = vunpack.c.0.s8 %v4858
  %v4860 = vlaneseq
  %v4861 = vshrl.u32 %v4860, 7
  %v4862 = vsub.s32 %v4859, %v4861
  %v4863 = vrot.slane %v4849, %v4862
  %v4864 = vcombine.low %v4808, %v4824
  %v4865 = vcombine.high %v4808, %v4824
  %v4867 = vunpack.c.l.s4 1934713408
  %v4868 = vunpack.c.0.s8 %v4867
  %v4869 = vlaneseq
  %v4870 = vshrl.u32 %v4869, 7
  %v4871 = vsub.s32 %v4868, %v4870
  %v4872 = vrot.slane %v4864, %v4871
  %v4874 = vunpack.c.l.s4 1934713408
  %v4875 = vunpack.c.0.s8 %v4874
  %v4876 = vlaneseq
  %v4877 = vshrl.u32 %v4876, 7
  %v4878 = vsub.s32 %v4875, %v4877
  %v4879 = vrot.slane %v4865, %v4878
  %v4880 = vcombine.low %v4815, %v4831
  %v4881 = vcombine.high %v4815, %v4831
  %v4883 = vunpack.c.l.s4 1934713408
  %v4884 = vunpack.c.0.s8 %v4883
  %v4885 = vlaneseq
  %v4886 = vshrl.u32 %v4885, 7
  %v4887 = vsub.s32 %v4884, %v4886
  %v4888 = vrot.slane %v4880, %v4887
  %v4890 = vunpack.c.l.s4 1934713408
  %v4891 = vunpack.c.0.s8 %v4890
  %v4892 = vlaneseq
  %v4893 = vshrl.u32 %v4892, 7
  %v4894 = vsub.s32 %v4891, %v4893
  %v4895 = vrot.slane %v4881, %v4894
  %v4896 = vcombine.low %v4840, %v4872
  %v4897 = vcombine.high %v4840, %v4872
  %v4898 = vcombine.low %v4847, %v4879
  %v4899 = vcombine.high %v4847, %v4879
  %v4900 = vcombine.low %v4856, %v4888
  %v4901 = vcombine.high %v4856, %v4888
  %v4902 = vcombine.low %v4863, %v4895
  %v4903 = vcombine.high %v4863, %v4895
  %v4904 = vcombine.low %v946, %v984
  %v4905 = vcombine.high %v946, %v984
  %v4907 = vunpack.c.l.s4 1983009808
  %v4908 = vunpack.c.0.s8 %v4907
  %v4909 = vlaneseq
  %v4910 = vshrl.u32 %v4909, 7
  %v4911 = vsub.s32 %v4908, %v4910
  %v4912 = vrot.slane %v4904, %v4911
  %v4914 = vunpack.c.l.s4 1983009808
  %v4915 = vunpack.c.0.s8 %v4914
  %v4916 = vlaneseq
  %v4917 = vshrl.u32 %v4916, 7
  %v4918 = vsub.s32 %v4915, %v4917
  %v4919 = vrot.slane %v4905, %v4918
  %v4920 = vcombine.low %v965, %v1003
  %v4921 = vcombine.high %v965, %v1003
  %v4923 = vunpack.c.l.s4 1983009808
  %v4924 = vunpack.c.0.s8 %v4923
  %v4925 = vlaneseq
  %v4926 = vshrl.u32 %v4925, 7
  %v4927 = vsub.s32 %v4924, %v4926
  %v4928 = vrot.slane %v4920, %v4927
  %v4930 = vunpack.c.l.s4 1983009808
  %v4931 = vunpack.c.0.s8 %v4930
  %v4932 = vlaneseq
  %v4933 = vshrl.u32 %v4932, 7
  %v4934 = vsub.s32 %v4931, %v4933
  %v4935 = vrot.slane %v4921, %v4934
  %v4936 = vcombine.low %v1022, %v1060
  %v4937 = vcombine.high %v1022, %v1060
  %v4939 = vunpack.c.l.s4 1983009808
  %v4940 = vunpack.c.0.s8 %v4939
  %v4941 = vlaneseq
  %v4942 = vshrl.u32 %v4941, 7
  %v4943 = vsub.s32 %v4940, %v4942
  %v4944 = vrot.slane %v4936, %v4943
  %v4946 = vunpack.c.l.s4 1983009808
  %v4947 = vunpack.c.0.s8 %v4946
  %v4948 = vlaneseq
  %v4949 = vshrl.u32 %v4948, 7
  %v4950 = vsub.s32 %v4947, %v4949
  %v4951 = vrot.slane %v4937, %v4950
  %v4952 = vcombine.low %v1041, %v1079
  %v4953 = vcombine.high %v1041, %v1079
  %v4955 = vunpack.c.l.s4 1983009808
  %v4956 = vunpack.c.0.s8 %v4955
  %v4957 = vlaneseq
  %v4958 = vshrl.u32 %v4957, 7
  %v4959 = vsub.s32 %v4956, %v4958
  %v4960 = vrot.slane %v4952, %v4959
  %v4962 = vunpack.c.l.s4 1983009808
  %v4963 = vunpack.c.0.s8 %v4962
  %v4964 = vlaneseq
  %v4965 = vshrl.u32 %v4964, 7
  %v4966 = vsub.s32 %v4963, %v4965
  %v4967 = vrot.slane %v4953, %v4966
  %v4968 = vcombine.low %v4912, %v4928
  %v4969 = vcombine.high %v4912, %v4928
  %v4971 = vunpack.c.l.s4 1934713408
  %v4972 = vunpack.c.0.s8 %v4971
  %v4973 = vlaneseq
  %v4974 = vshrl.u32 %v4973, 7
  %v4975 = vsub.s32 %v4972, %v4974
  %v4976 = vrot.slane %v4968, %v4975
  %v4978 = vunpack.c.l.s4 1934713408
  %v4979 = vunpack.c.0.s8 %v4978
  %v4980 = vlaneseq
  %v4981 = vshrl.u32 %v4980, 7
  %v4982 = vsub.s32 %v4979, %v4981
  %v4983 = vrot.slane %v4969, %v4982
  %v4984 = vcombine.low %v4919, %v4935
  %v4985 = vcombine.high %v4919, %v4935
  %v4987 = vunpack.c.l.s4 1934713408
  %v4988 = vunpack.c.0.s8 %v4987
  %v4989 = vlaneseq
  %v4990 = vshrl.u32 %v4989, 7
  %v4991 = vsub.s32 %v4988, %v4990
  %v4992 = vrot.slane %v4984, %v4991
  %v4994 = vunpack.c.l.s4 1934713408
  %v4995 = vunpack.c.0.s8 %v4994
  %v4996 = vlaneseq
  %v4997 = vshrl.u32 %v4996, 7
  %v4998 = vsub.s32 %v4995, %v4997
  %v4999 = vrot.slane %v4985, %v4998
  %v5000 = vcombine.low %v4944, %v4960
  %v5001 = vcombine.high %v4944, %v4960
  %v5003 = vunpack.c.l.s4 1934713408
  %v5004 = vunpack.c.0.s8 %v5003
  %v5005 = vlaneseq
  %v5006 = vshrl.u32 %v5005, 7
  %v5007 = vsub.s32 %v5004, %v5006
  %v5008 = vrot.slane %v5000, %v5007
  %v5010 = vunpack.c.l.s4 1934713408
  %v5011 = vunpack.c.0.s8 %v5010
  %v5012 = vlaneseq
  %v5013 = vshrl.u32 %v5012, 7
  %v5014 = vsub.s32 %v5011, %v5013
  %v5015 = vrot.slane %v5001, %v5014
  %v5016 = vcombine.low %v4951, %v4967
  %v5017 = vcombine.high %v4951, %v4967
  %v5019 = vunpack.c.l.s4 1934713408
  %v5020 = vunpack.c.0.s8 %v5019
  %v5021 = vlaneseq
  %v5022 = vshrl.u32 %v5021, 7
  %v5023 = vsub.s32 %v5020, %v5022
  %v5024 = vrot.slane %v5016, %v5023
  %v5026 = vunpack.c.l.s4 1934713408
  %v5027 = vunpack.c.0.s8 %v5026
  %v5028 = vlaneseq
  %v5029 = vshrl.u32 %v5028, 7
  %v5030 = vsub.s32 %v5027, %v5029
  %v5031 = vrot.slane %v5017, %v5030
  %v5032 = vcombine.low %v4976, %v5008
  %v5033 = vcombine.high %v4976, %v5008
  %v5034 = vcombine.low %v4983, %v5015
  %v5035 = vcombine.high %v4983, %v5015
  %v5036 = vcombine.low %v4992, %v5024
  %v5037 = vcombine.high %v4992, %v5024
  %v5038 = vcombine.low %v4999, %v5031
  %v5039 = vcombine.high %v4999, %v5031
  %v5040 = vcombine.low %v1086, %v1124
  %v5041 = vcombine.high %v1086, %v1124
  %v5043 = vunpack.c.l.s4 1983009808
  %v5044 = vunpack.c.0.s8 %v5043
  %v5045 = vlaneseq
  %v5046 = vshrl.u32 %v5045, 7
  %v5047 = vsub.s32 %v5044, %v5046
  %v5048 = vrot.slane %v5040, %v5047
  %v5050 = vunpack.c.l.s4 1983009808
  %v5051 = vunpack.c.0.s8 %v5050
  %v5052 = vlaneseq
  %v5053 = vshrl.u32 %v5052, 7
  %v5054 = vsub.s32 %v5051, %v5053
  %v5055 = vrot.slane %v5041, %v5054
  %v5056 = vcombine.low %v1105, %v1143
  %v5057 = vcombine.high %v1105, %v1143
  %v5059 = vunpack.c.l.s4 1983009808
  %v5060 = vunpack.c.0.s8 %v5059
  %v5061 = vlaneseq
  %v5062 = vshrl.u32 %v5061, 7
  %v5063 = vsub.s32 %v5060, %v5062
  %v5064 = vrot.slane %v5056, %v5063
  %v5066 = vunpack.c.l.s4 1983009808
  %v5067 = vunpack.c.0.s8 %v5066
  %v5068 = vlaneseq
  %v5069 = vshrl.u32 %v5068, 7
  %v5070 = vsub.s32 %v5067, %v5069
  %v5071 = vrot.slane %v5057, %v5070
  %v5072 = vcombine.low %v1162, %v1200
  %v5073 = vcombine.high %v1162, %v1200
  %v5075 = vunpack.c.l.s4 1983009808
  %v5076 = vunpack.c.0.s8 %v5075
  %v5077 = vlaneseq
  %v5078 = vshrl.u32 %v5077, 7
  %v5079 = vsub.s32 %v5076, %v5078
  %v5080 = vrot.slane %v5072, %v5079
  %v5082 = vunpack.c.l.s4 1983009808
  %v5083 = vunpack.c.0.s8 %v5082
  %v5084 = vlaneseq
  %v5085 = vshrl.u32 %v5084, 7
  %v5086 = vsub.s32 %v5083, %v5085
  %v5087 = vrot.slane %v5073, %v5086
  %v5088 = vcombine.low %v1181, %v1219
  %v5089 = vcombine.high %v1181, %v1219
  %v5091 = vunpack.c.l.s4 1983009808
  %v5092 = vunpack.c.0.s8 %v5091
  %v5093 = vlaneseq
  %v5094 = vshrl.u32 %v5093, 7
  %v5095 = vsub.s32 %v5092, %v5094
  %v5096 = vrot.slane %v5088, %v5095
  %v5098 = vunpack.c.l.s4 1983009808
  %v5099 = vunpack.c.0.s8 %v5098
  %v5100 = vlaneseq
  %v5101 = vshrl.u32 %v5100, 7
  %v5102 = vsub.s32 %v5099, %v5101
  %v5103 = vrot.slane %v5089, %v5102
  %v5104 = vcombine.low %v5048, %v5064
  %v5105 = vcombine.high %v5048, %v5064
  %v5107 = vunpack.c.l.s4 1934713408
  %v5108 = vunpack.c.0.s8 %v5107
  %v5109 = vlaneseq
  %v5110 = vshrl.u32 %v5109, 7
  %v5111 = vsub.s32 %v5108, %v5110
  %v5112 = vrot.slane %v5104, %v5111
  %v5114 = vunpack.c.l.s4 1934713408
  %v5115 = vunpack.c.0.s8 %v5114
  %v5116 = vlaneseq
  %v5117 = vshrl.u32 %v5116, 7
  %v5118 = vsub.s32 %v5115, %v5117
  %v5119 = vrot.slane %v5105, %v5118
  %v5120 = vcombine.low %v5055, %v5071
  %v5121 = vcombine.high %v5055, %v5071
  %v5123 = vunpack.c.l.s4 1934713408
  %v5124 = vunpack.c.0.s8 %v5123
  %v5125 = vlaneseq
  %v5126 = vshrl.u32 %v5125, 7
  %v5127 = vsub.s32 %v5124, %v5126
  %v5128 = vrot.slane %v5120, %v5127
  %v5130 = vunpack.c.l.s4 1934713408
  %v5131 = vunpack.c.0.s8 %v5130
  %v5132 = vlaneseq
  %v5133 = vshrl.u32 %v5132, 7
  %v5134 = vsub.s32 %v5131, %v5133
  %v5135 = vrot.slane %v5121, %v5134
  %v5136 = vcombine.low %v5080, %v5096
  %v5137 = vcombine.high %v5080, %v5096
  %v5139 = vunpack.c.l.s4 1934713408
  %v5140 = vunpack.c.0.s8 %v5139
  %v5141 = vlaneseq
  %v5142 = vshrl.u32 %v5141, 7
  %v5143 = vsub.s32 %v5140, %v5142
  %v5144 = vrot.slane %v5136, %v5143
  %v5146 = vunpack.c.l.s4 1934713408
  %v5147 = vunpack.c.0.s8 %v5146
  %v5148 = vlaneseq
  %v5149 = vshrl.u32 %v5148, 7
  %v5150 = vsub.s32 %v5147, %v5149
  %v5151 = vrot.slane %v5137, %v5150
  %v5152 = vcombine.low %v5087, %v5103
  %v5153 = vcombine.high %v5087, %v5103
  %v5155 = vunpack.c.l.s4 1934713408
  %v5156 = vunpack.c.0.s8 %v5155
  %v5157 = vlaneseq
  %v5158 = vshrl.u32 %v5157, 7
  %v5159 = vsub.s32 %v5156, %v5158
  %v5160 = vrot.slane %v5152, %v5159
  %v5162 = vunpack.c.l.s4 1934713408
  %v5163 = vunpack.c.0.s8 %v5162
  %v5164 = vlaneseq
  %v5165 = vshrl.u32 %v5164, 7
  %v5166 = vsub.s32 %v5163, %v5165
  %v5167 = vrot.slane %v5153, %v5166
  %v5168 = vcombine.low %v5112, %v5144
  %v5169 = vcombine.high %v5112, %v5144
  %v5170 = vcombine.low %v5119, %v5151
  %v5171 = vcombine.high %v5119, %v5151
  %v5172 = vcombine.low %v5128, %v5160
  %v5173 = vcombine.high %v5128, %v5160
  %v5174 = vcombine.low %v5135, %v5167
  %v5175 = vcombine.high %v5135, %v5167
  %v5176 = vcombine.low %v1090, %v1128
  %v5177 = vcombine.high %v1090, %v1128
  %v5179 = vunpack.c.l.s4 1983009808
  %v5180 = vunpack.c.0.s8 %v5179
  %v5181 = vlaneseq
  %v5182 = vshrl.u32 %v5181, 7
  %v5183 = vsub.s32 %v5180, %v5182
  %v5184 = vrot.slane %v5176, %v5183
  %v5186 = vunpack.c.l.s4 1983009808
  %v5187 = vunpack.c.0.s8 %v5186
  %v5188 = vlaneseq
  %v5189 = vshrl.u32 %v5188, 7
  %v5190 = vsub.s32 %v5187, %v5189
  %v5191 = vrot.slane %v5177, %v5190
  %v5192 = vcombine.low %v1109, %v1147
  %v5193 = vcombine.high %v1109, %v1147
  %v5195 = vunpack.c.l.s4 1983009808
  %v5196 = vunpack.c.0.s8 %v5195
  %v5197 = vlaneseq
  %v5198 = vshrl.u32 %v5197, 7
  %v5199 = vsub.s32 %v5196, %v5198
  %v5200 = vrot.slane %v5192, %v5199
  %v5202 = vunpack.c.l.s4 1983009808
  %v5203 = vunpack.c.0.s8 %v5202
  %v5204 = vlaneseq
  %v5205 = vshrl.u32 %v5204, 7
  %v5206 = vsub.s32 %v5203, %v5205
  %v5207 = vrot.slane %v5193, %v5206
  %v5208 = vcombine.low %v1166, %v1204
  %v5209 = vcombine.high %v1166, %v1204
  %v5211 = vunpack.c.l.s4 1983009808
  %v5212 = vunpack.c.0.s8 %v5211
  %v5213 = vlaneseq
  %v5214 = vshrl.u32 %v5213, 7
  %v5215 = vsub.s32 %v5212, %v5214
  %v5216 = vrot.slane %v5208, %v5215
  %v5218 = vunpack.c.l.s4 1983009808
  %v5219 = vunpack.c.0.s8 %v5218
  %v5220 = vlaneseq
  %v5221 = vshrl.u32 %v5220, 7
  %v5222 = vsub.s32 %v5219, %v5221
  %v5223 = vrot.slane %v5209, %v5222
  %v5224 = vcombine.low %v1185, %v1223
  %v5225 = vcombine.high %v1185, %v1223
  %v5227 = vunpack.c.l.s4 1983009808
  %v5228 = vunpack.c.0.s8 %v5227
  %v5229 = vlaneseq
  %v5230 = vshrl.u32 %v5229, 7
  %v5231 = vsub.s32 %v5228, %v5230
  %v5232 = vrot.slane %v5224, %v5231
  %v5234 = vunpack.c.l.s4 1983009808
  %v5235 = vunpack.c.0.s8 %v5234
  %v5236 = vlaneseq
  %v5237 = vshrl.u32 %v5236, 7
  %v5238 = vsub.s32 %v5235, %v5237
  %v5239 = vrot.slane %v5225, %v5238
  %v5240 = vcombine.low %v5184, %v5200
  %v5241 = vcombine.high %v5184, %v5200
  %v5243 = vunpack.c.l.s4 1934713408
  %v5244 = vunpack.c.0.s8 %v5243
  %v5245 = vlaneseq
  %v5246 = vshrl.u32 %v5245, 7
  %v5247 = vsub.s32 %v5244, %v5246
  %v5248 = vrot.slane %v5240, %v5247
  %v5250 = vunpack.c.l.s4 1934713408
  %v5251 = vunpack.c.0.s8 %v5250
  %v5252 = vlaneseq
  %v5253 = vshrl.u32 %v5252, 7
  %v5254 = vsub.s32 %v5251, %v5253
  %v5255 = vrot.slane %v5241, %v5254
  %v5256 = vcombine.low %v5191, %v5207
  %v5257 = vcombine.high %v5191, %v5207
  %v5259 = vunpack.c.l.s4 1934713408
  %v5260 = vunpack.c.0.s8 %v5259
  %v5261 = vlaneseq
  %v5262 = vshrl.u32 %v5261, 7
  %v5263 = vsub.s32 %v5260, %v5262
  %v5264 = vrot.slane %v5256, %v5263
  %v5266 = vunpack.c.l.s4 1934713408
  %v5267 = vunpack.c.0.s8 %v5266
  %v5268 = vlaneseq
  %v5269 = vshrl.u32 %v5268, 7
  %v5270 = vsub.s32 %v5267, %v5269
  %v5271 = vrot.slane %v5257, %v5270
  %v5272 = vcombine.low %v5216, %v5232
  %v5273 = vcombine.high %v5216, %v5232
  %v5275 = vunpack.c.l.s4 1934713408
  %v5276 = vunpack.c.0.s8 %v5275
  %v5277 = vlaneseq
  %v5278 = vshrl.u32 %v5277, 7
  %v5279 = vsub.s32 %v5276, %v5278
  %v5280 = vrot.slane %v5272, %v5279
  %v5282 = vunpack.c.l.s4 1934713408
  %v5283 = vunpack.c.0.s8 %v5282
  %v5284 = vlaneseq
  %v5285 = vshrl.u32 %v5284, 7
  %v5286 = vsub.s32 %v5283, %v5285
  %v5287 = vrot.slane %v5273, %v5286
  %v5288 = vcombine.low %v5223, %v5239
  %v5289 = vcombine.high %v5223, %v5239
  %v5291 = vunpack.c.l.s4 1934713408
  %v5292 = vunpack.c.0.s8 %v5291
  %v5293 = vlaneseq
  %v5294 = vshrl.u32 %v5293, 7
  %v5295 = vsub.s32 %v5292, %v5294
  %v5296 = vrot.slane %v5288, %v5295
  %v5298 = vunpack.c.l.s4 1934713408
  %v5299 = vunpack.c.0.s8 %v5298
  %v5300 = vlaneseq
  %v5301 = vshrl.u32 %v5300, 7
  %v5302 = vsub.s32 %v5299, %v5301
  %v5303 = vrot.slane %v5289, %v5302
  %v5304 = vcombine.low %v5248, %v5280
  %v5305 = vcombine.high %v5248, %v5280
  %v5306 = vcombine.low %v5255, %v5287
  %v5307 = vcombine.high %v5255, %v5287
  %v5308 = vcombine.low %v5264, %v5296
  %v5309 = vcombine.high %v5264, %v5296
  %v5310 = vcombine.low %v5271, %v5303
  %v5311 = vcombine.high %v5271, %v5303
  %v5312 = vcombine.low %v1094, %v1132
  %v5313 = vcombine.high %v1094, %v1132
  %v5315 = vunpack.c.l.s4 1983009808
  %v5316 = vunpack.c.0.s8 %v5315
  %v5317 = vlaneseq
  %v5318 = vshrl.u32 %v5317, 7
  %v5319 = vsub.s32 %v5316, %v5318
  %v5320 = vrot.slane %v5312, %v5319
  %v5322 = vunpack.c.l.s4 1983009808
  %v5323 = vunpack.c.0.s8 %v5322
  %v5324 = vlaneseq
  %v5325 = vshrl.u32 %v5324, 7
  %v5326 = vsub.s32 %v5323, %v5325
  %v5327 = vrot.slane %v5313, %v5326
  %v5328 = vcombine.low %v1113, %v1151
  %v5329 = vcombine.high %v1113, %v1151
  %v5331 = vunpack.c.l.s4 1983009808
  %v5332 = vunpack.c.0.s8 %v5331
  %v5333 = vlaneseq
  %v5334 = vshrl.u32 %v5333, 7
  %v5335 = vsub.s32 %v5332, %v5334
  %v5336 = vrot.slane %v5328, %v5335
  %v5338 = vunpack.c.l.s4 1983009808
  %v5339 = vunpack.c.0.s8 %v5338
  %v5340 = vlaneseq
  %v5341 = vshrl.u32 %v5340, 7
  %v5342 = vsub.s32 %v5339, %v5341
  %v5343 = vrot.slane %v5329, %v5342
  %v5344 = vcombine.low %v1170, %v1208
  %v5345 = vcombine.high %v1170, %v1208
  %v5347 = vunpack.c.l.s4 1983009808
  %v5348 = vunpack.c.0.s8 %v5347
  %v5349 = vlaneseq
  %v5350 = vshrl.u32 %v5349, 7
  %v5351 = vsub.s32 %v5348, %v5350
  %v5352 = vrot.slane %v5344, %v5351
  %v5354 = vunpack.c.l.s4 1983009808
  %v5355 = vunpack.c.0.s8 %v5354
  %v5356 = vlaneseq
  %v5357 = vshrl.u32 %v5356, 7
  %v5358 = vsub.s32 %v5355, %v5357
  %v5359 = vrot.slane %v5345, %v5358
  %v5360 = vcombine.low %v1189, %v1227
  %v5361 = vcombine.high %v1189, %v1227
  %v5363 = vunpack.c.l.s4 1983009808
  %v5364 = vunpack.c.0.s8 %v5363
  %v5365 = vlaneseq
  %v5366 = vshrl.u32 %v5365, 7
  %v5367 = vsub.s32 %v5364, %v5366
  %v5368 = vrot.slane %v5360, %v5367
  %v5370 = vunpack.c.l.s4 1983009808
  %v5371 = vunpack.c.0.s8 %v5370
  %v5372 = vlaneseq
  %v5373 = vshrl.u32 %v5372, 7
  %v5374 = vsub.s32 %v5371, %v5373
  %v5375 = vrot.slane %v5361, %v5374
  %v5376 = vcombine.low %v5320, %v5336
  %v5377 = vcombine.high %v5320, %v5336
  %v5379 = vunpack.c.l.s4 1934713408
  %v5380 = vunpack.c.0.s8 %v5379
  %v5381 = vlaneseq
  %v5382 = vshrl.u32 %v5381, 7
  %v5383 = vsub.s32 %v5380, %v5382
  %v5384 = vrot.slane %v5376, %v5383
  %v5386 = vunpack.c.l.s4 1934713408
  %v5387 = vunpack.c.0.s8 %v5386
  %v5388 = vlaneseq
  %v5389 = vshrl.u32 %v5388, 7
  %v5390 = vsub.s32 %v5387, %v5389
  %v5391 = vrot.slane %v5377, %v5390
  %v5392 = vcombine.low %v5327, %v5343
  %v5393 = vcombine.high %v5327, %v5343
  %v5395 = vunpack.c.l.s4 1934713408
  %v5396 = vunpack.c.0.s8 %v5395
  %v5397 = vlaneseq
  %v5398 = vshrl.u32 %v5397, 7
  %v5399 = vsub.s32 %v5396, %v5398
  %v5400 = vrot.slane %v5392, %v5399
  %v5402 = vunpack.c.l.s4 1934713408
  %v5403 = vunpack.c.0.s8 %v5402
  %v5404 = vlaneseq
  %v5405 = vshrl.u32 %v5404, 7
  %v5406 = vsub.s32 %v5403, %v5405
  %v5407 = vrot.slane %v5393, %v5406
  %v5408 = vcombine.low %v5352, %v5368
  %v5409 = vcombine.high %v5352, %v5368
  %v5411 = vunpack.c.l.s4 1934713408
  %v5412 = vunpack.c.0.s8 %v5411
  %v5413 = vlaneseq
  %v5414 = vshrl.u32 %v5413, 7
  %v5415 = vsub.s32 %v5412, %v5414
  %v5416 = vrot.slane %v5408, %v5415
  %v5418 = vunpack.c.l.s4 1934713408
  %v5419 = vunpack.c.0.s8 %v5418
  %v5420 = vlaneseq
  %v5421 = vshrl.u32 %v5420, 7
  %v5422 = vsub.s32 %v5419, %v5421
  %v5423 = vrot.slane %v5409, %v5422
  %v5424 = vcombine.low %v5359, %v5375
  %v5425 = vcombine.high %v5359, %v5375
  %v5427 = vunpack.c.l.s4 1934713408
  %v5428 = vunpack.c.0.s8 %v5427
  %v5429 = vlaneseq
  %v5430 = vshrl.u32 %v5429, 7
  %v5431 = vsub.s32 %v5428, %v5430
  %v5432 = vrot.slane %v5424, %v5431
  %v5434 = vunpack.c.l.s4 1934713408
  %v5435 = vunpack.c.0.s8 %v5434
  %v5436 = vlaneseq
  %v5437 = vshrl.u32 %v5436, 7
  %v5438 = vsub.s32 %v5435, %v5437
  %v5439 = vrot.slane %v5425, %v5438
  %v5440 = vcombine.low %v5384, %v5416
  %v5441 = vcombine.high %v5384, %v5416
  %v5442 = vcombine.low %v5391, %v5423
  %v5443 = vcombine.high %v5391, %v5423
  %v5444 = vcombine.low %v5400, %v5432
  %v5445 = vcombine.high %v5400, %v5432
  %v5446 = vcombine.low %v5407, %v5439
  %v5447 = vcombine.high %v5407, %v5439
  %v5448 = vcombine.low %v1098, %v1136
  %v5449 = vcombine.high %v1098, %v1136
  %v5451 = vunpack.c.l.s4 1983009808
  %v5452 = vunpack.c.0.s8 %v5451
  %v5453 = vlaneseq
  %v5454 = vshrl.u32 %v5453, 7
  %v5455 = vsub.s32 %v5452, %v5454
  %v5456 = vrot.slane %v5448, %v5455
  %v5458 = vunpack.c.l.s4 1983009808
  %v5459 = vunpack.c.0.s8 %v5458
  %v5460 = vlaneseq
  %v5461 = vshrl.u32 %v5460, 7
  %v5462 = vsub.s32 %v5459, %v5461
  %v5463 = vrot.slane %v5449, %v5462
  %v5464 = vcombine.low %v1117, %v1155
  %v5465 = vcombine.high %v1117, %v1155
  %v5467 = vunpack.c.l.s4 1983009808
  %v5468 = vunpack.c.0.s8 %v5467
  %v5469 = vlaneseq
  %v5470 = vshrl.u32 %v5469, 7
  %v5471 = vsub.s32 %v5468, %v5470
  %v5472 = vrot.slane %v5464, %v5471
  %v5474 = vunpack.c.l.s4 1983009808
  %v5475 = vunpack.c.0.s8 %v5474
  %v5476 = vlaneseq
  %v5477 = vshrl.u32 %v5476, 7
  %v5478 = vsub.s32 %v5475, %v5477
  %v5479 = vrot.slane %v5465, %v5478
  %v5480 = vcombine.low %v1174, %v1212
  %v5481 = vcombine.high %v1174, %v1212
  %v5483 = vunpack.c.l.s4 1983009808
  %v5484 = vunpack.c.0.s8 %v5483
  %v5485 = vlaneseq
  %v5486 = vshrl.u32 %v5485, 7
  %v5487 = vsub.s32 %v5484, %v5486
  %v5488 = vrot.slane %v5480, %v5487
  %v5490 = vunpack.c.l.s4 1983009808
  %v5491 = vunpack.c.0.s8 %v5490
  %v5492 = vlaneseq
  %v5493 = vshrl.u32 %v5492, 7
  %v5494 = vsub.s32 %v5491, %v5493
  %v5495 = vrot.slane %v5481, %v5494
  %v5496 = vcombine.low %v1193, %v1231
  %v5497 = vcombine.high %v1193, %v1231
  %v5499 = vunpack.c.l.s4 1983009808
  %v5500 = vunpack.c.0.s8 %v5499
  %v5501 = vlaneseq
  %v5502 = vshrl.u32 %v5501, 7
  %v5503 = vsub.s32 %v5500, %v5502
  %v5504 = vrot.slane %v5496, %v5503
  %v5506 = vunpack.c.l.s4 1983009808
  %v5507 = vunpack.c.0.s8 %v5506
  %v5508 = vlaneseq
  %v5509 = vshrl.u32 %v5508, 7
  %v5510 = vsub.s32 %v5507, %v5509
  %v5511 = vrot.slane %v5497, %v5510
  %v5512 = vcombine.low %v5456, %v5472
  %v5513 = vcombine.high %v5456, %v5472
  %v5515 = vunpack.c.l.s4 1934713408
  %v5516 = vunpack.c.0.s8 %v5515
  %v5517 = vlaneseq
  %v5518 = vshrl.u32 %v5517, 7
  %v5519 = vsub.s32 %v5516, %v5518
  %v5520 = vrot.slane %v5512, %v5519
  %v5522 = vunpack.c.l.s4 1934713408
  %v5523 = vunpack.c.0.s8 %v5522
  %v5524 = vlaneseq
  %v5525 = vshrl.u32 %v5524, 7
  %v5526 = vsub.s32 %v5523, %v5525
  %v5527 = vrot.slane %v5513, %v5526
  %v5528 = vcombine.low %v5463, %v5479
  %v5529 = vcombine.high %v5463, %v5479
  %v5531 = vunpack.c.l.s4 1934713408
  %v5532 = vunpack.c.0.s8 %v5531
  %v5533 = vlaneseq
  %v5534 = vshrl.u32 %v5533, 7
  %v5535 = vsub.s32 %v5532, %v5534
  %v5536 = vrot.slane %v5528, %v5535
  %v5538 = vunpack.c.l.s4 1934713408
  %v5539 = vunpack.c.0.s8 %v5538
  %v5540 = vlaneseq
  %v5541 = vshrl.u32 %v5540, 7
  %v5542 = vsub.s32 %v5539, %v5541
  %v5543 = vrot.slane %v5529, %v5542
  %v5544 = vcombine.low %v5488, %v5504
  %v5545 = vcombine.high %v5488, %v5504
  %v5547 = vunpack.c.l.s4 1934713408
  %v5548 = vunpack.c.0.s8 %v5547
  %v5549 = vlaneseq
  %v5550 = vshrl.u32 %v5549, 7
  %v5551 = vsub.s32 %v5548, %v5550
  %v5552 = vrot.slane %v5544, %v5551
  %v5554 = vunpack.c.l.s4 1934713408
  %v5555 = vunpack.c.0.s8 %v5554
  %v5556 = vlaneseq
  %v5557 = vshrl.u32 %v5556, 7
  %v5558 = vsub.s32 %v5555, %v5557
  %v5559 = vrot.slane %v5545, %v5558
  %v5560 = vcombine.low %v5495, %v5511
  %v5561 = vcombine.high %v5495, %v5511
  %v5563 = vunpack.c.l.s4 1934713408
  %v5564 = vunpack.c.0.s8 %v5563
  %v5565 = vlaneseq
  %v5566 = vshrl.u32 %v5565, 7
  %v5567 = vsub.s32 %v5564, %v5566
  %v5568 = vrot.slane %v5560, %v5567
  %v5570 = vunpack.c.l.s4 1934713408
  %v5571 = vunpack.c.0.s8 %v5570
  %v5572 = vlaneseq
  %v5573 = vshrl.u32 %v5572, 7
  %v5574 = vsub.s32 %v5571, %v5573
  %v5575 = vrot.slane %v5561, %v5574
  %v5576 = vcombine.low %v5520, %v5552
  %v5577 = vcombine.high %v5520, %v5552
  %v5578 = vcombine.low %v5527, %v5559
  %v5579 = vcombine.high %v5527, %v5559
  %v5580 = vcombine.low %v5536, %v5568
  %v5581 = vcombine.high %v5536, %v5568
  %v5582 = vcombine.low %v5543, %v5575
  %v5583 = vcombine.high %v5543, %v5575
  %5592 = vrot.lane.b32.xlu0 %v1361, 2
  %v5593 = vpop.permute.xlu0 %5592
  %5594 = vrot.lane.b32.xlu0 %v1905, 2
  %v5595 = vpop.permute.xlu0 %5594
  %5596 = vrot.lane.b32.xlu0 %v2449, 2
  %v5597 = vpop.permute.xlu0 %5596
  %5598 = vrot.lane.b32.xlu0 %v2993, 2
  %v5599 = vpop.permute.xlu0 %5598
  %5600 = vrot.lane.b32.xlu0 %v3537, 2
  %v5601 = vpop.permute.xlu0 %5600
  %5602 = vrot.lane.b32.xlu0 %v4081, 2
  %v5603 = vpop.permute.xlu0 %5602
  %5604 = vrot.lane.b32.xlu0 %v4625, 2
  %v5605 = vpop.permute.xlu0 %5604
  %5606 = vrot.lane.b32.xlu0 %v5169, 2
  %v5607 = vpop.permute.xlu0 %5606
  %5624 = vrot.lane.b32.xlu0 %v1362, 4
  %v5625 = vpop.permute.xlu0 %5624
  %5626 = vrot.lane.b32.xlu0 %v1906, 4
  %v5627 = vpop.permute.xlu0 %5626
  %5628 = vrot.lane.b32.xlu0 %v2450, 4
  %v5629 = vpop.permute.xlu0 %5628
  %5630 = vrot.lane.b32.xlu0 %v2994, 4
  %v5631 = vpop.permute.xlu0 %5630
  %5632 = vrot.lane.b32.xlu0 %v3538, 4
  %v5633 = vpop.permute.xlu0 %5632
  %5634 = vrot.lane.b32.xlu0 %v4082, 4
  %v5635 = vpop.permute.xlu0 %5634
  %5636 = vrot.lane.b32.xlu0 %v4626, 4
  %v5637 = vpop.permute.xlu0 %5636
  %5638 = vrot.lane.b32.xlu0 %v5170, 4
  %v5639 = vpop.permute.xlu0 %5638
  %5656 = vrot.lane.b32.xlu0 %v1363, 6
  %v5657 = vpop.permute.xlu0 %5656
  %5658 = vrot.lane.b32.xlu0 %v1907, 6
  %v5659 = vpop.permute.xlu0 %5658
  %5660 = vrot.lane.b32.xlu0 %v2451, 6
  %v5661 = vpop.permute.xlu0 %5660
  %5662 = vrot.lane.b32.xlu0 %v2995, 6
  %v5663 = vpop.permute.xlu0 %5662
  %5664 = vrot.lane.b32.xlu0 %v3539, 6
  %v5665 = vpop.permute.xlu0 %5664
  %5666 = vrot.lane.b32.xlu0 %v4083, 6
  %v5667 = vpop.permute.xlu0 %5666
  %5668 = vrot.lane.b32.xlu0 %v4627, 6
  %v5669 = vpop.permute.xlu0 %5668
  %5670 = vrot.lane.b32.xlu0 %v5171, 6
  %v5671 = vpop.permute.xlu0 %5670
  %5688 = vrot.lane.b32.xlu0 %v1364, 8
  %v5689 = vpop.permute.xlu0 %5688
  %5690 = vrot.lane.b32.xlu0 %v1908, 8
  %v5691 = vpop.permute.xlu0 %5690
  %5692 = vrot.lane.b32.xlu0 %v2452, 8
  %v5693 = vpop.permute.xlu0 %5692
  %5694 = vrot.lane.b32.xlu0 %v2996, 8
  %v5695 = vpop.permute.xlu0 %5694
  %5696 = vrot.lane.b32.xlu0 %v3540, 8
  %v5697 = vpop.permute.xlu0 %5696
  %5698 = vrot.lane.b32.xlu0 %v4084, 8
  %v5699 = vpop.permute.xlu0 %5698
  %5700 = vrot.lane.b32.xlu0 %v4628, 8
  %v5701 = vpop.permute.xlu0 %5700
  %5702 = vrot.lane.b32.xlu0 %v5172, 8
  %v5703 = vpop.permute.xlu0 %5702
  %5720 = vrot.lane.b32.xlu0 %v1365, 10
  %v5721 = vpop.permute.xlu0 %5720
  %5722 = vrot.lane.b32.xlu0 %v1909, 10
  %v5723 = vpop.permute.xlu0 %5722
  %5724 = vrot.lane.b32.xlu0 %v2453, 10
  %v5725 = vpop.permute.xlu0 %5724
  %5726 = vrot.lane.b32.xlu0 %v2997, 10
  %v5727 = vpop.permute.xlu0 %5726
  %5728 = vrot.lane.b32.xlu0 %v3541, 10
  %v5729 = vpop.permute.xlu0 %5728
  %5730 = vrot.lane.b32.xlu0 %v4085, 10
  %v5731 = vpop.permute.xlu0 %5730
  %5732 = vrot.lane.b32.xlu0 %v4629, 10
  %v5733 = vpop.permute.xlu0 %5732
  %5734 = vrot.lane.b32.xlu0 %v5173, 10
  %v5735 = vpop.permute.xlu0 %5734
  %5752 = vrot.lane.b32.xlu0 %v1366, 12
  %v5753 = vpop.permute.xlu0 %5752
  %5754 = vrot.lane.b32.xlu0 %v1910, 12
  %v5755 = vpop.permute.xlu0 %5754
  %5756 = vrot.lane.b32.xlu0 %v2454, 12
  %v5757 = vpop.permute.xlu0 %5756
  %5758 = vrot.lane.b32.xlu0 %v2998, 12
  %v5759 = vpop.permute.xlu0 %5758
  %5760 = vrot.lane.b32.xlu0 %v3542, 12
  %v5761 = vpop.permute.xlu0 %5760
  %5762 = vrot.lane.b32.xlu0 %v4086, 12
  %v5763 = vpop.permute.xlu0 %5762
  %5764 = vrot.lane.b32.xlu0 %v4630, 12
  %v5765 = vpop.permute.xlu0 %5764
  %5766 = vrot.lane.b32.xlu0 %v5174, 12
  %v5767 = vpop.permute.xlu0 %5766
  %5784 = vrot.lane.b32.xlu0 %v1367, 14
  %v5785 = vpop.permute.xlu0 %5784
  %5786 = vrot.lane.b32.xlu0 %v1911, 14
  %v5787 = vpop.permute.xlu0 %5786
  %5788 = vrot.lane.b32.xlu0 %v2455, 14
  %v5789 = vpop.permute.xlu0 %5788
  %5790 = vrot.lane.b32.xlu0 %v2999, 14
  %v5791 = vpop.permute.xlu0 %5790
  %5792 = vrot.lane.b32.xlu0 %v3543, 14
  %v5793 = vpop.permute.xlu0 %5792
  %5794 = vrot.lane.b32.xlu0 %v4087, 14
  %v5795 = vpop.permute.xlu0 %5794
  %5796 = vrot.lane.b32.xlu0 %v4631, 14
  %v5797 = vpop.permute.xlu0 %5796
  %5798 = vrot.lane.b32.xlu0 %v5175, 14
  %v5799 = vpop.permute.xlu0 %5798
  %5816 = vrot.lane.b32.xlu0 %v1496, 16
  %v5817 = vpop.permute.xlu0 %5816
  %5818 = vrot.lane.b32.xlu0 %v2040, 16
  %v5819 = vpop.permute.xlu0 %5818
  %5820 = vrot.lane.b32.xlu0 %v2584, 16
  %v5821 = vpop.permute.xlu0 %5820
  %5822 = vrot.lane.b32.xlu0 %v3128, 16
  %v5823 = vpop.permute.xlu0 %5822
  %5824 = vrot.lane.b32.xlu0 %v3672, 16
  %v5825 = vpop.permute.xlu0 %5824
  %5826 = vrot.lane.b32.xlu0 %v4216, 16
  %v5827 = vpop.permute.xlu0 %5826
  %5828 = vrot.lane.b32.xlu0 %v4760, 16
  %v5829 = vpop.permute.xlu0 %5828
  %5830 = vrot.lane.b32.xlu0 %v5304, 16
  %v5831 = vpop.permute.xlu0 %5830
  %5848 = vrot.lane.b32.xlu0 %v1497, 18
  %v5849 = vpop.permute.xlu0 %5848
  %5850 = vrot.lane.b32.xlu0 %v2041, 18
  %v5851 = vpop.permute.xlu0 %5850
  %5852 = vrot.lane.b32.xlu0 %v2585, 18
  %v5853 = vpop.permute.xlu0 %5852
  %5854 = vrot.lane.b32.xlu0 %v3129, 18
  %v5855 = vpop.permute.xlu0 %5854
  %5856 = vrot.lane.b32.xlu0 %v3673, 18
  %v5857 = vpop.permute.xlu0 %5856
  %5858 = vrot.lane.b32.xlu0 %v4217, 18
  %v5859 = vpop.permute.xlu0 %5858
  %5860 = vrot.lane.b32.xlu0 %v4761, 18
  %v5861 = vpop.permute.xlu0 %5860
  %5862 = vrot.lane.b32.xlu0 %v5305, 18
  %v5863 = vpop.permute.xlu0 %5862
  %5880 = vrot.lane.b32.xlu0 %v1498, 20
  %v5881 = vpop.permute.xlu0 %5880
  %5882 = vrot.lane.b32.xlu0 %v2042, 20
  %v5883 = vpop.permute.xlu0 %5882
  %5884 = vrot.lane.b32.xlu0 %v2586, 20
  %v5885 = vpop.permute.xlu0 %5884
  %5886 = vrot.lane.b32.xlu0 %v3130, 20
  %v5887 = vpop.permute.xlu0 %5886
  %5888 = vrot.lane.b32.xlu0 %v3674, 20
  %v5889 = vpop.permute.xlu0 %5888
  %5890 = vrot.lane.b32.xlu0 %v4218, 20
  %v5891 = vpop.permute.xlu0 %5890
  %5892 = vrot.lane.b32.xlu0 %v4762, 20
  %v5893 = vpop.permute.xlu0 %5892
  %5894 = vrot.lane.b32.xlu0 %v5306, 20
  %v5895 = vpop.permute.xlu0 %5894
  %5912 = vrot.lane.b32.xlu0 %v1499, 22
  %v5913 = vpop.permute.xlu0 %5912
  %5914 = vrot.lane.b32.xlu0 %v2043, 22
  %v5915 = vpop.permute.xlu0 %5914
  %5916 = vrot.lane.b32.xlu0 %v2587, 22
  %v5917 = vpop.permute.xlu0 %5916
  %5918 = vrot.lane.b32.xlu0 %v3131, 22
  %v5919 = vpop.permute.xlu0 %5918
  %5920 = vrot.lane.b32.xlu0 %v3675, 22
  %v5921 = vpop.permute.xlu0 %5920
  %5922 = vrot.lane.b32.xlu0 %v4219, 22
  %v5923 = vpop.permute.xlu0 %5922
  %5924 = vrot.lane.b32.xlu0 %v4763, 22
  %v5925 = vpop.permute.xlu0 %5924
  %5926 = vrot.lane.b32.xlu0 %v5307, 22
  %v5927 = vpop.permute.xlu0 %5926
  %5944 = vrot.lane.b32.xlu0 %v1500, 24
  %v5945 = vpop.permute.xlu0 %5944
  %5946 = vrot.lane.b32.xlu0 %v2044, 24
  %v5947 = vpop.permute.xlu0 %5946
  %5948 = vrot.lane.b32.xlu0 %v2588, 24
  %v5949 = vpop.permute.xlu0 %5948
  %5950 = vrot.lane.b32.xlu0 %v3132, 24
  %v5951 = vpop.permute.xlu0 %5950
  %5952 = vrot.lane.b32.xlu0 %v3676, 24
  %v5953 = vpop.permute.xlu0 %5952
  %5954 = vrot.lane.b32.xlu0 %v4220, 24
  %v5955 = vpop.permute.xlu0 %5954
  %5956 = vrot.lane.b32.xlu0 %v4764, 24
  %v5957 = vpop.permute.xlu0 %5956
  %5958 = vrot.lane.b32.xlu0 %v5308, 24
  %v5959 = vpop.permute.xlu0 %5958
  %5976 = vrot.lane.b32.xlu0 %v1501, 26
  %v5977 = vpop.permute.xlu0 %5976
  %5978 = vrot.lane.b32.xlu0 %v2045, 26
  %v5979 = vpop.permute.xlu0 %5978
  %5980 = vrot.lane.b32.xlu0 %v2589, 26
  %v5981 = vpop.permute.xlu0 %5980
  %5982 = vrot.lane.b32.xlu0 %v3133, 26
  %v5983 = vpop.permute.xlu0 %5982
  %5984 = vrot.lane.b32.xlu0 %v3677, 26
  %v5985 = vpop.permute.xlu0 %5984
  %5986 = vrot.lane.b32.xlu0 %v4221, 26
  %v5987 = vpop.permute.xlu0 %5986
  %5988 = vrot.lane.b32.xlu0 %v4765, 26
  %v5989 = vpop.permute.xlu0 %5988
  %5990 = vrot.lane.b32.xlu0 %v5309, 26
  %v5991 = vpop.permute.xlu0 %5990
  %6008 = vrot.lane.b32.xlu0 %v1502, 28
  %v6009 = vpop.permute.xlu0 %6008
  %6010 = vrot.lane.b32.xlu0 %v2046, 28
  %v6011 = vpop.permute.xlu0 %6010
  %6012 = vrot.lane.b32.xlu0 %v2590, 28
  %v6013 = vpop.permute.xlu0 %6012
  %6014 = vrot.lane.b32.xlu0 %v3134, 28
  %v6015 = vpop.permute.xlu0 %6014
  %6016 = vrot.lane.b32.xlu0 %v3678, 28
  %v6017 = vpop.permute.xlu0 %6016
  %6018 = vrot.lane.b32.xlu0 %v4222, 28
  %v6019 = vpop.permute.xlu0 %6018
  %6020 = vrot.lane.b32.xlu0 %v4766, 28
  %v6021 = vpop.permute.xlu0 %6020
  %6022 = vrot.lane.b32.xlu0 %v5310, 28
  %v6023 = vpop.permute.xlu0 %6022
  %6040 = vrot.lane.b32.xlu0 %v1503, 30
  %v6041 = vpop.permute.xlu0 %6040
  %6042 = vrot.lane.b32.xlu0 %v2047, 30
  %v6043 = vpop.permute.xlu0 %6042
  %6044 = vrot.lane.b32.xlu0 %v2591, 30
  %v6045 = vpop.permute.xlu0 %6044
  %6046 = vrot.lane.b32.xlu0 %v3135, 30
  %v6047 = vpop.permute.xlu0 %6046
  %6048 = vrot.lane.b32.xlu0 %v3679, 30
  %v6049 = vpop.permute.xlu0 %6048
  %6050 = vrot.lane.b32.xlu0 %v4223, 30
  %v6051 = vpop.permute.xlu0 %6050
  %6052 = vrot.lane.b32.xlu0 %v4767, 30
  %v6053 = vpop.permute.xlu0 %6052
  %6054 = vrot.lane.b32.xlu0 %v5311, 30
  %v6055 = vpop.permute.xlu0 %6054
  %6072 = vrot.lane.b32.xlu0 %v1632, 32
  %v6073 = vpop.permute.xlu0 %6072
  %6074 = vrot.lane.b32.xlu0 %v2176, 32
  %v6075 = vpop.permute.xlu0 %6074
  %6076 = vrot.lane.b32.xlu0 %v2720, 32
  %v6077 = vpop.permute.xlu0 %6076
  %6078 = vrot.lane.b32.xlu0 %v3264, 32
  %v6079 = vpop.permute.xlu0 %6078
  %6080 = vrot.lane.b32.xlu0 %v3808, 32
  %v6081 = vpop.permute.xlu0 %6080
  %6082 = vrot.lane.b32.xlu0 %v4352, 32
  %v6083 = vpop.permute.xlu0 %6082
  %6084 = vrot.lane.b32.xlu0 %v4896, 32
  %v6085 = vpop.permute.xlu0 %6084
  %6086 = vrot.lane.b32.xlu0 %v5440, 32
  %v6087 = vpop.permute.xlu0 %6086
  %6104 = vrot.lane.b32.xlu0 %v1633, 34
  %v6105 = vpop.permute.xlu0 %6104
  %6106 = vrot.lane.b32.xlu0 %v2177, 34
  %v6107 = vpop.permute.xlu0 %6106
  %6108 = vrot.lane.b32.xlu0 %v2721, 34
  %v6109 = vpop.permute.xlu0 %6108
  %6110 = vrot.lane.b32.xlu0 %v3265, 34
  %v6111 = vpop.permute.xlu0 %6110
  %6112 = vrot.lane.b32.xlu0 %v3809, 34
  %v6113 = vpop.permute.xlu0 %6112
  %6114 = vrot.lane.b32.xlu0 %v4353, 34
  %v6115 = vpop.permute.xlu0 %6114
  %6116 = vrot.lane.b32.xlu0 %v4897, 34
  %v6117 = vpop.permute.xlu0 %6116
  %6118 = vrot.lane.b32.xlu0 %v5441, 34
  %v6119 = vpop.permute.xlu0 %6118
  %6136 = vrot.lane.b32.xlu0 %v1634, 36
  %v6137 = vpop.permute.xlu0 %6136
  %6138 = vrot.lane.b32.xlu0 %v2178, 36
  %v6139 = vpop.permute.xlu0 %6138
  %6140 = vrot.lane.b32.xlu0 %v2722, 36
  %v6141 = vpop.permute.xlu0 %6140
  %6142 = vrot.lane.b32.xlu0 %v3266, 36
  %v6143 = vpop.permute.xlu0 %6142
  %6144 = vrot.lane.b32.xlu0 %v3810, 36
  %v6145 = vpop.permute.xlu0 %6144
  %6146 = vrot.lane.b32.xlu0 %v4354, 36
  %v6147 = vpop.permute.xlu0 %6146
  %6148 = vrot.lane.b32.xlu0 %v4898, 36
  %v6149 = vpop.permute.xlu0 %6148
  %6150 = vrot.lane.b32.xlu0 %v5442, 36
  %v6151 = vpop.permute.xlu0 %6150
  %6168 = vrot.lane.b32.xlu0 %v1635, 38
  %v6169 = vpop.permute.xlu0 %6168
  %6170 = vrot.lane.b32.xlu0 %v2179, 38
  %v6171 = vpop.permute.xlu0 %6170
  %6172 = vrot.lane.b32.xlu0 %v2723, 38
  %v6173 = vpop.permute.xlu0 %6172
  %6174 = vrot.lane.b32.xlu0 %v3267, 38
  %v6175 = vpop.permute.xlu0 %6174
  %6176 = vrot.lane.b32.xlu0 %v3811, 38
  %v6177 = vpop.permute.xlu0 %6176
  %6178 = vrot.lane.b32.xlu0 %v4355, 38
  %v6179 = vpop.permute.xlu0 %6178
  %6180 = vrot.lane.b32.xlu0 %v4899, 38
  %v6181 = vpop.permute.xlu0 %6180
  %6182 = vrot.lane.b32.xlu0 %v5443, 38
  %v6183 = vpop.permute.xlu0 %6182
  %6200 = vrot.lane.b32.xlu0 %v1636, 40
  %v6201 = vpop.permute.xlu0 %6200
  %6202 = vrot.lane.b32.xlu0 %v2180, 40
  %v6203 = vpop.permute.xlu0 %6202
  %6204 = vrot.lane.b32.xlu0 %v2724, 40
  %v6205 = vpop.permute.xlu0 %6204
  %6206 = vrot.lane.b32.xlu0 %v3268, 40
  %v6207 = vpop.permute.xlu0 %6206
  %6208 = vrot.lane.b32.xlu0 %v3812, 40
  %v6209 = vpop.permute.xlu0 %6208
  %6210 = vrot.lane.b32.xlu0 %v4356, 40
  %v6211 = vpop.permute.xlu0 %6210
  %6212 = vrot.lane.b32.xlu0 %v4900, 40
  %v6213 = vpop.permute.xlu0 %6212
  %6214 = vrot.lane.b32.xlu0 %v5444, 40
  %v6215 = vpop.permute.xlu0 %6214
  %6232 = vrot.lane.b32.xlu0 %v1637, 42
  %v6233 = vpop.permute.xlu0 %6232
  %6234 = vrot.lane.b32.xlu0 %v2181, 42
  %v6235 = vpop.permute.xlu0 %6234
  %6236 = vrot.lane.b32.xlu0 %v2725, 42
  %v6237 = vpop.permute.xlu0 %6236
  %6238 = vrot.lane.b32.xlu0 %v3269, 42
  %v6239 = vpop.permute.xlu0 %6238
  %6240 = vrot.lane.b32.xlu0 %v3813, 42
  %v6241 = vpop.permute.xlu0 %6240
  %6242 = vrot.lane.b32.xlu0 %v4357, 42
  %v6243 = vpop.permute.xlu0 %6242
  %6244 = vrot.lane.b32.xlu0 %v4901, 42
  %v6245 = vpop.permute.xlu0 %6244
  %6246 = vrot.lane.b32.xlu0 %v5445, 42
  %v6247 = vpop.permute.xlu0 %6246
  %6264 = vrot.lane.b32.xlu0 %v1638, 44
  %v6265 = vpop.permute.xlu0 %6264
  %6266 = vrot.lane.b32.xlu0 %v2182, 44
  %v6267 = vpop.permute.xlu0 %6266
  %6268 = vrot.lane.b32.xlu0 %v2726, 44
  %v6269 = vpop.permute.xlu0 %6268
  %6270 = vrot.lane.b32.xlu0 %v3270, 44
  %v6271 = vpop.permute.xlu0 %6270
  %6272 = vrot.lane.b32.xlu0 %v3814, 44
  %v6273 = vpop.permute.xlu0 %6272
  %6274 = vrot.lane.b32.xlu0 %v4358, 44
  %v6275 = vpop.permute.xlu0 %6274
  %6276 = vrot.lane.b32.xlu0 %v4902, 44
  %v6277 = vpop.permute.xlu0 %6276
  %6278 = vrot.lane.b32.xlu0 %v5446, 44
  %v6279 = vpop.permute.xlu0 %6278
  %6296 = vrot.lane.b32.xlu0 %v1639, 46
  %v6297 = vpop.permute.xlu0 %6296
  %6298 = vrot.lane.b32.xlu0 %v2183, 46
  %v6299 = vpop.permute.xlu0 %6298
  %6300 = vrot.lane.b32.xlu0 %v2727, 46
  %v6301 = vpop.permute.xlu0 %6300
  %6302 = vrot.lane.b32.xlu0 %v3271, 46
  %v6303 = vpop.permute.xlu0 %6302
  %6304 = vrot.lane.b32.xlu0 %v3815, 46
  %v6305 = vpop.permute.xlu0 %6304
  %6306 = vrot.lane.b32.xlu0 %v4359, 46
  %v6307 = vpop.permute.xlu0 %6306
  %6308 = vrot.lane.b32.xlu0 %v4903, 46
  %v6309 = vpop.permute.xlu0 %6308
  %6310 = vrot.lane.b32.xlu0 %v5447, 46
  %v6311 = vpop.permute.xlu0 %6310
  %6328 = vrot.lane.b32.xlu0 %v1768, 48
  %v6329 = vpop.permute.xlu0 %6328
  %6330 = vrot.lane.b32.xlu0 %v2312, 48
  %v6331 = vpop.permute.xlu0 %6330
  %6332 = vrot.lane.b32.xlu0 %v2856, 48
  %v6333 = vpop.permute.xlu0 %6332
  %6334 = vrot.lane.b32.xlu0 %v3400, 48
  %v6335 = vpop.permute.xlu0 %6334
  %6336 = vrot.lane.b32.xlu0 %v3944, 48
  %v6337 = vpop.permute.xlu0 %6336
  %6338 = vrot.lane.b32.xlu0 %v4488, 48
  %v6339 = vpop.permute.xlu0 %6338
  %6340 = vrot.lane.b32.xlu0 %v5032, 48
  %v6341 = vpop.permute.xlu0 %6340
  %6342 = vrot.lane.b32.xlu0 %v5576, 48
  %v6343 = vpop.permute.xlu0 %6342
  %6360 = vrot.lane.b32.xlu0 %v1769, 50
  %v6361 = vpop.permute.xlu0 %6360
  %6362 = vrot.lane.b32.xlu0 %v2313, 50
  %v6363 = vpop.permute.xlu0 %6362
  %6364 = vrot.lane.b32.xlu0 %v2857, 50
  %v6365 = vpop.permute.xlu0 %6364
  %6366 = vrot.lane.b32.xlu0 %v3401, 50
  %v6367 = vpop.permute.xlu0 %6366
  %6368 = vrot.lane.b32.xlu0 %v3945, 50
  %v6369 = vpop.permute.xlu0 %6368
  %6370 = vrot.lane.b32.xlu0 %v4489, 50
  %v6371 = vpop.permute.xlu0 %6370
  %6372 = vrot.lane.b32.xlu0 %v5033, 50
  %v6373 = vpop.permute.xlu0 %6372
  %6374 = vrot.lane.b32.xlu0 %v5577, 50
  %v6375 = vpop.permute.xlu0 %6374
  %6392 = vrot.lane.b32.xlu0 %v1770, 52
  %v6393 = vpop.permute.xlu0 %6392
  %6394 = vrot.lane.b32.xlu0 %v2314, 52
  %v6395 = vpop.permute.xlu0 %6394
  %6396 = vrot.lane.b32.xlu0 %v2858, 52
  %v6397 = vpop.permute.xlu0 %6396
  %6398 = vrot.lane.b32.xlu0 %v3402, 52
  %v6399 = vpop.permute.xlu0 %6398
  %6400 = vrot.lane.b32.xlu0 %v3946, 52
  %v6401 = vpop.permute.xlu0 %6400
  %6402 = vrot.lane.b32.xlu0 %v4490, 52
  %v6403 = vpop.permute.xlu0 %6402
  %6404 = vrot.lane.b32.xlu0 %v5034, 52
  %v6405 = vpop.permute.xlu0 %6404
  %6406 = vrot.lane.b32.xlu0 %v5578, 52
  %v6407 = vpop.permute.xlu0 %6406
  %6424 = vrot.lane.b32.xlu0 %v1771, 54
  %v6425 = vpop.permute.xlu0 %6424
  %6426 = vrot.lane.b32.xlu0 %v2315, 54
  %v6427 = vpop.permute.xlu0 %6426
  %6428 = vrot.lane.b32.xlu0 %v2859, 54
  %v6429 = vpop.permute.xlu0 %6428
  %6430 = vrot.lane.b32.xlu0 %v3403, 54
  %v6431 = vpop.permute.xlu0 %6430
  %6432 = vrot.lane.b32.xlu0 %v3947, 54
  %v6433 = vpop.permute.xlu0 %6432
  %6434 = vrot.lane.b32.xlu0 %v4491, 54
  %v6435 = vpop.permute.xlu0 %6434
  %6436 = vrot.lane.b32.xlu0 %v5035, 54
  %v6437 = vpop.permute.xlu0 %6436
  %6438 = vrot.lane.b32.xlu0 %v5579, 54
  %v6439 = vpop.permute.xlu0 %6438
  %6456 = vrot.lane.b32.xlu0 %v1772, 56
  %v6457 = vpop.permute.xlu0 %6456
  %6458 = vrot.lane.b32.xlu0 %v2316, 56
  %v6459 = vpop.permute.xlu0 %6458
  %6460 = vrot.lane.b32.xlu0 %v2860, 56
  %v6461 = vpop.permute.xlu0 %6460
  %6462 = vrot.lane.b32.xlu0 %v3404, 56
  %v6463 = vpop.permute.xlu0 %6462
  %6464 = vrot.lane.b32.xlu0 %v3948, 56
  %v6465 = vpop.permute.xlu0 %6464
  %6466 = vrot.lane.b32.xlu0 %v4492, 56
  %v6467 = vpop.permute.xlu0 %6466
  %6468 = vrot.lane.b32.xlu0 %v5036, 56
  %v6469 = vpop.permute.xlu0 %6468
  %6470 = vrot.lane.b32.xlu0 %v5580, 56
  %v6471 = vpop.permute.xlu0 %6470
  %6488 = vrot.lane.b32.xlu0 %v1773, 58
  %v6489 = vpop.permute.xlu0 %6488
  %6490 = vrot.lane.b32.xlu0 %v2317, 58
  %v6491 = vpop.permute.xlu0 %6490
  %6492 = vrot.lane.b32.xlu0 %v2861, 58
  %v6493 = vpop.permute.xlu0 %6492
  %6494 = vrot.lane.b32.xlu0 %v3405, 58
  %v6495 = vpop.permute.xlu0 %6494
  %6496 = vrot.lane.b32.xlu0 %v3949, 58
  %v6497 = vpop.permute.xlu0 %6496
  %6498 = vrot.lane.b32.xlu0 %v4493, 58
  %v6499 = vpop.permute.xlu0 %6498
  %6500 = vrot.lane.b32.xlu0 %v5037, 58
  %v6501 = vpop.permute.xlu0 %6500
  %6502 = vrot.lane.b32.xlu0 %v5581, 58
  %v6503 = vpop.permute.xlu0 %6502
  %6520 = vrot.lane.b32.xlu0 %v1774, 60
  %v6521 = vpop.permute.xlu0 %6520
  %6522 = vrot.lane.b32.xlu0 %v2318, 60
  %v6523 = vpop.permute.xlu0 %6522
  %6524 = vrot.lane.b32.xlu0 %v2862, 60
  %v6525 = vpop.permute.xlu0 %6524
  %6526 = vrot.lane.b32.xlu0 %v3406, 60
  %v6527 = vpop.permute.xlu0 %6526
  %6528 = vrot.lane.b32.xlu0 %v3950, 60
  %v6529 = vpop.permute.xlu0 %6528
  %6530 = vrot.lane.b32.xlu0 %v4494, 60
  %v6531 = vpop.permute.xlu0 %6530
  %6532 = vrot.lane.b32.xlu0 %v5038, 60
  %v6533 = vpop.permute.xlu0 %6532
  %6534 = vrot.lane.b32.xlu0 %v5582, 60
  %v6535 = vpop.permute.xlu0 %6534
  %6552 = vrot.lane.b32.xlu0 %v1775, 62
  %v6553 = vpop.permute.xlu0 %6552
  %6554 = vrot.lane.b32.xlu0 %v2319, 62
  %v6555 = vpop.permute.xlu0 %6554
  %6556 = vrot.lane.b32.xlu0 %v2863, 62
  %v6557 = vpop.permute.xlu0 %6556
  %6558 = vrot.lane.b32.xlu0 %v3407, 62
  %v6559 = vpop.permute.xlu0 %6558
  %6560 = vrot.lane.b32.xlu0 %v3951, 62
  %v6561 = vpop.permute.xlu0 %6560
  %6562 = vrot.lane.b32.xlu0 %v4495, 62
  %v6563 = vpop.permute.xlu0 %6562
  %6564 = vrot.lane.b32.xlu0 %v5039, 62
  %v6565 = vpop.permute.xlu0 %6564
  %6566 = vrot.lane.b32.xlu0 %v5583, 62
  %v6567 = vpop.permute.xlu0 %6566
  %vm6576 = vcmask 15360
  %v6577 = vsel %vm6576, %v1360, %v5593
  %v6578 = vsel %vm6576, %v1904, %v5595
  %v6579 = vsel %vm6576, %v2448, %v5597
  %v6580 = vsel %vm6576, %v2992, %v5599
  %v6581 = vsel %vm6576, %v3536, %v5601
  %v6582 = vsel %vm6576, %v4080, %v5603
  %v6583 = vsel %vm6576, %v4624, %v5605
  %v6584 = vsel %vm6576, %v5168, %v5607
  %vm6585 = vcmask 31744
  %v6586 = vsel %vm6585, %v6577, %v5625
  %v6587 = vsel %vm6585, %v6578, %v5627
  %v6588 = vsel %vm6585, %v6579, %v5629
  %v6589 = vsel %vm6585, %v6580, %v5631
  %v6590 = vsel %vm6585, %v6581, %v5633
  %v6591 = vsel %vm6585, %v6582, %v5635
  %v6592 = vsel %vm6585, %v6583, %v5637
  %v6593 = vsel %vm6585, %v6584, %v5639
  %vm6594 = vcmask 48128
  %v6595 = vsel %vm6594, %v6586, %v5657
  %v6596 = vsel %vm6594, %v6587, %v5659
  %v6597 = vsel %vm6594, %v6588, %v5661
  %v6598 = vsel %vm6594, %v6589, %v5663
  %v6599 = vsel %vm6594, %v6590, %v5665
  %v6600 = vsel %vm6594, %v6591, %v5667
  %v6601 = vsel %vm6594, %v6592, %v5669
  %v6602 = vsel %vm6594, %v6593, %v5671
  %vm6603 = vcmask 64512
  %v6604 = vsel %vm6603, %v6595, %v5689
  %v6605 = vsel %vm6603, %v6596, %v5691
  %v6606 = vsel %vm6603, %v6597, %v5693
  %v6607 = vsel %vm6603, %v6598, %v5695
  %v6608 = vsel %vm6603, %v6599, %v5697
  %v6609 = vsel %vm6603, %v6600, %v5699
  %v6610 = vsel %vm6603, %v6601, %v5701
  %v6611 = vsel %vm6603, %v6602, %v5703
  %vm6612 = vcmask 80896
  %v6613 = vsel %vm6612, %v6604, %v5721
  %v6614 = vsel %vm6612, %v6605, %v5723
  %v6615 = vsel %vm6612, %v6606, %v5725
  %v6616 = vsel %vm6612, %v6607, %v5727
  %v6617 = vsel %vm6612, %v6608, %v5729
  %v6618 = vsel %vm6612, %v6609, %v5731
  %v6619 = vsel %vm6612, %v6610, %v5733
  %v6620 = vsel %vm6612, %v6611, %v5735
  %vm6621 = vcmask 97280
  %v6622 = vsel %vm6621, %v6613, %v5753
  %v6623 = vsel %vm6621, %v6614, %v5755
  %v6624 = vsel %vm6621, %v6615, %v5757
  %v6625 = vsel %vm6621, %v6616, %v5759
  %v6626 = vsel %vm6621, %v6617, %v5761
  %v6627 = vsel %vm6621, %v6618, %v5763
  %v6628 = vsel %vm6621, %v6619, %v5765
  %v6629 = vsel %vm6621, %v6620, %v5767
  %vm6630 = vcmask 113664
  %v6631 = vsel %vm6630, %v6622, %v5785
  %v6632 = vsel %vm6630, %v6623, %v5787
  %v6633 = vsel %vm6630, %v6624, %v5789
  %v6634 = vsel %vm6630, %v6625, %v5791
  %v6635 = vsel %vm6630, %v6626, %v5793
  %v6636 = vsel %vm6630, %v6627, %v5795
  %v6637 = vsel %vm6630, %v6628, %v5797
  %v6638 = vsel %vm6630, %v6629, %v5799
  %vm6639 = vcmask 130048
  %v6640 = vsel %vm6639, %v6631, %v5817
  %v6641 = vsel %vm6639, %v6632, %v5819
  %v6642 = vsel %vm6639, %v6633, %v5821
  %v6643 = vsel %vm6639, %v6634, %v5823
  %v6644 = vsel %vm6639, %v6635, %v5825
  %v6645 = vsel %vm6639, %v6636, %v5827
  %v6646 = vsel %vm6639, %v6637, %v5829
  %v6647 = vsel %vm6639, %v6638, %v5831
  %vm6648 = vcmask 146432
  %v6649 = vsel %vm6648, %v6640, %v5849
  %v6650 = vsel %vm6648, %v6641, %v5851
  %v6651 = vsel %vm6648, %v6642, %v5853
  %v6652 = vsel %vm6648, %v6643, %v5855
  %v6653 = vsel %vm6648, %v6644, %v5857
  %v6654 = vsel %vm6648, %v6645, %v5859
  %v6655 = vsel %vm6648, %v6646, %v5861
  %v6656 = vsel %vm6648, %v6647, %v5863
  %vm6657 = vcmask 162816
  %v6658 = vsel %vm6657, %v6649, %v5881
  %v6659 = vsel %vm6657, %v6650, %v5883
  %v6660 = vsel %vm6657, %v6651, %v5885
  %v6661 = vsel %vm6657, %v6652, %v5887
  %v6662 = vsel %vm6657, %v6653, %v5889
  %v6663 = vsel %vm6657, %v6654, %v5891
  %v6664 = vsel %vm6657, %v6655, %v5893
  %v6665 = vsel %vm6657, %v6656, %v5895
  %vm6666 = vcmask 179200
  %v6667 = vsel %vm6666, %v6658, %v5913
  %v6668 = vsel %vm6666, %v6659, %v5915
  %v6669 = vsel %vm6666, %v6660, %v5917
  %v6670 = vsel %vm6666, %v6661, %v5919
  %v6671 = vsel %vm6666, %v6662, %v5921
  %v6672 = vsel %vm6666, %v6663, %v5923
  %v6673 = vsel %vm6666, %v6664, %v5925
  %v6674 = vsel %vm6666, %v6665, %v5927
  %vm6675 = vcmask 195584
  %v6676 = vsel %vm6675, %v6667, %v5945
  %v6677 = vsel %vm6675, %v6668, %v5947
  %v6678 = vsel %vm6675, %v6669, %v5949
  %v6679 = vsel %vm6675, %v6670, %v5951
  %v6680 = vsel %vm6675, %v6671, %v5953
  %v6681 = vsel %vm6675, %v6672, %v5955
  %v6682 = vsel %vm6675, %v6673, %v5957
  %v6683 = vsel %vm6675, %v6674, %v5959
  %vm6684 = vcmask 211968
  %v6685 = vsel %vm6684, %v6676, %v5977
  %v6686 = vsel %vm6684, %v6677, %v5979
  %v6687 = vsel %vm6684, %v6678, %v5981
  %v6688 = vsel %vm6684, %v6679, %v5983
  %v6689 = vsel %vm6684, %v6680, %v5985
  %v6690 = vsel %vm6684, %v6681, %v5987
  %v6691 = vsel %vm6684, %v6682, %v5989
  %v6692 = vsel %vm6684, %v6683, %v5991
  %vm6693 = vcmask 228352
  %v6694 = vsel %vm6693, %v6685, %v6009
  %v6695 = vsel %vm6693, %v6686, %v6011
  %v6696 = vsel %vm6693, %v6687, %v6013
  %v6697 = vsel %vm6693, %v6688, %v6015
  %v6698 = vsel %vm6693, %v6689, %v6017
  %v6699 = vsel %vm6693, %v6690, %v6019
  %v6700 = vsel %vm6693, %v6691, %v6021
  %v6701 = vsel %vm6693, %v6692, %v6023
  %vm6702 = vcmask 244736
  %v6703 = vsel %vm6702, %v6694, %v6041
  %v6704 = vsel %vm6702, %v6695, %v6043
  %v6705 = vsel %vm6702, %v6696, %v6045
  %v6706 = vsel %vm6702, %v6697, %v6047
  %v6707 = vsel %vm6702, %v6698, %v6049
  %v6708 = vsel %vm6702, %v6699, %v6051
  %v6709 = vsel %vm6702, %v6700, %v6053
  %v6710 = vsel %vm6702, %v6701, %v6055
  %vm6711 = vcmask 261120
  %v6712 = vsel %vm6711, %v6703, %v6073
  %v6713 = vsel %vm6711, %v6704, %v6075
  %v6714 = vsel %vm6711, %v6705, %v6077
  %v6715 = vsel %vm6711, %v6706, %v6079
  %v6716 = vsel %vm6711, %v6707, %v6081
  %v6717 = vsel %vm6711, %v6708, %v6083
  %v6718 = vsel %vm6711, %v6709, %v6085
  %v6719 = vsel %vm6711, %v6710, %v6087
  %vm6720 = vcmask 277504
  %v6721 = vsel %vm6720, %v6712, %v6105
  %v6722 = vsel %vm6720, %v6713, %v6107
  %v6723 = vsel %vm6720, %v6714, %v6109
  %v6724 = vsel %vm6720, %v6715, %v6111
  %v6725 = vsel %vm6720, %v6716, %v6113
  %v6726 = vsel %vm6720, %v6717, %v6115
  %v6727 = vsel %vm6720, %v6718, %v6117
  %v6728 = vsel %vm6720, %v6719, %v6119
  %vm6729 = vcmask 293888
  %v6730 = vsel %vm6729, %v6721, %v6137
  %v6731 = vsel %vm6729, %v6722, %v6139
  %v6732 = vsel %vm6729, %v6723, %v6141
  %v6733 = vsel %vm6729, %v6724, %v6143
  %v6734 = vsel %vm6729, %v6725, %v6145
  %v6735 = vsel %vm6729, %v6726, %v6147
  %v6736 = vsel %vm6729, %v6727, %v6149
  %v6737 = vsel %vm6729, %v6728, %v6151
  %vm6738 = vcmask 310272
  %v6739 = vsel %vm6738, %v6730, %v6169
  %v6740 = vsel %vm6738, %v6731, %v6171
  %v6741 = vsel %vm6738, %v6732, %v6173
  %v6742 = vsel %vm6738, %v6733, %v6175
  %v6743 = vsel %vm6738, %v6734, %v6177
  %v6744 = vsel %vm6738, %v6735, %v6179
  %v6745 = vsel %vm6738, %v6736, %v6181
  %v6746 = vsel %vm6738, %v6737, %v6183
  %vm6747 = vcmask 326656
  %v6748 = vsel %vm6747, %v6739, %v6201
  %v6749 = vsel %vm6747, %v6740, %v6203
  %v6750 = vsel %vm6747, %v6741, %v6205
  %v6751 = vsel %vm6747, %v6742, %v6207
  %v6752 = vsel %vm6747, %v6743, %v6209
  %v6753 = vsel %vm6747, %v6744, %v6211
  %v6754 = vsel %vm6747, %v6745, %v6213
  %v6755 = vsel %vm6747, %v6746, %v6215
  %vm6756 = vcmask 343040
  %v6757 = vsel %vm6756, %v6748, %v6233
  %v6758 = vsel %vm6756, %v6749, %v6235
  %v6759 = vsel %vm6756, %v6750, %v6237
  %v6760 = vsel %vm6756, %v6751, %v6239
  %v6761 = vsel %vm6756, %v6752, %v6241
  %v6762 = vsel %vm6756, %v6753, %v6243
  %v6763 = vsel %vm6756, %v6754, %v6245
  %v6764 = vsel %vm6756, %v6755, %v6247
  %vm6765 = vcmask 359424
  %v6766 = vsel %vm6765, %v6757, %v6265
  %v6767 = vsel %vm6765, %v6758, %v6267
  %v6768 = vsel %vm6765, %v6759, %v6269
  %v6769 = vsel %vm6765, %v6760, %v6271
  %v6770 = vsel %vm6765, %v6761, %v6273
  %v6771 = vsel %vm6765, %v6762, %v6275
  %v6772 = vsel %vm6765, %v6763, %v6277
  %v6773 = vsel %vm6765, %v6764, %v6279
  %vm6774 = vcmask 375808
  %v6775 = vsel %vm6774, %v6766, %v6297
  %v6776 = vsel %vm6774, %v6767, %v6299
  %v6777 = vsel %vm6774, %v6768, %v6301
  %v6778 = vsel %vm6774, %v6769, %v6303
  %v6779 = vsel %vm6774, %v6770, %v6305
  %v6780 = vsel %vm6774, %v6771, %v6307
  %v6781 = vsel %vm6774, %v6772, %v6309
  %v6782 = vsel %vm6774, %v6773, %v6311
  %vm6783 = vcmask 392192
  %v6784 = vsel %vm6783, %v6775, %v6329
  %v6785 = vsel %vm6783, %v6776, %v6331
  %v6786 = vsel %vm6783, %v6777, %v6333
  %v6787 = vsel %vm6783, %v6778, %v6335
  %v6788 = vsel %vm6783, %v6779, %v6337
  %v6789 = vsel %vm6783, %v6780, %v6339
  %v6790 = vsel %vm6783, %v6781, %v6341
  %v6791 = vsel %vm6783, %v6782, %v6343
  %vm6792 = vcmask 408576
  %v6793 = vsel %vm6792, %v6784, %v6361
  %v6794 = vsel %vm6792, %v6785, %v6363
  %v6795 = vsel %vm6792, %v6786, %v6365
  %v6796 = vsel %vm6792, %v6787, %v6367
  %v6797 = vsel %vm6792, %v6788, %v6369
  %v6798 = vsel %vm6792, %v6789, %v6371
  %v6799 = vsel %vm6792, %v6790, %v6373
  %v6800 = vsel %vm6792, %v6791, %v6375
  %vm6801 = vcmask 424960
  %v6802 = vsel %vm6801, %v6793, %v6393
  %v6803 = vsel %vm6801, %v6794, %v6395
  %v6804 = vsel %vm6801, %v6795, %v6397
  %v6805 = vsel %vm6801, %v6796, %v6399
  %v6806 = vsel %vm6801, %v6797, %v6401
  %v6807 = vsel %vm6801, %v6798, %v6403
  %v6808 = vsel %vm6801, %v6799, %v6405
  %v6809 = vsel %vm6801, %v6800, %v6407
  %vm6810 = vcmask 441344
  %v6811 = vsel %vm6810, %v6802, %v6425
  %v6812 = vsel %vm6810, %v6803, %v6427
  %v6813 = vsel %vm6810, %v6804, %v6429
  %v6814 = vsel %vm6810, %v6805, %v6431
  %v6815 = vsel %vm6810, %v6806, %v6433
  %v6816 = vsel %vm6810, %v6807, %v6435
  %v6817 = vsel %vm6810, %v6808, %v6437
  %v6818 = vsel %vm6810, %v6809, %v6439
  %vm6819 = vcmask 457728
  %v6820 = vsel %vm6819, %v6811, %v6457
  %v6821 = vsel %vm6819, %v6812, %v6459
  %v6822 = vsel %vm6819, %v6813, %v6461
  %v6823 = vsel %vm6819, %v6814, %v6463
  %v6824 = vsel %vm6819, %v6815, %v6465
  %v6825 = vsel %vm6819, %v6816, %v6467
  %v6826 = vsel %vm6819, %v6817, %v6469
  %v6827 = vsel %vm6819, %v6818, %v6471
  %vm6828 = vcmask 474112
  %v6829 = vsel %vm6828, %v6820, %v6489
  %v6830 = vsel %vm6828, %v6821, %v6491
  %v6831 = vsel %vm6828, %v6822, %v6493
  %v6832 = vsel %vm6828, %v6823, %v6495
  %v6833 = vsel %vm6828, %v6824, %v6497
  %v6834 = vsel %vm6828, %v6825, %v6499
  %v6835 = vsel %vm6828, %v6826, %v6501
  %v6836 = vsel %vm6828, %v6827, %v6503
  %vm6837 = vcmask 490496
  %v6838 = vsel %vm6837, %v6829, %v6521
  %v6839 = vsel %vm6837, %v6830, %v6523
  %v6840 = vsel %vm6837, %v6831, %v6525
  %v6841 = vsel %vm6837, %v6832, %v6527
  %v6842 = vsel %vm6837, %v6833, %v6529
  %v6843 = vsel %vm6837, %v6834, %v6531
  %v6844 = vsel %vm6837, %v6835, %v6533
  %v6845 = vsel %vm6837, %v6836, %v6535
  %vm6846 = vcmask 506880
  %v6847 = vsel %vm6846, %v6838, %v6553
  %v6848 = vsel %vm6846, %v6839, %v6555
  %v6849 = vsel %vm6846, %v6840, %v6557
  %v6850 = vsel %vm6846, %v6841, %v6559
  %v6851 = vsel %vm6846, %v6842, %v6561
  %v6852 = vsel %vm6846, %v6843, %v6563
  %v6853 = vsel %vm6846, %v6844, %v6565
  %v6854 = vsel %vm6846, %v6845, %v6567
  %6855 = vst.msk [vmem:[%s1] sm:$0xff] %vm6711, %v6847
  %6856 = vst.msk [vmem:[%s1 + $0x8] sm:$0xff] %vm6711, %v6848
  %6857 = vst.msk [vmem:[%s1 + $0x10] sm:$0xff] %vm6711, %v6849
  %6858 = vst.msk [vmem:[%s1 + $0x18] sm:$0xff] %vm6711, %v6850
  %6859 = vst.msk [vmem:[%s1 + $0x20] sm:$0xff] %vm6711, %v6851
  %6860 = vst.msk [vmem:[%s1 + $0x28] sm:$0xff] %vm6711, %v6852
  %6861 = vst.msk [vmem:[%s1 + $0x30] sm:$0xff] %vm6711, %v6853
  %6862 = vst.msk [vmem:[%s1 + $0x38] sm:$0xff] %vm6711, %v6854
  %6871 = vrot.lane.b32.xlu0 %v6847, 32
  %v6872 = vpop.permute.xlu0 %6871
  %6873 = vrot.lane.b32.xlu0 %v6848, 32
  %v6874 = vpop.permute.xlu0 %6873
  %6875 = vrot.lane.b32.xlu0 %v6849, 32
  %v6876 = vpop.permute.xlu0 %6875
  %6877 = vrot.lane.b32.xlu0 %v6850, 32
  %v6878 = vpop.permute.xlu0 %6877
  %6879 = vrot.lane.b32.xlu0 %v6851, 32
  %v6880 = vpop.permute.xlu0 %6879
  %6881 = vrot.lane.b32.xlu0 %v6852, 32
  %v6882 = vpop.permute.xlu0 %6881
  %6883 = vrot.lane.b32.xlu0 %v6853, 32
  %v6884 = vpop.permute.xlu0 %6883
  %6885 = vrot.lane.b32.xlu0 %v6854, 32
  %v6886 = vpop.permute.xlu0 %6885
  %vm6895 = vcmask 523520
  %6896 = vst.msk [vmem:[%s1] sm:$0xff] %vm6895, %v6872
  %6897 = vst.msk [vmem:[%s1 + $0x8] sm:$0xff] %vm6895, %v6874
  %6898 = vst.msk [vmem:[%s1 + $0x10] sm:$0xff] %vm6895, %v6876
  %6899 = vst.msk [vmem:[%s1 + $0x18] sm:$0xff] %vm6895, %v6878
  %6900 = vst.msk [vmem:[%s1 + $0x20] sm:$0xff] %vm6895, %v6880
  %6901 = vst.msk [vmem:[%s1 + $0x28] sm:$0xff] %vm6895, %v6882
  %6902 = vst.msk [vmem:[%s1 + $0x30] sm:$0xff] %vm6895, %v6884
  %6903 = vst.msk [vmem:[%s1 + $0x38] sm:$0xff] %vm6895, %v6886
  %vm6904 = vcmask 785920
  %6905 = vst.msk [vmem:[%s1] sm:$0xff] %vm6904, %v6872
  %6906 = vst.msk [vmem:[%s1 + $0x8] sm:$0xff] %vm6904, %v6874
  %6907 = vst.msk [vmem:[%s1 + $0x10] sm:$0xff] %vm6904, %v6876
  %6908 = vst.msk [vmem:[%s1 + $0x18] sm:$0xff] %vm6904, %v6878
  %6909 = vst.msk [vmem:[%s1 + $0x20] sm:$0xff] %vm6904, %v6880
  %6910 = vst.msk [vmem:[%s1 + $0x28] sm:$0xff] %vm6904, %v6882
  %6911 = vst.msk [vmem:[%s1 + $0x30] sm:$0xff] %vm6904, %v6884
  %6912 = vst.msk [vmem:[%s1 + $0x38] sm:$0xff] %vm6904, %v6886
  %6913 = vrot.lane.b32.xlu0 %v6847, 64
  %v6914 = vpop.permute.xlu0 %6913
  %6915 = vrot.lane.b32.xlu0 %v6848, 64
  %v6916 = vpop.permute.xlu0 %6915
  %6917 = vrot.lane.b32.xlu0 %v6849, 64
  %v6918 = vpop.permute.xlu0 %6917
  %6919 = vrot.lane.b32.xlu0 %v6850, 64
  %v6920 = vpop.permute.xlu0 %6919
  %6921 = vrot.lane.b32.xlu0 %v6851, 64
  %v6922 = vpop.permute.xlu0 %6921
  %6923 = vrot.lane.b32.xlu0 %v6852, 64
  %v6924 = vpop.permute.xlu0 %6923
  %6925 = vrot.lane.b32.xlu0 %v6853, 64
  %v6926 = vpop.permute.xlu0 %6925
  %6927 = vrot.lane.b32.xlu0 %v6854, 64
  %v6928 = vpop.permute.xlu0 %6927
  %vm6937 = vcmask 1048320
  %6938 = vst.msk [vmem:[%s1] sm:$0xff] %vm6937, %v6914
  %6939 = vst.msk [vmem:[%s1 + $0x8] sm:$0xff] %vm6937, %v6916
  %6940 = vst.msk [vmem:[%s1 + $0x10] sm:$0xff] %vm6937, %v6918
  %6941 = vst.msk [vmem:[%s1 + $0x18] sm:$0xff] %vm6937, %v6920
  %6942 = vst.msk [vmem:[%s1 + $0x20] sm:$0xff] %vm6937, %v6922
  %6943 = vst.msk [vmem:[%s1 + $0x28] sm:$0xff] %vm6937, %v6924
  %6944 = vst.msk [vmem:[%s1 + $0x30] sm:$0xff] %vm6937, %v6926
  %6945 = vst.msk [vmem:[%s1 + $0x38] sm:$0xff] %vm6937, %v6928
  // Predicated region
  $region6: #{upsample_nearest_2x.1} parent=0 // pred_check
    _
  $region7: #{upsample_nearest_2x.1} parent=0 // pred_check_branch
    %6947 = sbr.rel (0) target = $region9
  $region8: #{upsample_nearest_2x.1} parent=0 // pred_region
    _
  $region9: #{upsample_nearest_2x.1} parent=0 // pred_fallthru
    _
  // Predicated region
  $region10: #{upsample_nearest_2x.1} parent=0 // pred_check
    _
  $region11: #{upsample_nearest_2x.1} parent=0 // pred_check_branch
    %6949 = sbr.rel (0) target = $region13
  $region12: #{upsample_nearest_2x.1} parent=0 // pred_region
    _
  $region13: #{upsample_nearest_2x.1} parent=0 // pred_fallthru
    _

</llo_original>
